<compile_context>
chip_gen: v7x
topology: tpu7x:2x2x1
jax: 0.10.0
libtpu: 0.0.40
codegen_flags: <defaults>
</compile_context>

<pallas_src>
import functools

import jax
import jax.numpy as jnp
from jax.experimental import pallas as pl
from jax.experimental.pallas import tpu as pltpu


# ---------------------------------------------------------------------------
# Pallas kernels
# ---------------------------------------------------------------------------
def _convT_plane_kernel(w_ref, b_ref, x0_ref, x1_ref, o_ref, *, width, pv):
    """8-phase ConvTranspose3d for one (batch, depth) input plane.

    w_ref : (8, 8*Cout, Cin) bf16   per-tap phase weights (tap e = ed*4+eh*2+ew)
    b_ref : (8*Cout, 1)      f32    per-phase bias
    x0_ref: (Cin, Pw)        bf16   padded plane d,   Pw = (H+2)*(W+1)
    x1_ref: (Cin, Pw)        bf16   padded plane d+1
    o_ref : (8*Cout, Pv)     bf16   Pv = H*(W+1); col r = h*(W+1)+w (w<W valid)
    """
    acc = jnp.zeros(o_ref.shape, jnp.float32)
    for e in range(8):
        ed, eh, ew = (e >> 2) & 1, (e >> 1) & 1, e & 1
        s = eh * (width + 1) + ew                  # in-plane flat shift
        xsrc = x1_ref if ed else x0_ref            # depth tap = next plane
        tap = xsrc[:, s:s + pv]                    # (Cin, Pv) bf16, static slice
        acc = acc + jnp.dot(w_ref[e], tap, preferred_element_type=jnp.float32)
    o_ref[...] = (acc + b_ref[...]).astype(o_ref.dtype)


def _inorm_prelu_kernel(x_ref, o_ref, *, alpha, inv_n):
    # x_ref: (Dp, C, Sp) bf16 for one batch item.  Per-channel InstanceNorm3d
    # (affine=False, eps=1e-5) via E[x^2]-mean^2, then shared-alpha PReLU.
    x = x_ref[...].astype(jnp.float32)
    s = jnp.sum(jnp.sum(x, axis=2, keepdims=True), axis=0, keepdims=True)      # (1,C,1)
    q = jnp.sum(jnp.sum(x * x, axis=2, keepdims=True), axis=0, keepdims=True)  # (1,C,1)
    mean = s * inv_n
    var = q * inv_n - mean * mean
    xn = (x - mean) * jax.lax.rsqrt(var + 1e-5)
    o_ref[...] = jnp.where(xn >= 0.0, xn, alpha * xn).astype(o_ref.dtype)


def _bkd_kernel(s_ref, t_ref, m_ref, num_ref, den_ref, num_acc, den_acc):
    # s_ref/t_ref: (C, td, S2) logits (student bf16, teacher native dtype),
    # m_ref: (td, S2) boundary mask.  Accumulate masked KL(teacher||student)
    # over the depth axis; batch grid axis is parallel (per-batch partials).
    d = pl.program_id(1)

    @pl.when(d == 0)
    def _():
        num_acc[...] = jnp.zeros_like(num_acc)
        den_acc[...] = jnp.zeros_like(den_acc)

    s = s_ref[...].astype(jnp.float32)
    t = t_ref[...].astype(jnp.float32)
    m = m_ref[...].astype(jnp.float32)

    s_max = jnp.max(s, axis=0, keepdims=True)
    log_ps = (s - s_max) - jnp.log(
        jnp.sum(jnp.exp(s - s_max), axis=0, keepdims=True))

    t_max = jnp.max(t, axis=0, keepdims=True)
    et = jnp.exp(t - t_max)                              # reused for pt and log_pt
    sum_et = jnp.sum(et, axis=0, keepdims=True)
    log_pt = (t - t_max) - jnp.log(sum_et)
    pt = et * pl.reciprocal(sum_et, approx=True)

    kl = jnp.sum(pt * (log_pt - log_ps), axis=0)         # (td, S2)
    num_acc[...] += jnp.sum(kl * m)
    den_acc[...] += jnp.sum(m)

    @pl.when(d == pl.num_programs(1) - 1)
    def _():
        num_ref[...] = num_acc[...]
        den_ref[...] = den_acc[...]


# ---------------------------------------------------------------------------
# Pallas wrappers
# ---------------------------------------------------------------------------
def conv_transpose3d_block(x, w_phase, b_col, cout, channels_first_out):
    """x: (B, D, Cin, H, W) bf16 -> 2x upsample ConvTranspose3d(k3,s2,p1,op1).

    Returns (B, 2D, Cout, 2H, 2W) bf16, or (B, Cout, 2D, 2H, 2W) if
    channels_first_out (last block, feeds the KD loss directly).
    """
    B, D, cin, H, W = x.shape
    n8 = 8 * cout
    pw = (H + 2) * (W + 1)
    pv = H * (W + 1)
    dp1 = D + 1
    # Zero-pad (+1 depth, +2 height, +1 width) and flatten each plane; taps
    # become static column shifts / the next plane -> no im2col in HBM.
    xp = jnp.pad(x, ((0, 0), (0, 1), (0, 0), (0, 2), (0, 1)))
    xpf = xp.reshape(B * dp1, cin, pw)

    out = pl.pallas_call(
        functools.partial(_convT_plane_kernel, width=W, pv=pv),
        out_shape=jax.ShapeDtypeStruct((B, D, n8, pv), jnp.bfloat16),
        grid=(B, D),
        in_specs=[
            pl.BlockSpec((8, n8, cin), lambda b, d: (0, 0, 0)),
            pl.BlockSpec((n8, 1), lambda b, d: (0, 0)),
            pl.BlockSpec((None, cin, pw), lambda b, d: (b * dp1 + d, 0, 0)),
            pl.BlockSpec((None, cin, pw), lambda b, d: (b * dp1 + d + 1, 0, 0)),
        ],
        out_specs=pl.BlockSpec((None, None, n8, pv), lambda b, d: (b, d, 0, 0)),
        compiler_params=pltpu.CompilerParams(
            dimension_semantics=("parallel", "parallel")),
    )(w_phase, b_col, xpf, xpf)

    # depth-to-space: row p*Cout+co, col h*(W+1)+w  ->  fine (2D, 2H, 2W) grid.
    y8 = out.reshape(B, D, 2, 2, 2, cout, H, W + 1)[..., :W]
    if channels_first_out:
        y = y8.transpose(0, 5, 1, 2, 6, 3, 7, 4)
        return y.reshape(B, cout, 2 * D, 2 * H, 2 * W)
    y = y8.transpose(0, 1, 2, 5, 6, 3, 7, 4)
    return y.reshape(B, 2 * D, cout, 2 * H, 2 * W)


def instance_norm_prelu(x, alpha=0.25):
    """x: (B, Dp, C, Hp, Wp) bf16 -> InstanceNorm3d(affine=False) + PReLU."""
    B, Dp, C, Hp, Wp = x.shape
    Sp = Hp * Wp
    x4 = x.reshape(B, Dp, C, Sp)
    blk_bytes = Dp * C * Sp * x.dtype.itemsize * 4  # in+out, double-buffered
    if blk_bytes > 40 * 1024 * 1024:
        # TODO(synk): spatially tiled two-pass stats kernel for very large
        # volumes (v7x 64 MiB VMEM); this jnp fallback keeps semantics identical.
        xf = x4.astype(jnp.float32)
        mean = jnp.mean(xf, axis=(1, 3), keepdims=True)
        var = jnp.mean(jnp.square(xf - mean), axis=(1, 3), keepdims=True)
        xn = (xf - mean) * jax.lax.rsqrt(var + 1e-5)
        out = jnp.where(xn >= 0.0, xn, alpha * xn).astype(x.dtype)
    else:
        out = pl.pallas_call(
            functools.partial(_inorm_prelu_kernel, alpha=alpha,
                              inv_n=1.0 / float(Dp * Sp)),
            out_shape=jax.ShapeDtypeStruct((B, Dp, C, Sp), x.dtype),
            grid=(B,),
            in_specs=[pl.BlockSpec((None, Dp, C, Sp), lambda b: (b, 0, 0, 0))],
            out_specs=pl.BlockSpec((None, Dp, C, Sp), lambda b: (b, 0, 0, 0)),
            compiler_params=pltpu.CompilerParams(
                dimension_semantics=("parallel",),
                vmem_limit_bytes=48 * 1024 * 1024),
        )(x4)
    return out.reshape(B, Dp, C, Hp, Wp)


def _pick_td(do, cap=32):
    # Largest divisor of `do` (capped) that keeps bf16/f32 sublane tiling legal.
    for t in range(min(do, cap), 0, -1):
        if do % t == 0 and (t % 16 == 0 or t == do):
            return t
    return do


def boundary_kd_loss(s_ncdhw, t_ncdhw, mask_bdhw):
    """Boundary-masked KL(teacher || student), mean over boundary voxels."""
    B, C, Do, Ho, Wo = s_ncdhw.shape
    S2 = Ho * Wo
    s3 = s_ncdhw.reshape(B, C, Do, S2)           # bf16 student logits
    t3 = t_ncdhw.reshape(B, C, Do, S2)           # teacher in its native dtype
    m3 = mask_bdhw.reshape(B, Do, S2)
    td = _pick_td(Do)
    nd = Do // td

    num, den = pl.pallas_call(
        _bkd_kernel,
        out_shape=(jax.ShapeDtypeStruct((B, 1, 1), jnp.float32),
                   jax.ShapeDtypeStruct((B, 1, 1), jnp.float32)),
        grid=(B, nd),
        in_specs=[
            pl.BlockSpec((None, C, td, S2), lambda b, d: (b, 0, d, 0)),
            pl.BlockSpec((None, C, td, S2), lambda b, d: (b, 0, d, 0)),
            pl.BlockSpec((None, td, S2), lambda b, d: (b, d, 0)),
        ],
        out_specs=(pl.BlockSpec((None, 1, 1), lambda b, d: (b, 0, 0)),
                   pl.BlockSpec((None, 1, 1), lambda b, d: (b, 0, 0))),
        scratch_shapes=[pltpu.VMEM((1, 1), jnp.float32),
                        pltpu.VMEM((1, 1), jnp.float32)],
        compiler_params=pltpu.CompilerParams(
            dimension_semantics=("parallel", "arbitrary")),
    )(s3, t3, m3)
    return jnp.sum(num) / (jnp.sum(den) + 1e-6)


def boundary_mask(lab):
    """lab: (B, D, H, W) int labels -> {0,1} mask of label-transition voxels."""
    m = jnp.zeros(lab.shape, jnp.float32)
    for ax in (1, 2, 3):
        n = lab.shape[ax]
        a = jax.lax.slice_in_dim(lab, 1, n, axis=ax)
        b = jax.lax.slice_in_dim(lab, 0, n - 1, axis=ax)
        d = (a != b).astype(jnp.float32)
        pad_lo = [(0, 0)] * lab.ndim
        pad_hi = [(0, 0)] * lab.ndim
        pad_lo[ax] = (1, 0)
        pad_hi[ax] = (0, 1)
        m = jnp.maximum(m, jnp.pad(d, pad_lo))
        m = jnp.maximum(m, jnp.pad(d, pad_hi))
    return m


# ---------------------------------------------------------------------------
# Weight preprocessing: ConvTranspose3d weight -> per-tap phase matmul weights
# ---------------------------------------------------------------------------
def _build_phase_weight(w):
    """w: (Cin, Cout, 3, 3, 3) -> (8, 8*Cout, Cin).

    out[2d+pd, 2h+ph, 2w+pw] = sum over taps (ed,eh,ew) in {0,1}^3 of
      x[d+ed, h+eh, w+ew] * w[..., pd+1-2ed, ph+1-2eh, pw+1-2ew]  (valid taps).
    Tap index e = ed*4+eh*2+ew; row index p*Cout+co with p = pd*4+ph*2+pw.
    """
    cin, cout = w.shape[0], w.shape[1]
    zeros = jnp.zeros((cout, cin), w.dtype)
    tap_mats = []
    for ed in (0, 1):
        for eh in (0, 1):
            for ew in (0, 1):
                rows = []
                for pd in (0, 1):
                    for ph in (0, 1):
                        for pw in (0, 1):
                            kd = pd + 1 - 2 * ed
                            kh = ph + 1 - 2 * eh
                            kw = pw + 1 - 2 * ew
                            if 0 <= kd <= 2 and 0 <= kh <= 2 and 0 <= kw <= 2:
                                rows.append(jnp.transpose(w[:, :, kd, kh, kw]))
                            else:
                                rows.append(zeros)
                tap_mats.append(jnp.concatenate(rows, axis=0))   # (8*Cout, Cin)
    return jnp.stack(tap_mats, axis=0)                           # (8, 8*Cout, Cin)


# ---------------------------------------------------------------------------
# Module
# ---------------------------------------------------------------------------
class DSDLoss8LabelSupervision:
    def __init__(self, in_chans, num_classes, num_stages, cur_stage,
                 loss_weight=1.0, overall_loss_weight=1.0, key=None):
        self.num_classes = num_classes
        self.loss_weight = float(loss_weight)
        self.overall_loss_weight = float(overall_loss_weight)
        self.blocks = []
        if cur_stage != num_stages:
            n = num_stages - cur_stage
            c = in_chans
            keys = jax.random.split(key, 2 * n)
            for i in range(n):
                last = i == n - 1
                cout = num_classes if last else c // 2
                fan_in = c * 27
                w = jax.random.normal(keys[2 * i], (c, cout, 3, 3, 3), jnp.float32)
                w = w * (1.0 / jnp.sqrt(jnp.float32(fan_in)))
                b = 0.01 * jax.random.normal(keys[2 * i + 1], (cout,), jnp.float32)
                self.blocks.append({
                    "w_phase": _build_phase_weight(w).astype(jnp.bfloat16),  # (8, 8Cout, Cin)
                    "b_col": jnp.tile(b, 8).reshape(8 * cout, 1),            # (8Cout, 1) f32
                    "cout": cout,
                    "last": last,
                    "alpha": 0.25,
                })
                c //= 2

    def projector(self, feat_student):
        if not self.blocks:                                  # identity projector
            return feat_student
        # NCDHW -> (B, D, C, H, W); bf16 activations between blocks.
        x = jnp.transpose(feat_student, (0, 2, 1, 3, 4)).astype(jnp.bfloat16)
        for blk in self.blocks:
            x = conv_transpose3d_block(x, blk["w_phase"], blk["b_col"],
                                       blk["cout"],
                                       channels_first_out=blk["last"])
            if not blk["last"]:
                x = instance_norm_prelu(x, blk["alpha"])      # TransConv = ConvT+IN+PReLU
        return x                                              # (B, C, Do, Ho, Wo) bf16

    def __call__(self, feat_student, logits_teacher, label):
        logits_student = self.projector(feat_student)
        mask = boundary_mask(label[:, 0])
        bkd_loss = boundary_kd_loss(logits_student, logits_teacher, mask)
        # TODO(synk): LogHausdorffDTLoss needs a Euclidean distance transform
        # (scipy.ndimage) with no Pallas/TPU equivalent; it contributes 0 at
        # the default loss_weight=1.0.
        hd_loss = jnp.float32(0.0)
        loss = self.loss_weight * bkd_loss + (1.0 - self.loss_weight) * hd_loss
        return self.overall_loss_weight * loss


# ---------------------------------------------------------------------------
if __name__ == "__main__":
    key = jax.random.PRNGKey(0)
    k1, k2, k3, k4 = jax.random.split(key, 4)

    B, in_chans, num_classes = 2, 8, 2
    D = H = W = 4
    num_stages, cur_stage = 4, 2          # -> 2 upsample blocks => 4x spatial upsample
    Do = D * (2 ** (num_stages - cur_stage))

    feat_student = jax.random.normal(k1, (B, in_chans, D, H, W), jnp.float32)
    logits_teacher = jax.random.normal(k2, (B, num_classes, Do, Do, Do), jnp.float32)
    label = jax.random.randint(k3, (B, 1, Do, Do, Do), 0, num_classes, jnp.int32)

    module = DSDLoss8LabelSupervision(in_chans, num_classes, num_stages,
                                      cur_stage, key=k4)
    loss_fn = jax.jit(module.__call__)
    loss = loss_fn(feat_student, logits_teacher, label)
    loss = jax.block_until_ready(loss)
    assert jnp.isfinite(loss)
    print("KERNEL_OK")
</pallas_src>

<mosaic_0001>
module attributes {stable_mosaic.version = 11 : i64} {
  func.func @_convT_plane_kernel(%arg0: i32, %arg1: i32, %arg2: memref<8x32x8xbf16, #tpu.memory_space<vmem>>, %arg3: memref<32x1xf32, #tpu.memory_space<vmem>>, %arg4: memref<1x8x30xbf16, #tpu.memory_space<vmem>>, %arg5: memref<1x8x30xbf16, #tpu.memory_space<vmem>>, %arg6: memref<1x1x32x20xbf16, #tpu.memory_space<vmem>>) attributes {dimension_semantics = [#tpu.dimension_semantics<parallel>, #tpu.dimension_semantics<parallel>], iteration_bounds = array<i64: 2, 4>, scalar_prefetch = 0 : i64, scratch_operands = 0 : i64, tpu.core_type = #tpu.core_type<tc>, window_params = [{pipeline_mode = #tpu.pipeline_mode<synchronous>, transform_indices = @transform_0, window_bounds = array<i64: 8, 32, 8>}, {pipeline_mode = #tpu.pipeline_mode<synchronous>, transform_indices = @transform_1, window_bounds = array<i64: 32, 1>}, {transform_indices = @transform_2, window_bounds = array<i64: 1, 8, 30>}, {transform_indices = @transform_3, window_bounds = array<i64: 1, 8, 30>}, {transform_indices = @transform_4, window_bounds = array<i64: 1, 1, 32, 20>}]} {
    %cst = arith.constant 0.000000e+00 : f32
    %0 = vector.broadcast %cst : f32 to vector<32x20xf32>
    %c0 = arith.constant 0 : index
    %c0_0 = arith.constant 0 : index
    %c0_1 = arith.constant 0 : index
    %1 = vector.load %arg4[%c0, %c0_0, %c0_1] : memref<1x8x30xbf16, #tpu.memory_space<vmem>>, vector<1x8x20xbf16>
    %2 = vector.shape_cast %1 : vector<1x8x20xbf16> to vector<8x20xbf16>
    %c0_2 = arith.constant 0 : index
    %c0_3 = arith.constant 0 : index
    %c0_4 = arith.constant 0 : index
    %3 = vector.load %arg2[%c0_2, %c0_3, %c0_4] : memref<8x32x8xbf16, #tpu.memory_space<vmem>>, vector<1x32x8xbf16>
    %4 = vector.shape_cast %3 : vector<1x32x8xbf16> to vector<32x8xbf16>
    %cst_5 = arith.constant dense<0.000000e+00> : vector<32x20xf32>
    %5 = tpu.matmul %4, %2, %cst_5 {dimension_numbers = #tpu.dot_dimension_numbers<[1], [0], [0], [1], [0, 0, 1, 1], [], []>} : vector<32x8xbf16>, vector<8x20xbf16>, vector<32x20xf32> -> vector<32x20xf32>
    %6 = arith.addf %0, %5 : vector<32x20xf32>
    %c0_6 = arith.constant 0 : index
    %c0_7 = arith.constant 0 : index
    %c1 = arith.constant 1 : index
    %7 = vector.load %arg4[%c0_6, %c0_7, %c1] : memref<1x8x30xbf16, #tpu.memory_space<vmem>>, vector<1x8x20xbf16>
    %8 = vector.shape_cast %7 : vector<1x8x20xbf16> to vector<8x20xbf16>
    %c1_8 = arith.constant 1 : index
    %c0_9 = arith.constant 0 : index
    %c0_10 = arith.constant 0 : index
    %9 = vector.load %arg2[%c1_8, %c0_9, %c0_10] : memref<8x32x8xbf16, #tpu.memory_space<vmem>>, vector<1x32x8xbf16>
    %10 = vector.shape_cast %9 : vector<1x32x8xbf16> to vector<32x8xbf16>
    %cst_11 = arith.constant dense<0.000000e+00> : vector<32x20xf32>
    %11 = tpu.matmul %10, %8, %cst_11 {dimension_numbers = #tpu.dot_dimension_numbers<[1], [0], [0], [1], [0, 0, 1, 1], [], []>} : vector<32x8xbf16>, vector<8x20xbf16>, vector<32x20xf32> -> vector<32x20xf32>
    %12 = arith.addf %6, %11 : vector<32x20xf32>
    %c0_12 = arith.constant 0 : index
    %c0_13 = arith.constant 0 : index
    %c5 = arith.constant 5 : index
    %13 = vector.load %arg4[%c0_12, %c0_13, %c5] : memref<1x8x30xbf16, #tpu.memory_space<vmem>>, vector<1x8x20xbf16>
    %14 = vector.shape_cast %13 : vector<1x8x20xbf16> to vector<8x20xbf16>
    %c2 = arith.constant 2 : index
    %c0_14 = arith.constant 0 : index
    %c0_15 = arith.constant 0 : index
    %15 = vector.load %arg2[%c2, %c0_14, %c0_15] : memref<8x32x8xbf16, #tpu.memory_space<vmem>>, vector<1x32x8xbf16>
    %16 = vector.shape_cast %15 : vector<1x32x8xbf16> to vector<32x8xbf16>
    %cst_16 = arith.constant dense<0.000000e+00> : vector<32x20xf32>
    %17 = tpu.matmul %16, %14, %cst_16 {dimension_numbers = #tpu.dot_dimension_numbers<[1], [0], [0], [1], [0, 0, 1, 1], [], []>} : vector<32x8xbf16>, vector<8x20xbf16>, vector<32x20xf32> -> vector<32x20xf32>
    %18 = arith.addf %12, %17 : vector<32x20xf32>
    %c0_17 = arith.constant 0 : index
    %c0_18 = arith.constant 0 : index
    %c6 = arith.constant 6 : index
    %19 = vector.load %arg4[%c0_17, %c0_18, %c6] : memref<1x8x30xbf16, #tpu.memory_space<vmem>>, vector<1x8x20xbf16>
    %20 = vector.shape_cast %19 : vector<1x8x20xbf16> to vector<8x20xbf16>
    %c3 = arith.constant 3 : index
    %c0_19 = arith.constant 0 : index
    %c0_20 = arith.constant 0 : index
    %21 = vector.load %arg2[%c3, %c0_19, %c0_20] : memref<8x32x8xbf16, #tpu.memory_space<vmem>>, vector<1x32x8xbf16>
    %22 = vector.shape_cast %21 : vector<1x32x8xbf16> to vector<32x8xbf16>
    %cst_21 = arith.constant dense<0.000000e+00> : vector<32x20xf32>
    %23 = tpu.matmul %22, %20, %cst_21 {dimension_numbers = #tpu.dot_dimension_numbers<[1], [0], [0], [1], [0, 0, 1, 1], [], []>} : vector<32x8xbf16>, vector<8x20xbf16>, vector<32x20xf32> -> vector<32x20xf32>
    %24 = arith.addf %18, %23 : vector<32x20xf32>
    %c0_22 = arith.constant 0 : index
    %c0_23 = arith.constant 0 : index
    %c0_24 = arith.constant 0 : index
    %25 = vector.load %arg5[%c0_22, %c0_23, %c0_24] : memref<1x8x30xbf16, #tpu.memory_space<vmem>>, vector<1x8x20xbf16>
    %26 = vector.shape_cast %25 : vector<1x8x20xbf16> to vector<8x20xbf16>
    %c4 = arith.constant 4 : index
    %c0_25 = arith.constant 0 : index
    %c0_26 = arith.constant 0 : index
    %27 = vector.load %arg2[%c4, %c0_25, %c0_26] : memref<8x32x8xbf16, #tpu.memory_space<vmem>>, vector<1x32x8xbf16>
    %28 = vector.shape_cast %27 : vector<1x32x8xbf16> to vector<32x8xbf16>
    %cst_27 = arith.constant dense<0.000000e+00> : vector<32x20xf32>
    %29 = tpu.matmul %28, %26, %cst_27 {dimension_numbers = #tpu.dot_dimension_numbers<[1], [0], [0], [1], [0, 0, 1, 1], [], []>} : vector<32x8xbf16>, vector<8x20xbf16>, vector<32x20xf32> -> vector<32x20xf32>
    %30 = arith.addf %24, %29 : vector<32x20xf32>
    %c0_28 = arith.constant 0 : index
    %c0_29 = arith.constant 0 : index
    %c1_30 = arith.constant 1 : index
    %31 = vector.load %arg5[%c0_28, %c0_29, %c1_30] : memref<1x8x30xbf16, #tpu.memory_space<vmem>>, vector<1x8x20xbf16>
    %32 = vector.shape_cast %31 : vector<1x8x20xbf16> to vector<8x20xbf16>
    %c5_31 = arith.constant 5 : index
    %c0_32 = arith.constant 0 : index
    %c0_33 = arith.constant 0 : index
    %33 = vector.load %arg2[%c5_31, %c0_32, %c0_33] : memref<8x32x8xbf16, #tpu.memory_space<vmem>>, vector<1x32x8xbf16>
    %34 = vector.shape_cast %33 : vector<1x32x8xbf16> to vector<32x8xbf16>
    %cst_34 = arith.constant dense<0.000000e+00> : vector<32x20xf32>
    %35 = tpu.matmul %34, %32, %cst_34 {dimension_numbers = #tpu.dot_dimension_numbers<[1], [0], [0], [1], [0, 0, 1, 1], [], []>} : vector<32x8xbf16>, vector<8x20xbf16>, vector<32x20xf32> -> vector<32x20xf32>
    %36 = arith.addf %30, %35 : vector<32x20xf32>
    %c0_35 = arith.constant 0 : index
    %c0_36 = arith.constant 0 : index
    %c5_37 = arith.constant 5 : index
    %37 = vector.load %arg5[%c0_35, %c0_36, %c5_37] : memref<1x8x30xbf16, #tpu.memory_space<vmem>>, vector<1x8x20xbf16>
    %38 = vector.shape_cast %37 : vector<1x8x20xbf16> to vector<8x20xbf16>
    %c6_38 = arith.constant 6 : index
    %c0_39 = arith.constant 0 : index
    %c0_40 = arith.constant 0 : index
    %39 = vector.load %arg2[%c6_38, %c0_39, %c0_40] : memref<8x32x8xbf16, #tpu.memory_space<vmem>>, vector<1x32x8xbf16>
    %40 = vector.shape_cast %39 : vector<1x32x8xbf16> to vector<32x8xbf16>
    %cst_41 = arith.constant dense<0.000000e+00> : vector<32x20xf32>
    %41 = tpu.matmul %40, %38, %cst_41 {dimension_numbers = #tpu.dot_dimension_numbers<[1], [0], [0], [1], [0, 0, 1, 1], [], []>} : vector<32x8xbf16>, vector<8x20xbf16>, vector<32x20xf32> -> vector<32x20xf32>
    %42 = arith.addf %36, %41 : vector<32x20xf32>
    %c0_42 = arith.constant 0 : index
    %c0_43 = arith.constant 0 : index
    %c6_44 = arith.constant 6 : index
    %43 = vector.load %arg5[%c0_42, %c0_43, %c6_44] : memref<1x8x30xbf16, #tpu.memory_space<vmem>>, vector<1x8x20xbf16>
    %44 = vector.shape_cast %43 : vector<1x8x20xbf16> to vector<8x20xbf16>
    %c7 = arith.constant 7 : index
    %c0_45 = arith.constant 0 : index
    %c0_46 = arith.constant 0 : index
    %45 = vector.load %arg2[%c7, %c0_45, %c0_46] : memref<8x32x8xbf16, #tpu.memory_space<vmem>>, vector<1x32x8xbf16>
    %46 = vector.shape_cast %45 : vector<1x32x8xbf16> to vector<32x8xbf16>
    %cst_47 = arith.constant dense<0.000000e+00> : vector<32x20xf32>
    %47 = tpu.matmul %46, %44, %cst_47 {dimension_numbers = #tpu.dot_dimension_numbers<[1], [0], [0], [1], [0, 0, 1, 1], [], []>} : vector<32x8xbf16>, vector<8x20xbf16>, vector<32x20xf32> -> vector<32x20xf32>
    %48 = arith.addf %42, %47 : vector<32x20xf32>
    %c0_48 = arith.constant 0 : index
    %c0_49 = arith.constant 0 : index
    %49 = vector.load %arg3[%c0_48, %c0_49] : memref<32x1xf32, #tpu.memory_space<vmem>>, vector<32x1xf32>
    %50 = vector.broadcast %49 : vector<32x1xf32> to vector<32x20xf32>
    %51 = arith.addf %48, %50 : vector<32x20xf32>
    %52 = arith.truncf %51 : vector<32x20xf32> to vector<32x20xbf16>
    %c0_50 = arith.constant 0 : index
    %c0_51 = arith.constant 0 : index
    %c0_52 = arith.constant 0 : index
    %c0_53 = arith.constant 0 : index
    %53 = vector.load %arg6[%c0_50, %c0_51, %c0_52, %c0_53] : memref<1x1x32x20xbf16, #tpu.memory_space<vmem>>, vector<1x1x32x20xbf16>
    %54 = vector.shape_cast %53 : vector<1x1x32x20xbf16> to vector<32x20xbf16>
    %55 = vector.shape_cast %52 : vector<32x20xbf16> to vector<1x1x32x20xbf16>
    tpu.vector_store %arg6[%c0_50, %c0_51, %c0_52, %c0_53], %55 {strides = array<i32>} : memref<1x1x32x20xbf16, #tpu.memory_space<vmem>>, vector<1x1x32x20xbf16>,
    return
  }
  func.func @transform_0(%arg0: i32, %arg1: i32) -> (i32, i32, i32) {
    %c0_i32 = arith.constant 0 : i32
    %c0_i32_0 = arith.constant 0 : i32
    %c0_i32_1 = arith.constant 0 : i32
    %c0_i32_2 = arith.constant 0 : i32
    return %c0_i32, %c0_i32_0, %c0_i32_1 : i32, i32, i32
  }
  func.func @transform_1(%arg0: i32, %arg1: i32) -> (i32, i32) {
    %c0_i32 = arith.constant 0 : i32
    %c0_i32_0 = arith.constant 0 : i32
    %c0_i32_1 = arith.constant 0 : i32
    return %c0_i32, %c0_i32_0 : i32, i32
  }
  func.func @transform_2(%arg0: i32, %arg1: i32) -> (i32, i32, i32) {
    %c5_i32 = arith.constant 5 : i32
    %0 = arith.muli %arg0, %c5_i32 : i32
    %1 = arith.addi %0, %arg1 : i32
    %c0_i32 = arith.constant 0 : i32
    %c0_i32_0 = arith.constant 0 : i32
    %c0_i32_1 = arith.constant 0 : i32
    return %1, %c0_i32, %c0_i32_0 : i32, i32, i32
  }
  func.func @transform_3(%arg0: i32, %arg1: i32) -> (i32, i32, i32) {
    %c5_i32 = arith.constant 5 : i32
    %0 = arith.muli %arg0, %c5_i32 : i32
    %1 = arith.addi %0, %arg1 : i32
    %c1_i32 = arith.constant 1 : i32
    %2 = arith.addi %1, %c1_i32 : i32
    %c0_i32 = arith.constant 0 : i32
    %c0_i32_0 = arith.constant 0 : i32
    %c0_i32_1 = arith.constant 0 : i32
    return %2, %c0_i32, %c0_i32_0 : i32, i32, i32
  }
  func.func @transform_4(%arg0: i32, %arg1: i32) -> (i32, i32, i32, i32) {
    %c0_i32 = arith.constant 0 : i32
    %c0_i32_0 = arith.constant 0 : i32
    %c0_i32_1 = arith.constant 0 : i32
    return %arg0, %arg1, %c0_i32, %c0_i32_0 : i32, i32, i32, i32
  }
}

module attributes {stable_mosaic.version = 11 : i64} {
  func.func @_inorm_prelu_kernel(%arg0: i32, %arg1: memref<1x8x4x64xbf16, #tpu.memory_space<vmem>>, %arg2: memref<1x8x4x64xbf16, #tpu.memory_space<vmem>>) attributes {dimension_semantics = [#tpu.dimension_semantics<parallel>], iteration_bounds = array<i64: 2>, scalar_prefetch = 0 : i64, scratch_operands = 0 : i64, tpu.core_type = #tpu.core_type<tc>, window_params = [{transform_indices = @transform_0, window_bounds = array<i64: 1, 8, 4, 64>}, {transform_indices = @transform_1, window_bounds = array<i64: 1, 8, 4, 64>}]} {
    %c0 = arith.constant 0 : index
    %c0_0 = arith.constant 0 : index
    %c0_1 = arith.constant 0 : index
    %c0_2 = arith.constant 0 : index
    %0 = vector.load %arg1[%c0, %c0_0, %c0_1, %c0_2] : memref<1x8x4x64xbf16, #tpu.memory_space<vmem>>, vector<1x8x4x64xbf16>
    %1 = vector.shape_cast %0 : vector<1x8x4x64xbf16> to vector<8x4x64xbf16>
    %2 = arith.extf %1 : vector<8x4x64xbf16> to vector<8x4x64xf32>
    %cst = arith.constant dense<0.000000e+00> : vector<8x4xf32>
    %3 = vector.multi_reduction <add>, %2, %cst [2] : vector<8x4x64xf32> to vector<8x4xf32>
    %4 = vector.shape_cast %3 : vector<8x4xf32> to vector<8x4x1xf32>
    %cst_3 = arith.constant dense<0.000000e+00> : vector<4x1xf32>
    %5 = vector.multi_reduction <add>, %4, %cst_3 [0] : vector<8x4x1xf32> to vector<4x1xf32>
    %6 = vector.shape_cast %5 : vector<4x1xf32> to vector<1x4x1xf32>
    %7 = arith.mulf %2, %2 : vector<8x4x64xf32>
    %cst_4 = arith.constant dense<0.000000e+00> : vector<8x4xf32>
    %8 = vector.multi_reduction <add>, %7, %cst_4 [2] : vector<8x4x64xf32> to vector<8x4xf32>
    %9 = vector.shape_cast %8 : vector<8x4xf32> to vector<8x4x1xf32>
    %cst_5 = arith.constant dense<0.000000e+00> : vector<4x1xf32>
    %10 = vector.multi_reduction <add>, %9, %cst_5 [0] : vector<8x4x1xf32> to vector<4x1xf32>
    %11 = vector.shape_cast %10 : vector<4x1xf32> to vector<1x4x1xf32>
    %cst_6 = arith.constant 0.001953125 : f32
    %12 = vector.broadcast %cst_6 : f32 to vector<1x4x1xf32>
    %13 = arith.mulf %6, %12 : vector<1x4x1xf32>
    %cst_7 = arith.constant 0.001953125 : f32
    %14 = vector.broadcast %cst_7 : f32 to vector<1x4x1xf32>
    %15 = arith.mulf %11, %14 : vector<1x4x1xf32>
    %16 = arith.mulf %13, %13 : vector<1x4x1xf32>
    %17 = arith.subf %15, %16 : vector<1x4x1xf32>
    %18 = vector.broadcast %13 : vector<1x4x1xf32> to vector<8x4x64xf32>
    %19 = arith.subf %2, %18 : vector<8x4x64xf32>
    %cst_8 = arith.constant 9.99999974E-6 : f32
    %20 = vector.broadcast %cst_8 : f32 to vector<1x4x1xf32>
    %21 = arith.addf %17, %20 : vector<1x4x1xf32>
    %22 = math.rsqrt %21 : vector<1x4x1xf32>
    %23 = vector.broadcast %22 : vector<1x4x1xf32> to vector<8x4x64xf32>
    %24 = arith.mulf %19, %23 : vector<8x4x64xf32>
    %cst_9 = arith.constant 0.000000e+00 : f32
    %25 = vector.broadcast %cst_9 : f32 to vector<8x4x64xf32>
    %26 = arith.cmpf oge, %24, %25 : vector<8x4x64xf32>
    %cst_10 = arith.constant 2.500000e-01 : f32
    %27 = vector.broadcast %cst_10 : f32 to vector<8x4x64xf32>
    %28 = arith.mulf %27, %24 : vector<8x4x64xf32>
    %29 = arith.select %26, %24, %28 : vector<8x4x64xi1>, vector<8x4x64xf32>
    %30 = arith.truncf %29 : vector<8x4x64xf32> to vector<8x4x64xbf16>
    %c0_11 = arith.constant 0 : index
    %c0_12 = arith.constant 0 : index
    %c0_13 = arith.constant 0 : index
    %c0_14 = arith.constant 0 : index
    %31 = vector.load %arg2[%c0_11, %c0_12, %c0_13, %c0_14] : memref<1x8x4x64xbf16, #tpu.memory_space<vmem>>, vector<1x8x4x64xbf16>
    %32 = vector.shape_cast %31 : vector<1x8x4x64xbf16> to vector<8x4x64xbf16>
    %33 = vector.shape_cast %30 : vector<8x4x64xbf16> to vector<1x8x4x64xbf16>
    tpu.vector_store %arg2[%c0_11, %c0_12, %c0_13, %c0_14], %33 {strides = array<i32>} : memref<1x8x4x64xbf16, #tpu.memory_space<vmem>>, vector<1x8x4x64xbf16>,
    return
  }
  func.func @transform_0(%arg0: i32) -> (i32, i32, i32, i32) {
    %c0_i32 = arith.constant 0 : i32
    %c0_i32_0 = arith.constant 0 : i32
    %c0_i32_1 = arith.constant 0 : i32
    %c0_i32_2 = arith.constant 0 : i32
    return %arg0, %c0_i32, %c0_i32_0, %c0_i32_1 : i32, i32, i32, i32
  }
  func.func @transform_1(%arg0: i32) -> (i32, i32, i32, i32) {
    %c0_i32 = arith.constant 0 : i32
    %c0_i32_0 = arith.constant 0 : i32
    %c0_i32_1 = arith.constant 0 : i32
    %c0_i32_2 = arith.constant 0 : i32
    return %arg0, %c0_i32, %c0_i32_0, %c0_i32_1 : i32, i32, i32, i32
  }
}

module attributes {stable_mosaic.version = 11 : i64} {
  func.func @_convT_plane_kernel(%arg0: i32, %arg1: i32, %arg2: memref<8x16x4xbf16, #tpu.memory_space<vmem>>, %arg3: memref<16x1xf32, #tpu.memory_space<vmem>>, %arg4: memref<1x4x90xbf16, #tpu.memory_space<vmem>>, %arg5: memref<1x4x90xbf16, #tpu.memory_space<vmem>>, %arg6: memref<1x1x16x72xbf16, #tpu.memory_space<vmem>>) attributes {dimension_semantics = [#tpu.dimension_semantics<parallel>, #tpu.dimension_semantics<parallel>], iteration_bounds = array<i64: 2, 8>, scalar_prefetch = 0 : i64, scratch_operands = 0 : i64, tpu.core_type = #tpu.core_type<tc>, window_params = [{pipeline_mode = #tpu.pipeline_mode<synchronous>, transform_indices = @transform_0, window_bounds = array<i64: 8, 16, 4>}, {pipeline_mode = #tpu.pipeline_mode<synchronous>, transform_indices = @transform_1, window_bounds = array<i64: 16, 1>}, {transform_indices = @transform_2, window_bounds = array<i64: 1, 4, 90>}, {transform_indices = @transform_3, window_bounds = array<i64: 1, 4, 90>}, {transform_indices = @transform_4, window_bounds = array<i64: 1, 1, 16, 72>}]} {
    %cst = arith.constant 0.000000e+00 : f32
    %0 = vector.broadcast %cst : f32 to vector<16x72xf32>
    %c0 = arith.constant 0 : index
    %c0_0 = arith.constant 0 : index
    %c0_1 = arith.constant 0 : index
    %1 = vector.load %arg4[%c0, %c0_0, %c0_1] : memref<1x4x90xbf16, #tpu.memory_space<vmem>>, vector<1x4x72xbf16>
    %2 = vector.shape_cast %1 : vector<1x4x72xbf16> to vector<4x72xbf16>
    %c0_2 = arith.constant 0 : index
    %c0_3 = arith.constant 0 : index
    %c0_4 = arith.constant 0 : index
    %3 = vector.load %arg2[%c0_2, %c0_3, %c0_4] : memref<8x16x4xbf16, #tpu.memory_space<vmem>>, vector<1x16x4xbf16>
    %4 = vector.shape_cast %3 : vector<1x16x4xbf16> to vector<16x4xbf16>
    %cst_5 = arith.constant dense<0.000000e+00> : vector<16x72xf32>
    %5 = tpu.matmul %4, %2, %cst_5 {dimension_numbers = #tpu.dot_dimension_numbers<[1], [0], [0], [1], [0, 0, 1, 1], [], []>} : vector<16x4xbf16>, vector<4x72xbf16>, vector<16x72xf32> -> vector<16x72xf32>
    %6 = arith.addf %0, %5 : vector<16x72xf32>
    %c0_6 = arith.constant 0 : index
    %c0_7 = arith.constant 0 : index
    %c1 = arith.constant 1 : index
    %7 = vector.load %arg4[%c0_6, %c0_7, %c1] : memref<1x4x90xbf16, #tpu.memory_space<vmem>>, vector<1x4x72xbf16>
    %8 = vector.shape_cast %7 : vector<1x4x72xbf16> to vector<4x72xbf16>
    %c1_8 = arith.constant 1 : index
    %c0_9 = arith.constant 0 : index
    %c0_10 = arith.constant 0 : index
    %9 = vector.load %arg2[%c1_8, %c0_9, %c0_10] : memref<8x16x4xbf16, #tpu.memory_space<vmem>>, vector<1x16x4xbf16>
    %10 = vector.shape_cast %9 : vector<1x16x4xbf16> to vector<16x4xbf16>
    %cst_11 = arith.constant dense<0.000000e+00> : vector<16x72xf32>
    %11 = tpu.matmul %10, %8, %cst_11 {dimension_numbers = #tpu.dot_dimension_numbers<[1], [0], [0], [1], [0, 0, 1, 1], [], []>} : vector<16x4xbf16>, vector<4x72xbf16>, vector<16x72xf32> -> vector<16x72xf32>
    %12 = arith.addf %6, %11 : vector<16x72xf32>
    %c0_12 = arith.constant 0 : index
    %c0_13 = arith.constant 0 : index
    %c9 = arith.constant 9 : index
    %13 = vector.load %arg4[%c0_12, %c0_13, %c9] : memref<1x4x90xbf16, #tpu.memory_space<vmem>>, vector<1x4x72xbf16>
    %14 = vector.shape_cast %13 : vector<1x4x72xbf16> to vector<4x72xbf16>
    %c2 = arith.constant 2 : index
    %c0_14 = arith.constant 0 : index
    %c0_15 = arith.constant 0 : index
    %15 = vector.load %arg2[%c2, %c0_14, %c0_15] : memref<8x16x4xbf16, #tpu.memory_space<vmem>>, vector<1x16x4xbf16>
    %16 = vector.shape_cast %15 : vector<1x16x4xbf16> to vector<16x4xbf16>
    %cst_16 = arith.constant dense<0.000000e+00> : vector<16x72xf32>
    %17 = tpu.matmul %16, %14, %cst_16 {dimension_numbers = #tpu.dot_dimension_numbers<[1], [0], [0], [1], [0, 0, 1, 1], [], []>} : vector<16x4xbf16>, vector<4x72xbf16>, vector<16x72xf32> -> vector<16x72xf32>
    %18 = arith.addf %12, %17 : vector<16x72xf32>
    %c0_17 = arith.constant 0 : index
    %c0_18 = arith.constant 0 : index
    %c10 = arith.constant 10 : index
    %19 = vector.load %arg4[%c0_17, %c0_18, %c10] : memref<1x4x90xbf16, #tpu.memory_space<vmem>>, vector<1x4x72xbf16>
    %20 = vector.shape_cast %19 : vector<1x4x72xbf16> to vector<4x72xbf16>
    %c3 = arith.constant 3 : index
    %c0_19 = arith.constant 0 : index
    %c0_20 = arith.constant 0 : index
    %21 = vector.load %arg2[%c3, %c0_19, %c0_20] : memref<8x16x4xbf16, #tpu.memory_space<vmem>>, vector<1x16x4xbf16>
    %22 = vector.shape_cast %21 : vector<1x16x4xbf16> to vector<16x4xbf16>
    %cst_21 = arith.constant dense<0.000000e+00> : vector<16x72xf32>
    %23 = tpu.matmul %22, %20, %cst_21 {dimension_numbers = #tpu.dot_dimension_numbers<[1], [0], [0], [1], [0, 0, 1, 1], [], []>} : vector<16x4xbf16>, vector<4x72xbf16>, vector<16x72xf32> -> vector<16x72xf32>
    %24 = arith.addf %18, %23 : vector<16x72xf32>
    %c0_22 = arith.constant 0 : index
    %c0_23 = arith.constant 0 : index
    %c0_24 = arith.constant 0 : index
    %25 = vector.load %arg5[%c0_22, %c0_23, %c0_24] : memref<1x4x90xbf16, #tpu.memory_space<vmem>>, vector<1x4x72xbf16>
    %26 = vector.shape_cast %25 : vector<1x4x72xbf16> to vector<4x72xbf16>
    %c4 = arith.constant 4 : index
    %c0_25 = arith.constant 0 : index
    %c0_26 = arith.constant 0 : index
    %27 = vector.load %arg2[%c4, %c0_25, %c0_26] : memref<8x16x4xbf16, #tpu.memory_space<vmem>>, vector<1x16x4xbf16>
    %28 = vector.shape_cast %27 : vector<1x16x4xbf16> to vector<16x4xbf16>
    %cst_27 = arith.constant dense<0.000000e+00> : vector<16x72xf32>
    %29 = tpu.matmul %28, %26, %cst_27 {dimension_numbers = #tpu.dot_dimension_numbers<[1], [0], [0], [1], [0, 0, 1, 1], [], []>} : vector<16x4xbf16>, vector<4x72xbf16>, vector<16x72xf32> -> vector<16x72xf32>
    %30 = arith.addf %24, %29 : vector<16x72xf32>
    %c0_28 = arith.constant 0 : index
    %c0_29 = arith.constant 0 : index
    %c1_30 = arith.constant 1 : index
    %31 = vector.load %arg5[%c0_28, %c0_29, %c1_30] : memref<1x4x90xbf16, #tpu.memory_space<vmem>>, vector<1x4x72xbf16>
    %32 = vector.shape_cast %31 : vector<1x4x72xbf16> to vector<4x72xbf16>
    %c5 = arith.constant 5 : index
    %c0_31 = arith.constant 0 : index
    %c0_32 = arith.constant 0 : index
    %33 = vector.load %arg2[%c5, %c0_31, %c0_32] : memref<8x16x4xbf16, #tpu.memory_space<vmem>>, vector<1x16x4xbf16>
    %34 = vector.shape_cast %33 : vector<1x16x4xbf16> to vector<16x4xbf16>
    %cst_33 = arith.constant dense<0.000000e+00> : vector<16x72xf32>
    %35 = tpu.matmul %34, %32, %cst_33 {dimension_numbers = #tpu.dot_dimension_numbers<[1], [0], [0], [1], [0, 0, 1, 1], [], []>} : vector<16x4xbf16>, vector<4x72xbf16>, vector<16x72xf32> -> vector<16x72xf32>
    %36 = arith.addf %30, %35 : vector<16x72xf32>
    %c0_34 = arith.constant 0 : index
    %c0_35 = arith.constant 0 : index
    %c9_36 = arith.constant 9 : index
    %37 = vector.load %arg5[%c0_34, %c0_35, %c9_36] : memref<1x4x90xbf16, #tpu.memory_space<vmem>>, vector<1x4x72xbf16>
    %38 = vector.shape_cast %37 : vector<1x4x72xbf16> to vector<4x72xbf16>
    %c6 = arith.constant 6 : index
    %c0_37 = arith.constant 0 : index
    %c0_38 = arith.constant 0 : index
    %39 = vector.load %arg2[%c6, %c0_37, %c0_38] : memref<8x16x4xbf16, #tpu.memory_space<vmem>>, vector<1x16x4xbf16>
    %40 = vector.shape_cast %39 : vector<1x16x4xbf16> to vector<16x4xbf16>
    %cst_39 = arith.constant dense<0.000000e+00> : vector<16x72xf32>
    %41 = tpu.matmul %40, %38, %cst_39 {dimension_numbers = #tpu.dot_dimension_numbers<[1], [0], [0], [1], [0, 0, 1, 1], [], []>} : vector<16x4xbf16>, vector<4x72xbf16>, vector<16x72xf32> -> vector<16x72xf32>
    %42 = arith.addf %36, %41 : vector<16x72xf32>
    %c0_40 = arith.constant 0 : index
    %c0_41 = arith.constant 0 : index
    %c10_42 = arith.constant 10 : index
    %43 = vector.load %arg5[%c0_40, %c0_41, %c10_42] : memref<1x4x90xbf16, #tpu.memory_space<vmem>>, vector<1x4x72xbf16>
    %44 = vector.shape_cast %43 : vector<1x4x72xbf16> to vector<4x72xbf16>
    %c7 = arith.constant 7 : index
    %c0_43 = arith.constant 0 : index
    %c0_44 = arith.constant 0 : index
    %45 = vector.load %arg2[%c7, %c0_43, %c0_44] : memref<8x16x4xbf16, #tpu.memory_space<vmem>>, vector<1x16x4xbf16>
    %46 = vector.shape_cast %45 : vector<1x16x4xbf16> to vector<16x4xbf16>
    %cst_45 = arith.constant dense<0.000000e+00> : vector<16x72xf32>
    %47 = tpu.matmul %46, %44, %cst_45 {dimension_numbers = #tpu.dot_dimension_numbers<[1], [0], [0], [1], [0, 0, 1, 1], [], []>} : vector<16x4xbf16>, vector<4x72xbf16>, vector<16x72xf32> -> vector<16x72xf32>
    %48 = arith.addf %42, %47 : vector<16x72xf32>
    %c0_46 = arith.constant 0 : index
    %c0_47 = arith.constant 0 : index
    %49 = vector.load %arg3[%c0_46, %c0_47] : memref<16x1xf32, #tpu.memory_space<vmem>>, vector<16x1xf32>
    %50 = vector.broadcast %49 : vector<16x1xf32> to vector<16x72xf32>
    %51 = arith.addf %48, %50 : vector<16x72xf32>
    %52 = arith.truncf %51 : vector<16x72xf32> to vector<16x72xbf16>
    %c0_48 = arith.constant 0 : index
    %c0_49 = arith.constant 0 : index
    %c0_50 = arith.constant 0 : index
    %c0_51 = arith.constant 0 : index
    %53 = vector.load %arg6[%c0_48, %c0_49, %c0_50, %c0_51] : memref<1x1x16x72xbf16, #tpu.memory_space<vmem>>, vector<1x1x16x72xbf16>
    %54 = vector.shape_cast %53 : vector<1x1x16x72xbf16> to vector<16x72xbf16>
    %55 = vector.shape_cast %52 : vector<16x72xbf16> to vector<1x1x16x72xbf16>
    tpu.vector_store %arg6[%c0_48, %c0_49, %c0_50, %c0_51], %55 {strides = array<i32>} : memref<1x1x16x72xbf16, #tpu.memory_space<vmem>>, vector<1x1x16x72xbf16>,
    return
  }
  func.func @transform_0(%arg0: i32, %arg1: i32) -> (i32, i32, i32) {
    %c0_i32 = arith.constant 0 : i32
    %c0_i32_0 = arith.constant 0 : i32
    %c0_i32_1 = arith.constant 0 : i32
    %c0_i32_2 = arith.constant 0 : i32
    return %c0_i32, %c0_i32_0, %c0_i32_1 : i32, i32, i32
  }
  func.func @transform_1(%arg0: i32, %arg1: i32) -> (i32, i32) {
    %c0_i32 = arith.constant 0 : i32
    %c0_i32_0 = arith.constant 0 : i32
    %c0_i32_1 = arith.constant 0 : i32
    return %c0_i32, %c0_i32_0 : i32, i32
  }
  func.func @transform_2(%arg0: i32, %arg1: i32) -> (i32, i32, i32) {
    %c9_i32 = arith.constant 9 : i32
    %0 = arith.muli %arg0, %c9_i32 : i32
    %1 = arith.addi %0, %arg1 : i32
    %c0_i32 = arith.constant 0 : i32
    %c0_i32_0 = arith.constant 0 : i32
    %c0_i32_1 = arith.constant 0 : i32
    return %1, %c0_i32, %c0_i32_0 : i32, i32, i32
  }
  func.func @transform_3(%arg0: i32, %arg1: i32) -> (i32, i32, i32) {
    %c9_i32 = arith.constant 9 : i32
    %0 = arith.muli %arg0, %c9_i32 : i32
    %1 = arith.addi %0, %arg1 : i32
    %c1_i32 = arith.constant 1 : i32
    %2 = arith.addi %1, %c1_i32 : i32
    %c0_i32 = arith.constant 0 : i32
    %c0_i32_0 = arith.constant 0 : i32
    %c0_i32_1 = arith.constant 0 : i32
    return %2, %c0_i32, %c0_i32_0 : i32, i32, i32
  }
  func.func @transform_4(%arg0: i32, %arg1: i32) -> (i32, i32, i32, i32) {
    %c0_i32 = arith.constant 0 : i32
    %c0_i32_0 = arith.constant 0 : i32
    %c0_i32_1 = arith.constant 0 : i32
    return %arg0, %arg1, %c0_i32, %c0_i32_0 : i32, i32, i32, i32
  }
}

module attributes {stable_mosaic.version = 11 : i64} {
  func.func @_bkd_kernel(%arg0: i32, %arg1: i32, %arg2: memref<1x2x16x256xbf16, #tpu.memory_space<vmem>>, %arg3: memref<1x2x16x256xf32, #tpu.memory_space<vmem>>, %arg4: memref<1x16x256xf32, #tpu.memory_space<vmem>>, %arg5: memref<1x1x1xf32, #tpu.memory_space<vmem>>, %arg6: memref<1x1x1xf32, #tpu.memory_space<vmem>>, %arg7: memref<1x1xf32, #tpu.memory_space<vmem>>, %arg8: memref<1x1xf32, #tpu.memory_space<vmem>>) attributes {dimension_semantics = [#tpu.dimension_semantics<parallel>, #tpu.dimension_semantics<arbitrary>], iteration_bounds = array<i64: 2, 1>, scalar_prefetch = 0 : i64, scratch_operands = 2 : i64, tpu.core_type = #tpu.core_type<tc>, window_params = [{transform_indices = @transform_0, window_bounds = array<i64: 1, 2, 16, 256>}, {transform_indices = @transform_1, window_bounds = array<i64: 1, 2, 16, 256>}, {transform_indices = @transform_2, window_bounds = array<i64: 1, 16, 256>}, {transform_indices = @transform_3, window_bounds = array<i64: 1, 1, 1>}, {transform_indices = @transform_4, window_bounds = array<i64: 1, 1, 1>}]} {
    %c0_i32 = arith.constant 0 : i32
    %0 = arith.cmpi eq, %arg1, %c0_i32 : i32
    %1 = arith.extui %0 : i1 to i32
    %c0_i32_0 = arith.constant 0 : i32
    %2 = arith.cmpi ne, %1, %c0_i32_0 : i32
    scf.if %2 {
      %cst_27 = arith.constant 0.000000e+00 : f32
      %60 = vector.broadcast %cst_27 : f32 to vector<1x1xf32>
      %c0_28 = arith.constant 0 : index
      %c0_29 = arith.constant 0 : index
      %61 = vector.load %arg7[%c0_28, %c0_29] : memref<1x1xf32, #tpu.memory_space<vmem>>, vector<1x1xf32>
      tpu.vector_store %arg7[%c0_28, %c0_29], %60 {strides = array<i32>} : memref<1x1xf32, #tpu.memory_space<vmem>>, vector<1x1xf32>,
      %cst_30 = arith.constant 0.000000e+00 : f32
      %62 = vector.broadcast %cst_30 : f32 to vector<1x1xf32>
      %c0_31 = arith.constant 0 : index
      %c0_32 = arith.constant 0 : index
      %63 = vector.load %arg8[%c0_31, %c0_32] : memref<1x1xf32, #tpu.memory_space<vmem>>, vector<1x1xf32>
      tpu.vector_store %arg8[%c0_31, %c0_32], %62 {strides = array<i32>} : memref<1x1xf32, #tpu.memory_space<vmem>>, vector<1x1xf32>,
    } else {
    }
    %c0 = arith.constant 0 : index
    %c0_1 = arith.constant 0 : index
    %c0_2 = arith.constant 0 : index
    %c0_3 = arith.constant 0 : index
    %3 = vector.load %arg2[%c0, %c0_1, %c0_2, %c0_3] : memref<1x2x16x256xbf16, #tpu.memory_space<vmem>>, vector<1x2x16x256xbf16>
    %4 = vector.shape_cast %3 : vector<1x2x16x256xbf16> to vector<2x16x256xbf16>
    %5 = arith.extf %4 : vector<2x16x256xbf16> to vector<2x16x256xf32>
    %c0_4 = arith.constant 0 : index
    %c0_5 = arith.constant 0 : index
    %c0_6 = arith.constant 0 : index
    %c0_7 = arith.constant 0 : index
    %6 = vector.load %arg3[%c0_4, %c0_5, %c0_6, %c0_7] : memref<1x2x16x256xf32, #tpu.memory_space<vmem>>, vector<1x2x16x256xf32>
    %7 = vector.shape_cast %6 : vector<1x2x16x256xf32> to vector<2x16x256xf32>
    %c0_8 = arith.constant 0 : index
    %c0_9 = arith.constant 0 : index
    %c0_10 = arith.constant 0 : index
    %8 = vector.load %arg4[%c0_8, %c0_9, %c0_10] : memref<1x16x256xf32, #tpu.memory_space<vmem>>, vector<1x16x256xf32>
    %9 = vector.shape_cast %8 : vector<1x16x256xf32> to vector<16x256xf32>
    %cst = arith.constant dense<0xFF800000> : vector<16x256xf32>
    %10 = vector.multi_reduction <maximumf>, %5, %cst [0] : vector<2x16x256xf32> to vector<16x256xf32>
    %11 = vector.shape_cast %10 : vector<16x256xf32> to vector<1x16x256xf32>
    %12 = vector.broadcast %11 : vector<1x16x256xf32> to vector<2x16x256xf32>
    %13 = arith.subf %5, %12 : vector<2x16x256xf32>
    %14 = vector.broadcast %11 : vector<1x16x256xf32> to vector<2x16x256xf32>
    %15 = arith.subf %5, %14 : vector<2x16x256xf32>
    %16 = math.exp %15 : vector<2x16x256xf32>
    %cst_11 = arith.constant dense<0.000000e+00> : vector<16x256xf32>
    %17 = vector.multi_reduction <add>, %16, %cst_11 [0] : vector<2x16x256xf32> to vector<16x256xf32>
    %18 = vector.shape_cast %17 : vector<16x256xf32> to vector<1x16x256xf32>
    %19 = math.log %18 : vector<1x16x256xf32>
    %20 = vector.broadcast %19 : vector<1x16x256xf32> to vector<2x16x256xf32>
    %21 = arith.subf %13, %20 : vector<2x16x256xf32>
    %cst_12 = arith.constant dense<0xFF800000> : vector<16x256xf32>
    %22 = vector.multi_reduction <maximumf>, %7, %cst_12 [0] : vector<2x16x256xf32> to vector<16x256xf32>
    %23 = vector.shape_cast %22 : vector<16x256xf32> to vector<1x16x256xf32>
    %24 = vector.broadcast %23 : vector<1x16x256xf32> to vector<2x16x256xf32>
    %25 = arith.subf %7, %24 : vector<2x16x256xf32>
    %26 = math.exp %25 : vector<2x16x256xf32>
    %cst_13 = arith.constant dense<0.000000e+00> : vector<16x256xf32>
    %27 = vector.multi_reduction <add>, %26, %cst_13 [0] : vector<2x16x256xf32> to vector<16x256xf32>
    %28 = vector.shape_cast %27 : vector<16x256xf32> to vector<1x16x256xf32>
    %29 = vector.broadcast %23 : vector<1x16x256xf32> to vector<2x16x256xf32>
    %30 = arith.subf %7, %29 : vector<2x16x256xf32>
    %31 = math.log %28 : vector<1x16x256xf32>
    %32 = vector.broadcast %31 : vector<1x16x256xf32> to vector<2x16x256xf32>
    %33 = arith.subf %30, %32 : vector<2x16x256xf32>
    %34 = tpu.reciprocal %28 {approx = true} : vector<1x16x256xf32> -> vector<1x16x256xf32>
    %35 = vector.broadcast %34 : vector<1x16x256xf32> to vector<2x16x256xf32>
    %36 = arith.mulf %26, %35 : vector<2x16x256xf32>
    %37 = arith.subf %33, %21 : vector<2x16x256xf32>
    %38 = arith.mulf %36, %37 : vector<2x16x256xf32>
    %cst_14 = arith.constant dense<0.000000e+00> : vector<16x256xf32>
    %39 = vector.multi_reduction <add>, %38, %cst_14 [0] : vector<2x16x256xf32> to vector<16x256xf32>
    %c0_15 = arith.constant 0 : index
    %c0_16 = arith.constant 0 : index
    %40 = vector.load %arg7[%c0_15, %c0_16] : memref<1x1xf32, #tpu.memory_space<vmem>>, vector<1x1xf32>
    %41 = arith.mulf %39, %9 : vector<16x256xf32>
    %42 = vector.shape_cast %41 : vector<16x256xf32> to vector<1x16x256xf32>
    %cst_17 = arith.constant dense<0.000000e+00> : vector<1xf32>
    %43 = vector.multi_reduction <add>, %42, %cst_17 [1, 2] : vector<1x16x256xf32> to vector<1xf32>
    %44 = vector.shape_cast %43 : vector<1xf32> to vector<1x1x1xf32>
    %45 = vector.extract %44[0, 0, 0] : f32 from vector<1x1x1xf32>
    %46 = vector.broadcast %45 : f32 to vector<1x1xf32>
    %47 = arith.addf %40, %46 : vector<1x1xf32>
    %c0_18 = arith.constant 0 : index
    %c0_19 = arith.constant 0 : index
    %48 = vector.load %arg7[%c0_18, %c0_19] : memref<1x1xf32, #tpu.memory_space<vmem>>, vector<1x1xf32>
    tpu.vector_store %arg7[%c0_18, %c0_19], %47 {strides = array<i32>} : memref<1x1xf32, #tpu.memory_space<vmem>>, vector<1x1xf32>,
    %c0_20 = arith.constant 0 : index
    %c0_21 = arith.constant 0 : index
    %49 = vector.load %arg8[%c0_20, %c0_21] : memref<1x1xf32, #tpu.memory_space<vmem>>, vector<1x1xf32>
    %50 = vector.shape_cast %9 : vector<16x256xf32> to vector<1x16x256xf32>
    %cst_22 = arith.constant dense<0.000000e+00> : vector<1xf32>
    %51 = vector.multi_reduction <add>, %50, %cst_22 [1, 2] : vector<1x16x256xf32> to vector<1xf32>
    %52 = vector.shape_cast %51 : vector<1xf32> to vector<1x1x1xf32>
    %53 = vector.extract %52[0, 0, 0] : f32 from vector<1x1x1xf32>
    %54 = vector.broadcast %53 : f32 to vector<1x1xf32>
    %55 = arith.addf %49, %54 : vector<1x1xf32>
    %c0_23 = arith.constant 0 : index
    %c0_24 = arith.constant 0 : index
    %56 = vector.load %arg8[%c0_23, %c0_24] : memref<1x1xf32, #tpu.memory_space<vmem>>, vector<1x1xf32>
    tpu.vector_store %arg8[%c0_23, %c0_24], %55 {strides = array<i32>} : memref<1x1xf32, #tpu.memory_space<vmem>>, vector<1x1xf32>,
    %c0_i32_25 = arith.constant 0 : i32
    %57 = arith.cmpi eq, %arg1, %c0_i32_25 : i32
    %58 = arith.extui %57 : i1 to i32
    %c0_i32_26 = arith.constant 0 : i32
    %59 = arith.cmpi ne, %58, %c0_i32_26 : i32
    scf.if %59 {
      %c0_27 = arith.constant 0 : index
      %c0_28 = arith.constant 0 : index
      %60 = vector.load %arg7[%c0_27, %c0_28] : memref<1x1xf32, #tpu.memory_space<vmem>>, vector<1x1xf32>
      %c0_29 = arith.constant 0 : index
      %c0_30 = arith.constant 0 : index
      %c0_31 = arith.constant 0 : index
      %61 = vector.load %arg5[%c0_29, %c0_30, %c0_31] : memref<1x1x1xf32, #tpu.memory_space<vmem>>, vector<1x1x1xf32>
      %62 = vector.shape_cast %61 : vector<1x1x1xf32> to vector<1x1xf32>
      %63 = vector.shape_cast %60 : vector<1x1xf32> to vector<1x1x1xf32>
      tpu.vector_store %arg5[%c0_29, %c0_30, %c0_31], %63 {strides = array<i32>} : memref<1x1x1xf32, #tpu.memory_space<vmem>>, vector<1x1x1xf32>,
      %c0_32 = arith.constant 0 : index
      %c0_33 = arith.constant 0 : index
      %64 = vector.load %arg8[%c0_32, %c0_33] : memref<1x1xf32, #tpu.memory_space<vmem>>, vector<1x1xf32>
      %c0_34 = arith.constant 0 : index
      %c0_35 = arith.constant 0 : index
      %c0_36 = arith.constant 0 : index
      %65 = vector.load %arg6[%c0_34, %c0_35, %c0_36] : memref<1x1x1xf32, #tpu.memory_space<vmem>>, vector<1x1x1xf32>
      %66 = vector.shape_cast %65 : vector<1x1x1xf32> to vector<1x1xf32>
      %67 = vector.shape_cast %64 : vector<1x1xf32> to vector<1x1x1xf32>
      tpu.vector_store %arg6[%c0_34, %c0_35, %c0_36], %67 {strides = array<i32>} : memref<1x1x1xf32, #tpu.memory_space<vmem>>, vector<1x1x1xf32>,
    } else {
    }
    return
  }
  func.func @transform_0(%arg0: i32, %arg1: i32) -> (i32, i32, i32, i32) {
    %c0_i32 = arith.constant 0 : i32
    %c0_i32_0 = arith.constant 0 : i32
    %c0_i32_1 = arith.constant 0 : i32
    return %arg0, %c0_i32, %arg1, %c0_i32_0 : i32, i32, i32, i32
  }
  func.func @transform_1(%arg0: i32, %arg1: i32) -> (i32, i32, i32, i32) {
    %c0_i32 = arith.constant 0 : i32
    %c0_i32_0 = arith.constant 0 : i32
    %c0_i32_1 = arith.constant 0 : i32
    return %arg0, %c0_i32, %arg1, %c0_i32_0 : i32, i32, i32, i32
  }
  func.func @transform_2(%arg0: i32, %arg1: i32) -> (i32, i32, i32) {
    %c0_i32 = arith.constant 0 : i32
    %c0_i32_0 = arith.constant 0 : i32
    return %arg0, %arg1, %c0_i32 : i32, i32, i32
  }
  func.func @transform_3(%arg0: i32, %arg1: i32) -> (i32, i32, i32) {
    %c0_i32 = arith.constant 0 : i32
    %c0_i32_0 = arith.constant 0 : i32
    %c0_i32_1 = arith.constant 0 : i32
    return %arg0, %c0_i32, %c0_i32_0 : i32, i32, i32
  }
  func.func @transform_4(%arg0: i32, %arg1: i32) -> (i32, i32, i32) {
    %c0_i32 = arith.constant 0 : i32
    %c0_i32_0 = arith.constant 0 : i32
    %c0_i32_1 = arith.constant 0 : i32
    return %arg0, %c0_i32, %c0_i32_0 : i32, i32, i32
  }
}

</mosaic_0001>

<llo_original>
// kernel: a_call__.4
$region0: #{a_call__.4}
  #allocation0 [shape = 'u32[]', space=smem, size = 0x4, offset = 0x4, fixed_abs, tag = 'smem constant byte address 0x4 - core index']
  #allocation1 [shape = 'u32[144,128]{1,0:T(1,128)}', space=vmem, size = 0x12000, scoped, tag = 'internal scratch']
  %s0 = inlined_call_operand.hbm [shape: bf16[8,32,8], index: 0, kind: input, shape index: {}]
  %s1 = inlined_call_operand.hbm [shape: f32[32,1], index: 1, kind: input, shape index: {}]
  %s2 = inlined_call_operand.vmem [shape: bf16[10,8,30], index: 2, kind: input, shape index: {}, may-alias: {2,3}]
  %s3 = inlined_call_operand.vmem [shape: bf16[10,8,30], index: 3, kind: input, shape index: {}, may-alias: {2,3}]
  %s4 = inlined_call_operand.vmem [shape: bf16[2,4,32,20], index: 4, kind: output, shape index: {}]
  %s5 = sld [smem:[#allocation0]]
  $region57: #{a_call__.4} parent=0
    _
  %s7 = ssub.s32 1, %s5
  %s8 = scalar_select 0, %s7, %s5
  $region1: #{a_call__.4} parent=0
    #allocation2 [shape = 'u8[65536]{0}', space=vmem, size = 0x10000, scoped, tag = 'input window, operand 0, single buffered']
    #allocation3 [shape = 's32[2]{0}', space=sflag, size = 0x8, scoped, tag = 'scoped memory for a_call__.4']
    #allocation4 [shape = 'u8[16384]{0}', space=vmem, size = 0x4000, scoped, tag = 'input window, operand 1, single buffered']
    #allocation5 [shape = 's32[1]{0}', space=sflag, size = 0x4, scoped, tag = 'scoped memory for a_call__.4']
    %9 = vsyncpa [#allocation3], 0
    %10 = vsyncpa [#allocation5], 0
    loop: start=0, step=1, limit=10
    $region2: #{a_call__.4} parent=1 // loop_pre_header
      _
    $region3: #{a_call__.4} parent=1 // loop_header
      %s12 = sphi 0, %s16
      %p13 = scmp.ge.s32.totalorder %s12, 10
      %s19 = sphi 0, %s31
      %s20 = sphi 0, %s27
      %s21 = sphi 0, %s19
      %s22 = sphi 0, %s20
      %s23 = sphi 0, %s21
      %s24 = sphi 0, %s22
      %s32 = sphi 0, %s32
      %s34 = sphi 0, %s32
      %s35 = sphi 0, %s34
      %s49 = sphi 0, %s35
      %s53 = sphi 0, %s53
      %s55 = sphi 0, %s53
      %s56 = sphi 0, %s55
      %s70 = sphi 0, %s56
      %s80 = sphi 0, %s82
      %s83 = sphi 0, %s80
      %s84 = sphi 0, %s83
      %s100 = sphi 0, %s84
      %s112 = sphi 0, %s114
      %s115 = sphi 0, %s112
      %s116 = sphi 0, %s115
      %s132 = sphi 0, %s116
      %s140 = sphi 0, %s142
      %s143 = sphi 0, %s140
      %s144 = sphi 0, %s143
      %s160 = sphi 0, %s144
    $region4: #{a_call__.4} parent=1 // loop_header_branch
      %15 = sbr.rel (%p13) target = $region8
    $region5: #{a_call__.4} parent=1 // loop_body
      %s17 = ssub.s32 %s12, 1
      %s18 = ssub.s32 %s12, 2
      %s25 = sadd.s32 1, %s20
      %p26 = scmp.ge.s32.totalorder %s25, 4
      %s27 = scalar_select %p26, 0, %s25
      %s28 = sadd.s32 1, %s19
      %s29 = scalar_select %p26, %s28, %s19
      %p30 = scmp.ge.s32.totalorder %s29, 2
      %s31 = scalar_select %p30, 0, %s29
      %s33 = sadd.s32 %s32, 1
      %p36 = scmp.eq.s32.totalorder %s12, 7
      %p37 = scmp.ne.s32.totalorder %s32, %s34
      %p38 = scmp.eq.s32.totalorder %s12, 0
      %p39 = por %p37, %p38
      %p40 = scmp.ne.s32.totalorder %s32, %s34
      %p41 = scmp.eq.s32.totalorder %s17, 7
      %p42 = por %p40, %p41
      %p43 = scmp.ne.s32.totalorder %s34, %s35
      %p44 = scmp.eq.s32.totalorder %s17, 0
      %p45 = por %p43, %p44
      %p46 = scmp.ne.s32.totalorder %s34, %s35
      %p47 = scmp.eq.s32.totalorder %s18, 7
      %p48 = por %p46, %p47
      %p50 = scmp.ne.s32.totalorder %s35, %s49
      %p51 = scmp.eq.s32.totalorder %s18, 0
      %p52 = por %p50, %p51
      %s54 = sadd.s32 %s53, 1
      %p57 = scmp.eq.s32.totalorder %s12, 7
      %p58 = scmp.ne.s32.totalorder %s53, %s55
      %p59 = scmp.eq.s32.totalorder %s12, 0
      %p60 = por %p58, %p59
      %p61 = scmp.ne.s32.totalorder %s53, %s55
      %p62 = scmp.eq.s32.totalorder %s17, 7
      %p63 = por %p61, %p62
      %p64 = scmp.ne.s32.totalorder %s55, %s56
      %p65 = scmp.eq.s32.totalorder %s17, 0
      %p66 = por %p64, %p65
      %p67 = scmp.ne.s32.totalorder %s55, %s56
      %p68 = scmp.eq.s32.totalorder %s18, 7
      %p69 = por %p67, %p68
      %p71 = scmp.ne.s32.totalorder %s56, %s70
      %p72 = scmp.eq.s32.totalorder %s18, 0
      %p73 = por %p71, %p72
      %s74 = smul.u32 %s19, 5
      %s75 = sadd.s32 %s74, %s20
      %s76 = smul.u32 %s31, 5
      %s77 = sadd.s32 %s76, %s27
      %s78 = ssub.s32 %s75, %s77
      %p79 = scmp.eq.s32.totalorder %s78, 0
      %s81 = sadd.s32 %s80, 1
      %s82 = scalar_select %p79, %s80, %s81
      %p85 = pneg %p79
      %p86 = scmp.eq.s32.totalorder %s12, 7
      %p87 = por %p85, %p86
      %p88 = scmp.ne.s32.totalorder %s80, %s83
      %p89 = scmp.eq.s32.totalorder %s12, 0
      %p90 = por %p88, %p89
      %p91 = scmp.ne.s32.totalorder %s80, %s83
      %p92 = scmp.eq.s32.totalorder %s17, 7
      %p93 = por %p91, %p92
      %p94 = scmp.ne.s32.totalorder %s83, %s84
      %p95 = scmp.eq.s32.totalorder %s17, 0
      %p96 = por %p94, %p95
      %p97 = scmp.ne.s32.totalorder %s83, %s84
      %p98 = scmp.eq.s32.totalorder %s18, 7
      %p99 = por %p97, %p98
      %p101 = scmp.ne.s32.totalorder %s84, %s100
      %p102 = scmp.eq.s32.totalorder %s18, 0
      %p103 = por %p101, %p102
      %s104 = smul.u32 %s19, 5
      %s105 = sadd.s32 %s104, %s20
      %s106 = sadd.s32 %s105, 1
      %s107 = smul.u32 %s31, 5
      %s108 = sadd.s32 %s107, %s27
      %s109 = sadd.s32 %s108, 1
      %s110 = ssub.s32 %s106, %s109
      %p111 = scmp.eq.s32.totalorder %s110, 0
      %s113 = sadd.s32 %s112, 1
      %s114 = scalar_select %p111, %s112, %s113
      %p117 = pneg %p111
      %p118 = scmp.eq.s32.totalorder %s12, 7
      %p119 = por %p117, %p118
      %p120 = scmp.ne.s32.totalorder %s112, %s115
      %p121 = scmp.eq.s32.totalorder %s12, 0
      %p122 = por %p120, %p121
      %p123 = scmp.ne.s32.totalorder %s112, %s115
      %p124 = scmp.eq.s32.totalorder %s17, 7
      %p125 = por %p123, %p124
      %p126 = scmp.ne.s32.totalorder %s115, %s116
      %p127 = scmp.eq.s32.totalorder %s17, 0
      %p128 = por %p126, %p127
      %p129 = scmp.ne.s32.totalorder %s115, %s116
      %p130 = scmp.eq.s32.totalorder %s18, 7
      %p131 = por %p129, %p130
      %p133 = scmp.ne.s32.totalorder %s116, %s132
      %p134 = scmp.eq.s32.totalorder %s18, 0
      %p135 = por %p133, %p134
      %s136 = ssub.s32 %s19, %s31
      %s137 = ssub.s32 %s20, %s27
      %s138 = sor.u32 %s136, %s137
      %p139 = scmp.eq.s32.totalorder %s138, 0
      %s141 = sadd.s32 %s140, 1
      %s142 = scalar_select %p139, %s140, %s141
      %p145 = pneg %p139
      %p146 = scmp.eq.s32.totalorder %s12, 7
      %p147 = por %p145, %p146
      %p148 = scmp.ne.s32.totalorder %s140, %s143
      %p149 = scmp.eq.s32.totalorder %s12, 0
      %p150 = por %p148, %p149
      %p151 = scmp.ne.s32.totalorder %s140, %s143
      %p152 = scmp.eq.s32.totalorder %s17, 7
      %p153 = por %p151, %p152
      %p154 = scmp.ne.s32.totalorder %s143, %s144
      %p155 = scmp.eq.s32.totalorder %s17, 0
      %p156 = por %p154, %p155
      %p157 = scmp.ne.s32.totalorder %s143, %s144
      %p158 = scmp.eq.s32.totalorder %s18, 7
      %p159 = por %p157, %p158
      %p161 = scmp.ne.s32.totalorder %s144, %s160
      %p162 = scmp.eq.s32.totalorder %s18, 0
      %p163 = por %p161, %p162
      %p164 = scmp.le.s32.totalorder 1, %s12
      %p165 = scmp.lt.s32.totalorder %s12, 9
      %p166 = pnand %p164, %p165
      %p167 = pneg %p166
      // Predicated region
      $region9: #{a_call__.4} parent=5 // pred_check
        _
      $region10: #{a_call__.4} parent=5 // pred_check_branch
        %169 = sbr.rel (%p166) target = $region12
      $region11: #{a_call__.4} parent=5 // pred_region
        %s170 = ssub.s32 %s12, 1
        // Predicated region
        $region13: #{a_call__.4} parent=11 // pred_check
          %p171 = pneg %p45
        $region14: #{a_call__.4} parent=11 // pred_check_branch
          %173 = sbr.rel (%p171) target = $region16
        $region15: #{a_call__.4} parent=11 // pred_region
          %s175 = ssub.s32 2048, 2048
          %176 = vsyncadd [#allocation3], %s175
          %s177 = sshll.u32 [#allocation2], 4
          %s178 = int_to_ptr.vmem [resolvable:$true] %s177
          %183 = dma.hbm_to_vmem [thread:$0]  %s0, 2048, %s178, [#allocation3], 64, 64, 4
        $region16: #{a_call__.4} parent=11 // pred_fallthru
          _
        // Predicated region
        $region17: #{a_call__.4} parent=11 // pred_check
          %p184 = pneg %p66
        $region18: #{a_call__.4} parent=11 // pred_check_branch
          %186 = sbr.rel (%p184) target = $region20
        $region19: #{a_call__.4} parent=11 // pred_region
          %s188 = ssub.s32 512, 512
          %189 = vsyncadd [#allocation5], %s188
          %s190 = sshll.u32 [#allocation4], 4
          %s191 = int_to_ptr.vmem [resolvable:$true] %s190
          %196 = dma.hbm_to_vmem [thread:$0]  %s1, 512, %s191, [#allocation5], 128, 128, 8
        $region20: #{a_call__.4} parent=11 // pred_fallthru
          _
      $region12: #{a_call__.4} parent=5 // pred_fallthru
        _
      %p197 = scmp.lt.s32.totalorder %s12, 8
      // Predicated region
      $region21: #{a_call__.4} parent=5 // pred_check
        %p198 = pneg %p197
      $region22: #{a_call__.4} parent=5 // pred_check_branch
        %200 = sbr.rel (%p198) target = $region24
      $region23: #{a_call__.4} parent=5 // pred_region
        // Predicated region
        $region25: #{a_call__.4} parent=23 // pred_check
          %p201 = pneg %p90
        $region26: #{a_call__.4} parent=23 // pred_check_branch
          %203 = sbr.rel (%p201) target = $region28
        $region27: #{a_call__.4} parent=23 // pred_region
          %s204 = smul.u32 %s19, 5
          %s205 = sadd.s32 %s204, %s20
          %p206 = scmp.lt.s32.totalorder %s205, 9
          %s207 = scalar_select %p206, %s205, 9
          %s208 = smul.addr %s207, 4
          %s209 = scalar_lea.vmem %s2, %s208
          %s210 = smul.u32 %s19, 5
          %s211 = sadd.s32 %s210, %s20
        $region28: #{a_call__.4} parent=23 // pred_fallthru
          _
        // Predicated region
        $region29: #{a_call__.4} parent=23 // pred_check
          %p212 = pneg %p122
        $region30: #{a_call__.4} parent=23 // pred_check_branch
          %214 = sbr.rel (%p212) target = $region32
        $region31: #{a_call__.4} parent=23 // pred_region
          %s215 = smul.u32 %s19, 5
          %s216 = sadd.s32 %s215, %s20
          %s217 = sadd.s32 %s216, 1
          %p218 = scmp.lt.s32.totalorder %s217, 9
          %s219 = scalar_select %p218, %s217, 9
          %s220 = smul.addr %s219, 4
          %s221 = scalar_lea.vmem %s3, %s220
          %s222 = smul.u32 %s19, 5
          %s223 = sadd.s32 %s222, %s20
          %s224 = sadd.s32 %s223, 1
        $region32: #{a_call__.4} parent=23 // pred_fallthru
          _
      $region24: #{a_call__.4} parent=5 // pred_fallthru
        _
      %p225 = scmp.le.s32.totalorder 1, %s12
      %p226 = scmp.lt.s32.totalorder %s12, 9
      %p227 = pnand %p225, %p226
      %p228 = pneg %p227
      // Predicated region
      $region33: #{a_call__.4} parent=5 // pred_check
        _
      $region34: #{a_call__.4} parent=5 // pred_check_branch
        %230 = sbr.rel (%p227) target = $region36
      $region35: #{a_call__.4} parent=5 // pred_region
        %s231 = ssub.s32 %s12, 1
        // Predicated region
        $region37: #{a_call__.4} parent=35 // pred_check
          %p232 = pneg %p45
        $region38: #{a_call__.4} parent=35 // pred_check_branch
          %234 = sbr.rel (%p232) target = $region40
        $region39: #{a_call__.4} parent=35 // pred_region
          %235 = dma.done [#allocation3], 2048
        $region40: #{a_call__.4} parent=35 // pred_fallthru
          _
        // Predicated region
        $region41: #{a_call__.4} parent=35 // pred_check
          %p236 = pneg %p66
        $region42: #{a_call__.4} parent=35 // pred_check_branch
          %238 = sbr.rel (%p236) target = $region44
        $region43: #{a_call__.4} parent=35 // pred_region
          %239 = dma.done [#allocation5], 512
        $region44: #{a_call__.4} parent=35 // pred_fallthru
          _
        %p240 = pneg %p45
        %p241 = pneg %p42
        %p242 = pneg %p66
        %p243 = pneg %p63
        %s244 = smul.u32 %s21, 5
        %s245 = sadd.s32 %s244, %s22
        %p246 = scmp.lt.s32.totalorder %s245, 9
        %s247 = scalar_select %p246, %s245, 9
        %s248 = smul.addr %s247, 4
        %s249 = scalar_lea.vmem %s2, %s248
        %p250 = pneg %p96
        %p251 = pneg %p93
        %s252 = smul.u32 %s21, 5
        %s253 = sadd.s32 %s252, %s22
        %s254 = sadd.s32 %s253, 1
        %p255 = scmp.lt.s32.totalorder %s254, 9
        %s256 = scalar_select %p255, %s254, 9
        %s257 = smul.addr %s256, 4
        %s258 = scalar_lea.vmem %s3, %s257
        %p259 = pneg %p128
        %p260 = pneg %p125
        %p261 = pneg %p156
        %p262 = pneg %p153
        %p263 = scmp.lt.s32.totalorder %s21, 1
        %s264 = scalar_select %p263, %s21, 1
        %p265 = scmp.lt.s32.totalorder %s22, 3
        %s266 = scalar_select %p265, %s22, 3
        %s267 = smul.addr %s266, 4
        %s268 = smul.addr %s264, 16
        %s269 = sadd.s32 %s267, %s268
        %s270 = smul.addr %s269, 4
        %s271 = scalar_lea.vmem %s4, %s270
        %s272 = smul.u32 %s21, 5
        %s273 = sadd.s32 %s272, %s22
        %p274 = scmp.lt.s32.totalorder %s273, 9
        %s275 = scalar_select %p274, %s273, 9
        %s276 = smul.addr %s275, 4
        %s277 = scalar_lea.vmem %s2, %s276
        %s278 = smul.u32 %s21, 5
        %s279 = sadd.s32 %s278, %s22
        %s280 = smul.u32 %s21, 5
        %s281 = sadd.s32 %s280, %s22
        %s282 = sadd.s32 %s281, 1
        %p283 = scmp.lt.s32.totalorder %s282, 9
        %s284 = scalar_select %p283, %s282, 9
        %s285 = smul.addr %s284, 4
        %s286 = scalar_lea.vmem %s3, %s285
        %s287 = smul.u32 %s21, 5
        %s288 = sadd.s32 %s287, %s22
        %s289 = sadd.s32 %s288, 1
        %p290 = scmp.lt.s32.totalorder %s21, 1
        %s291 = scalar_select %p290, %s21, 1
        %p292 = scmp.lt.s32.totalorder %s22, 3
        %s293 = scalar_select %p292, %s22, 3
        %s294 = smul.addr %s293, 4
        %s295 = smul.addr %s291, 16
        %s296 = sadd.s32 %s294, %s295
        %s297 = smul.addr %s296, 4
        %s298 = scalar_lea.vmem %s4, %s297
        %v300 = vld [vmem:[%s277] sm:$0xf]
        %v301 = vld [vmem:[#allocation2] sm:$0xf]
        %v302 = vld [vmem:[#allocation2 + $0x4] sm:$0xf]
        %v303 = vld [vmem:[#allocation2 + $0x8] sm:$0xf]
        %v304 = vld [vmem:[#allocation2 + $0xc] sm:$0xf]
        %s305 = scalar_lea.vmem [#allocation2], 16
        %v306 = vld [vmem:[%s305] sm:$0xf]
        %v307 = vld [vmem:[%s305 + $0x4] sm:$0xf]
        %v308 = vld [vmem:[%s305 + $0x8] sm:$0xf]
        %v309 = vld [vmem:[%s305 + $0xc] sm:$0xf]
        %v314 = vunpack.c.l.b16 %v306
        %v315 = vunpack.c.l.b16 %v307
        %v316 = vunpack.c.l.b16 %v308
        %v317 = vunpack.c.l.b16 %v309
        %v318 = vpack.c.b16 %v315, %v314
        %v319 = vpack.c.b16 %v317, %v316
        %v321 = vunpack.c.l.b16 %v300
        %v322 = vpack.c.b16 %v321, %v321
        %323 = vrot.lane.b32.xlu0 %v322, 127
        %v324 = vpop.permute.xlu0 %323
        %vm325 = vcmask 64512
        %v327 = vsel %vm325, %v318, 0
        %v330 = vsel %vm325, %v319, 0
        %vm332 = vcmask 1043456
        %v334 = vsel %vm332, %v324, 0
        %336 = vmatprep.subr.bf16.mxu0 0
        %337 = vmatpush1.bf16.msra.mxu0 %v334
        %338 = vmatprep.subr.bf16.mxu0 0
        %339 = vmatpush1.bf16.msra.mxu0 0
        %340 = vmatprep.subr.bf16.mxu0 0
        %341 = vmatpush1.bf16.msra.mxu0 0
        %342 = vmatprep.subr.bf16.mxu0 0
        %343 = vmatpush1.bf16.msra.mxu0 0
        %344 = vmatprep.subr.bf16.mxu0 0
        %345 = vmatpush1.bf16.msra.mxu0 0
        %346 = vmatprep.subr.bf16.mxu0 0
        %347 = vmatpush1.bf16.msra.mxu0 0
        %348 = vmatprep.subr.bf16.mxu0 0
        %349 = vmatpush1.bf16.msra.mxu0 0
        %350 = vmatprep.subr.bf16.mxu0 0
        %351 = vmatpush1.bf16.msra.mxu0 0
        %352 = vmatprep.subr.bf16.mxu0 0
        %353 = vmatpush1.bf16.msra.mxu0 0
        %354 = vmatprep.subr.bf16.mxu0 0
        %355 = vmatpush1.bf16.msra.mxu0 0
        %356 = vmatprep.subr.bf16.mxu0 0
        %357 = vmatpush1.bf16.msra.mxu0 0
        %358 = vmatprep.subr.bf16.mxu0 0
        %359 = vmatpush1.bf16.msra.mxu0 0
        %360 = vmatprep.subr.bf16.mxu0 0
        %361 = vmatpush1.bf16.msra.mxu0 0
        %362 = vmatprep.subr.bf16.mxu0 0
        %363 = vmatpush1.bf16.msra.mxu0 0
        %364 = vmatprep.subr.bf16.mxu0 0
        %365 = vmatpush1.bf16.msra.mxu0 0
        %366 = vmatprep.subr.bf16.mxu0 0
        %367 = vmatpush1.bf16.msra.mxu0 0
        %368 = vmatprep.mubr.bf16.mxu0 0
        %369 = vmatmul.mubr.bf16.gmra.mrb[0].mxu0 %v327
        %v370 = vpop.f32.mrb[0].mxu0
        %v371 = vadd.f32 0.0, %v370
        %v372 = vpop.f32.mrb[0].mxu0
        %v373 = vpop.f32.mrb[0].mxu0
        %v374 = vadd.f32 0.0, %v373
        %v375 = vpop.f32.mrb[0].mxu0
        %376 = vmatprep.mubr.bf16.mxu0 0
        %377 = vmatmul.mubr.bf16.gmra.mrb[0].mxu0 %v330
        %v378 = vpop.f32.mrb[0].mxu0
        %v379 = vadd.f32 0.0, %v378
        %v380 = vpop.f32.mrb[0].mxu0
        %v381 = vpop.f32.mrb[0].mxu0
        %v382 = vadd.f32 0.0, %v381
        %v383 = vpop.f32.mrb[0].mxu0
        %384 = vdwg.mxu0
        %v389 = vunpack.c.l.b16 %v301
        %v390 = vunpack.c.l.b16 %v302
        %v391 = vunpack.c.l.b16 %v303
        %v392 = vunpack.c.l.b16 %v304
        %v393 = vpack.c.b16 %v390, %v389
        %v394 = vpack.c.b16 %v392, %v391
        %v396 = vsel %vm325, %v393, 0
        %v399 = vsel %vm325, %v394, 0
        %v402 = vsel %vm332, %v300, 0
        %404 = vmatprep.subr.bf16.mxu0 0
        %405 = vmatpush1.bf16.msra.mxu0 %v402
        %406 = vmatprep.subr.bf16.mxu0 0
        %407 = vmatpush1.bf16.msra.mxu0 0
        %408 = vmatprep.subr.bf16.mxu0 0
        %409 = vmatpush1.bf16.msra.mxu0 0
        %410 = vmatprep.subr.bf16.mxu0 0
        %411 = vmatpush1.bf16.msra.mxu0 0
        %412 = vmatprep.subr.bf16.mxu0 0
        %413 = vmatpush1.bf16.msra.mxu0 0
        %414 = vmatprep.subr.bf16.mxu0 0
        %415 = vmatpush1.bf16.msra.mxu0 0
        %416 = vmatprep.subr.bf16.mxu0 0
        %417 = vmatpush1.bf16.msra.mxu0 0
        %418 = vmatprep.subr.bf16.mxu0 0
        %419 = vmatpush1.bf16.msra.mxu0 0
        %420 = vmatprep.subr.bf16.mxu0 0
        %421 = vmatpush1.bf16.msra.mxu0 0
        %422 = vmatprep.subr.bf16.mxu0 0
        %423 = vmatpush1.bf16.msra.mxu0 0
        %424 = vmatprep.subr.bf16.mxu0 0
        %425 = vmatpush1.bf16.msra.mxu0 0
        %426 = vmatprep.subr.bf16.mxu0 0
        %427 = vmatpush1.bf16.msra.mxu0 0
        %428 = vmatprep.subr.bf16.mxu0 0
        %429 = vmatpush1.bf16.msra.mxu0 0
        %430 = vmatprep.subr.bf16.mxu0 0
        %431 = vmatpush1.bf16.msra.mxu0 0
        %432 = vmatprep.subr.bf16.mxu0 0
        %433 = vmatpush1.bf16.msra.mxu0 0
        %434 = vmatprep.subr.bf16.mxu0 0
        %435 = vmatpush1.bf16.msra.mxu0 0
        %436 = vmatprep.mubr.bf16.mxu0 0
        %437 = vmatmul.mubr.bf16.gmra.mrb[0].mxu0 %v396
        %v438 = vpop.f32.mrb[0].mxu0
        %v439 = vadd.f32 %v371, %v438
        %v440 = vpop.f32.mrb[0].mxu0
        %v441 = vpop.f32.mrb[0].mxu0
        %v442 = vadd.f32 %v374, %v441
        %v443 = vpop.f32.mrb[0].mxu0
        %444 = vmatprep.mubr.bf16.mxu0 0
        %445 = vmatmul.mubr.bf16.gmra.mrb[0].mxu0 %v399
        %v446 = vpop.f32.mrb[0].mxu0
        %v447 = vadd.f32 %v379, %v446
        %v448 = vpop.f32.mrb[0].mxu0
        %v449 = vpop.f32.mrb[0].mxu0
        %v450 = vadd.f32 %v382, %v449
        %v451 = vpop.f32.mrb[0].mxu0
        %452 = vdwg.mxu0
        %s453 = scalar_lea.vmem [#allocation2], 32
        %v454 = vld [vmem:[%s453] sm:$0xf]
        %v455 = vld [vmem:[%s453 + $0x4] sm:$0xf]
        %v456 = vld [vmem:[%s453 + $0x8] sm:$0xf]
        %v457 = vld [vmem:[%s453 + $0xc] sm:$0xf]
        %v462 = vunpack.c.l.b16 %v454
        %v463 = vunpack.c.l.b16 %v455
        %v464 = vunpack.c.l.b16 %v456
        %v465 = vunpack.c.l.b16 %v457
        %v466 = vpack.c.b16 %v463, %v462
        %v467 = vpack.c.b16 %v465, %v464
        %468 = vrot.lane.b32.xlu0 %v322, 123
        %v469 = vpop.permute.xlu0 %468
        %v471 = vsel %vm325, %v466, 0
        %v474 = vsel %vm325, %v467, 0
        %v477 = vsel %vm332, %v469, 0
        %479 = vmatprep.subr.bf16.mxu0 0
        %480 = vmatpush1.bf16.msra.mxu0 %v477
        %481 = vmatprep.subr.bf16.mxu0 0
        %482 = vmatpush1.bf16.msra.mxu0 0
        %483 = vmatprep.subr.bf16.mxu0 0
        %484 = vmatpush1.bf16.msra.mxu0 0
        %485 = vmatprep.subr.bf16.mxu0 0
        %486 = vmatpush1.bf16.msra.mxu0 0
        %487 = vmatprep.subr.bf16.mxu0 0
        %488 = vmatpush1.bf16.msra.mxu0 0
        %489 = vmatprep.subr.bf16.mxu0 0
        %490 = vmatpush1.bf16.msra.mxu0 0
        %491 = vmatprep.subr.bf16.mxu0 0
        %492 = vmatpush1.bf16.msra.mxu0 0
        %493 = vmatprep.subr.bf16.mxu0 0
        %494 = vmatpush1.bf16.msra.mxu0 0
        %495 = vmatprep.subr.bf16.mxu0 0
        %496 = vmatpush1.bf16.msra.mxu0 0
        %497 = vmatprep.subr.bf16.mxu0 0
        %498 = vmatpush1.bf16.msra.mxu0 0
        %499 = vmatprep.subr.bf16.mxu0 0
        %500 = vmatpush1.bf16.msra.mxu0 0
        %501 = vmatprep.subr.bf16.mxu0 0
        %502 = vmatpush1.bf16.msra.mxu0 0
        %503 = vmatprep.subr.bf16.mxu0 0
        %504 = vmatpush1.bf16.msra.mxu0 0
        %505 = vmatprep.subr.bf16.mxu0 0
        %506 = vmatpush1.bf16.msra.mxu0 0
        %507 = vmatprep.subr.bf16.mxu0 0
        %508 = vmatpush1.bf16.msra.mxu0 0
        %509 = vmatprep.subr.bf16.mxu0 0
        %510 = vmatpush1.bf16.msra.mxu0 0
        %511 = vmatprep.mubr.bf16.mxu0 0
        %512 = vmatmul.mubr.bf16.gmra.mrb[0].mxu0 %v471
        %v513 = vpop.f32.mrb[0].mxu0
        %v514 = vadd.f32 0.0, %v513
        %v515 = vpop.f32.mrb[0].mxu0
        %v516 = vpop.f32.mrb[0].mxu0
        %v517 = vadd.f32 0.0, %v516
        %v518 = vpop.f32.mrb[0].mxu0
        %519 = vmatprep.mubr.bf16.mxu0 0
        %520 = vmatmul.mubr.bf16.gmra.mrb[0].mxu0 %v474
        %v521 = vpop.f32.mrb[0].mxu0
        %v522 = vadd.f32 0.0, %v521
        %v523 = vpop.f32.mrb[0].mxu0
        %v524 = vpop.f32.mrb[0].mxu0
        %v525 = vadd.f32 0.0, %v524
        %v526 = vpop.f32.mrb[0].mxu0
        %527 = vdwg.mxu0
        %v528 = vadd.f32 %v439, %v514
        %v529 = vadd.f32 %v442, %v517
        %v530 = vadd.f32 %v447, %v522
        %v531 = vadd.f32 %v450, %v525
        %s532 = scalar_lea.vmem [#allocation2], 48
        %v533 = vld [vmem:[%s532] sm:$0xf]
        %v534 = vld [vmem:[%s532 + $0x4] sm:$0xf]
        %v535 = vld [vmem:[%s532 + $0x8] sm:$0xf]
        %v536 = vld [vmem:[%s532 + $0xc] sm:$0xf]
        %v541 = vunpack.c.l.b16 %v533
        %v542 = vunpack.c.l.b16 %v534
        %v543 = vunpack.c.l.b16 %v535
        %v544 = vunpack.c.l.b16 %v536
        %v545 = vpack.c.b16 %v542, %v541
        %v546 = vpack.c.b16 %v544, %v543
        %547 = vrot.lane.b32.xlu0 %v322, 122
        %v548 = vpop.permute.xlu0 %547
        %v550 = vsel %vm325, %v545, 0
        %v553 = vsel %vm325, %v546, 0
        %v556 = vsel %vm332, %v548, 0
        %558 = vmatprep.subr.bf16.mxu0 0
        %559 = vmatpush1.bf16.msra.mxu0 %v556
        %560 = vmatprep.subr.bf16.mxu0 0
        %561 = vmatpush1.bf16.msra.mxu0 0
        %562 = vmatprep.subr.bf16.mxu0 0
        %563 = vmatpush1.bf16.msra.mxu0 0
        %564 = vmatprep.subr.bf16.mxu0 0
        %565 = vmatpush1.bf16.msra.mxu0 0
        %566 = vmatprep.subr.bf16.mxu0 0
        %567 = vmatpush1.bf16.msra.mxu0 0
        %568 = vmatprep.subr.bf16.mxu0 0
        %569 = vmatpush1.bf16.msra.mxu0 0
        %570 = vmatprep.subr.bf16.mxu0 0
        %571 = vmatpush1.bf16.msra.mxu0 0
        %572 = vmatprep.subr.bf16.mxu0 0
        %573 = vmatpush1.bf16.msra.mxu0 0
        %574 = vmatprep.subr.bf16.mxu0 0
        %575 = vmatpush1.bf16.msra.mxu0 0
        %576 = vmatprep.subr.bf16.mxu0 0
        %577 = vmatpush1.bf16.msra.mxu0 0
        %578 = vmatprep.subr.bf16.mxu0 0
        %579 = vmatpush1.bf16.msra.mxu0 0
        %580 = vmatprep.subr.bf16.mxu0 0
        %581 = vmatpush1.bf16.msra.mxu0 0
        %582 = vmatprep.subr.bf16.mxu0 0
        %583 = vmatpush1.bf16.msra.mxu0 0
        %584 = vmatprep.subr.bf16.mxu0 0
        %585 = vmatpush1.bf16.msra.mxu0 0
        %586 = vmatprep.subr.bf16.mxu0 0
        %587 = vmatpush1.bf16.msra.mxu0 0
        %588 = vmatprep.subr.bf16.mxu0 0
        %589 = vmatpush1.bf16.msra.mxu0 0
        %590 = vmatprep.mubr.bf16.mxu0 0
        %591 = vmatmul.mubr.bf16.gmra.mrb[0].mxu0 %v550
        %v592 = vpop.f32.mrb[0].mxu0
        %v593 = vadd.f32 0.0, %v592
        %v594 = vpop.f32.mrb[0].mxu0
        %v595 = vpop.f32.mrb[0].mxu0
        %v596 = vadd.f32 0.0, %v595
        %v597 = vpop.f32.mrb[0].mxu0
        %598 = vmatprep.mubr.bf16.mxu0 0
        %599 = vmatmul.mubr.bf16.gmra.mrb[0].mxu0 %v553
        %v600 = vpop.f32.mrb[0].mxu0
        %v601 = vadd.f32 0.0, %v600
        %v602 = vpop.f32.mrb[0].mxu0
        %v603 = vpop.f32.mrb[0].mxu0
        %v604 = vadd.f32 0.0, %v603
        %v605 = vpop.f32.mrb[0].mxu0
        %606 = vdwg.mxu0
        %v607 = vadd.f32 %v528, %v593
        %v608 = vadd.f32 %v529, %v596
        %v609 = vadd.f32 %v530, %v601
        %v610 = vadd.f32 %v531, %v604
        %v611 = vld [vmem:[%s286] sm:$0xf]
        %s612 = scalar_lea.vmem [#allocation2], 64
        %v613 = vld [vmem:[%s612] sm:$0xf]
        %v614 = vld [vmem:[%s612 + $0x4] sm:$0xf]
        %v615 = vld [vmem:[%s612 + $0x8] sm:$0xf]
        %v616 = vld [vmem:[%s612 + $0xc] sm:$0xf]
        %v621 = vunpack.c.l.b16 %v613
        %v622 = vunpack.c.l.b16 %v614
        %v623 = vunpack.c.l.b16 %v615
        %v624 = vunpack.c.l.b16 %v616
        %v625 = vpack.c.b16 %v622, %v621
        %v626 = vpack.c.b16 %v624, %v623
        %v628 = vsel %vm325, %v625, 0
        %v631 = vsel %vm325, %v626, 0
        %v634 = vsel %vm332, %v611, 0
        %636 = vmatprep.subr.bf16.mxu0 0
        %637 = vmatpush1.bf16.msra.mxu0 %v634
        %638 = vmatprep.subr.bf16.mxu0 0
        %639 = vmatpush1.bf16.msra.mxu0 0
        %640 = vmatprep.subr.bf16.mxu0 0
        %641 = vmatpush1.bf16.msra.mxu0 0
        %642 = vmatprep.subr.bf16.mxu0 0
        %643 = vmatpush1.bf16.msra.mxu0 0
        %644 = vmatprep.subr.bf16.mxu0 0
        %645 = vmatpush1.bf16.msra.mxu0 0
        %646 = vmatprep.subr.bf16.mxu0 0
        %647 = vmatpush1.bf16.msra.mxu0 0
        %648 = vmatprep.subr.bf16.mxu0 0
        %649 = vmatpush1.bf16.msra.mxu0 0
        %650 = vmatprep.subr.bf16.mxu0 0
        %651 = vmatpush1.bf16.msra.mxu0 0
        %652 = vmatprep.subr.bf16.mxu0 0
        %653 = vmatpush1.bf16.msra.mxu0 0
        %654 = vmatprep.subr.bf16.mxu0 0
        %655 = vmatpush1.bf16.msra.mxu0 0
        %656 = vmatprep.subr.bf16.mxu0 0
        %657 = vmatpush1.bf16.msra.mxu0 0
        %658 = vmatprep.subr.bf16.mxu0 0
        %659 = vmatpush1.bf16.msra.mxu0 0
        %660 = vmatprep.subr.bf16.mxu0 0
        %661 = vmatpush1.bf16.msra.mxu0 0
        %662 = vmatprep.subr.bf16.mxu0 0
        %663 = vmatpush1.bf16.msra.mxu0 0
        %664 = vmatprep.subr.bf16.mxu0 0
        %665 = vmatpush1.bf16.msra.mxu0 0
        %666 = vmatprep.subr.bf16.mxu0 0
        %667 = vmatpush1.bf16.msra.mxu0 0
        %668 = vmatprep.mubr.bf16.mxu0 0
        %669 = vmatmul.mubr.bf16.gmra.mrb[0].mxu0 %v628
        %v670 = vpop.f32.mrb[0].mxu0
        %v671 = vadd.f32 0.0, %v670
        %v672 = vpop.f32.mrb[0].mxu0
        %v673 = vpop.f32.mrb[0].mxu0
        %v674 = vadd.f32 0.0, %v673
        %v675 = vpop.f32.mrb[0].mxu0
        %676 = vmatprep.mubr.bf16.mxu0 0
        %677 = vmatmul.mubr.bf16.gmra.mrb[0].mxu0 %v631
        %v678 = vpop.f32.mrb[0].mxu0
        %v679 = vadd.f32 0.0, %v678
        %v680 = vpop.f32.mrb[0].mxu0
        %v681 = vpop.f32.mrb[0].mxu0
        %v682 = vadd.f32 0.0, %v681
        %v683 = vpop.f32.mrb[0].mxu0
        %684 = vdwg.mxu0
        %v685 = vadd.f32 %v607, %v671
        %v686 = vadd.f32 %v608, %v674
        %v687 = vadd.f32 %v609, %v679
        %v688 = vadd.f32 %v610, %v682
        %s689 = scalar_lea.vmem [#allocation2], 80
        %v690 = vld [vmem:[%s689] sm:$0xf]
        %v691 = vld [vmem:[%s689 + $0x4] sm:$0xf]
        %v692 = vld [vmem:[%s689 + $0x8] sm:$0xf]
        %v693 = vld [vmem:[%s689 + $0xc] sm:$0xf]
        %v698 = vunpack.c.l.b16 %v690
        %v699 = vunpack.c.l.b16 %v691
        %v700 = vunpack.c.l.b16 %v692
        %v701 = vunpack.c.l.b16 %v693
        %v702 = vpack.c.b16 %v699, %v698
        %v703 = vpack.c.b16 %v701, %v700
        %v705 = vunpack.c.l.b16 %v611
        %v706 = vpack.c.b16 %v705, %v705
        %707 = vrot.lane.b32.xlu0 %v706, 127
        %v708 = vpop.permute.xlu0 %707
        %v710 = vsel %vm325, %v702, 0
        %v713 = vsel %vm325, %v703, 0
        %v716 = vsel %vm332, %v708, 0
        %718 = vmatprep.subr.bf16.mxu0 0
        %719 = vmatpush1.bf16.msra.mxu0 %v716
        %720 = vmatprep.subr.bf16.mxu0 0
        %721 = vmatpush1.bf16.msra.mxu0 0
        %722 = vmatprep.subr.bf16.mxu0 0
        %723 = vmatpush1.bf16.msra.mxu0 0
        %724 = vmatprep.subr.bf16.mxu0 0
        %725 = vmatpush1.bf16.msra.mxu0 0
        %726 = vmatprep.subr.bf16.mxu0 0
        %727 = vmatpush1.bf16.msra.mxu0 0
        %728 = vmatprep.subr.bf16.mxu0 0
        %729 = vmatpush1.bf16.msra.mxu0 0
        %730 = vmatprep.subr.bf16.mxu0 0
        %731 = vmatpush1.bf16.msra.mxu0 0
        %732 = vmatprep.subr.bf16.mxu0 0
        %733 = vmatpush1.bf16.msra.mxu0 0
        %734 = vmatprep.subr.bf16.mxu0 0
        %735 = vmatpush1.bf16.msra.mxu0 0
        %736 = vmatprep.subr.bf16.mxu0 0
        %737 = vmatpush1.bf16.msra.mxu0 0
        %738 = vmatprep.subr.bf16.mxu0 0
        %739 = vmatpush1.bf16.msra.mxu0 0
        %740 = vmatprep.subr.bf16.mxu0 0
        %741 = vmatpush1.bf16.msra.mxu0 0
        %742 = vmatprep.subr.bf16.mxu0 0
        %743 = vmatpush1.bf16.msra.mxu0 0
        %744 = vmatprep.subr.bf16.mxu0 0
        %745 = vmatpush1.bf16.msra.mxu0 0
        %746 = vmatprep.subr.bf16.mxu0 0
        %747 = vmatpush1.bf16.msra.mxu0 0
        %748 = vmatprep.subr.bf16.mxu0 0
        %749 = vmatpush1.bf16.msra.mxu0 0
        %750 = vmatprep.mubr.bf16.mxu0 0
        %751 = vmatmul.mubr.bf16.gmra.mrb[0].mxu0 %v710
        %v752 = vpop.f32.mrb[0].mxu0
        %v753 = vadd.f32 0.0, %v752
        %v754 = vpop.f32.mrb[0].mxu0
        %v755 = vpop.f32.mrb[0].mxu0
        %v756 = vadd.f32 0.0, %v755
        %v757 = vpop.f32.mrb[0].mxu0
        %758 = vmatprep.mubr.bf16.mxu0 0
        %759 = vmatmul.mubr.bf16.gmra.mrb[0].mxu0 %v713
        %v760 = vpop.f32.mrb[0].mxu0
        %v761 = vadd.f32 0.0, %v760
        %v762 = vpop.f32.mrb[0].mxu0
        %v763 = vpop.f32.mrb[0].mxu0
        %v764 = vadd.f32 0.0, %v763
        %v765 = vpop.f32.mrb[0].mxu0
        %766 = vdwg.mxu0
        %v767 = vadd.f32 %v685, %v753
        %v768 = vadd.f32 %v686, %v756
        %v769 = vadd.f32 %v687, %v761
        %v770 = vadd.f32 %v688, %v764
        %s771 = scalar_lea.vmem [#allocation2], 96
        %v772 = vld [vmem:[%s771] sm:$0xf]
        %v773 = vld [vmem:[%s771 + $0x4] sm:$0xf]
        %v774 = vld [vmem:[%s771 + $0x8] sm:$0xf]
        %v775 = vld [vmem:[%s771 + $0xc] sm:$0xf]
        %v780 = vunpack.c.l.b16 %v772
        %v781 = vunpack.c.l.b16 %v773
        %v782 = vunpack.c.l.b16 %v774
        %v783 = vunpack.c.l.b16 %v775
        %v784 = vpack.c.b16 %v781, %v780
        %v785 = vpack.c.b16 %v783, %v782
        %786 = vrot.lane.b32.xlu0 %v706, 123
        %v787 = vpop.permute.xlu0 %786
        %v789 = vsel %vm325, %v784, 0
        %v792 = vsel %vm325, %v785, 0
        %v795 = vsel %vm332, %v787, 0
        %797 = vmatprep.subr.bf16.mxu0 0
        %798 = vmatpush1.bf16.msra.mxu0 %v795
        %799 = vmatprep.subr.bf16.mxu0 0
        %800 = vmatpush1.bf16.msra.mxu0 0
        %801 = vmatprep.subr.bf16.mxu0 0
        %802 = vmatpush1.bf16.msra.mxu0 0
        %803 = vmatprep.subr.bf16.mxu0 0
        %804 = vmatpush1.bf16.msra.mxu0 0
        %805 = vmatprep.subr.bf16.mxu0 0
        %806 = vmatpush1.bf16.msra.mxu0 0
        %807 = vmatprep.subr.bf16.mxu0 0
        %808 = vmatpush1.bf16.msra.mxu0 0
        %809 = vmatprep.subr.bf16.mxu0 0
        %810 = vmatpush1.bf16.msra.mxu0 0
        %811 = vmatprep.subr.bf16.mxu0 0
        %812 = vmatpush1.bf16.msra.mxu0 0
        %813 = vmatprep.subr.bf16.mxu0 0
        %814 = vmatpush1.bf16.msra.mxu0 0
        %815 = vmatprep.subr.bf16.mxu0 0
        %816 = vmatpush1.bf16.msra.mxu0 0
        %817 = vmatprep.subr.bf16.mxu0 0
        %818 = vmatpush1.bf16.msra.mxu0 0
        %819 = vmatprep.subr.bf16.mxu0 0
        %820 = vmatpush1.bf16.msra.mxu0 0
        %821 = vmatprep.subr.bf16.mxu0 0
        %822 = vmatpush1.bf16.msra.mxu0 0
        %823 = vmatprep.subr.bf16.mxu0 0
        %824 = vmatpush1.bf16.msra.mxu0 0
        %825 = vmatprep.subr.bf16.mxu0 0
        %826 = vmatpush1.bf16.msra.mxu0 0
        %827 = vmatprep.subr.bf16.mxu0 0
        %828 = vmatpush1.bf16.msra.mxu0 0
        %829 = vmatprep.mubr.bf16.mxu0 0
        %830 = vmatmul.mubr.bf16.gmra.mrb[0].mxu0 %v789
        %v831 = vpop.f32.mrb[0].mxu0
        %v832 = vadd.f32 0.0, %v831
        %v833 = vpop.f32.mrb[0].mxu0
        %v834 = vpop.f32.mrb[0].mxu0
        %v835 = vadd.f32 0.0, %v834
        %v836 = vpop.f32.mrb[0].mxu0
        %837 = vmatprep.mubr.bf16.mxu0 0
        %838 = vmatmul.mubr.bf16.gmra.mrb[0].mxu0 %v792
        %v839 = vpop.f32.mrb[0].mxu0
        %v840 = vadd.f32 0.0, %v839
        %v841 = vpop.f32.mrb[0].mxu0
        %v842 = vpop.f32.mrb[0].mxu0
        %v843 = vadd.f32 0.0, %v842
        %v844 = vpop.f32.mrb[0].mxu0
        %845 = vdwg.mxu0
        %v846 = vadd.f32 %v767, %v832
        %v847 = vadd.f32 %v768, %v835
        %v848 = vadd.f32 %v769, %v840
        %v849 = vadd.f32 %v770, %v843
        %s850 = scalar_lea.vmem [#allocation2], 112
        %v851 = vld [vmem:[%s850] sm:$0xf]
        %v852 = vld [vmem:[%s850 + $0x4] sm:$0xf]
        %v853 = vld [vmem:[%s850 + $0x8] sm:$0xf]
        %v854 = vld [vmem:[%s850 + $0xc] sm:$0xf]
        %v859 = vunpack.c.l.b16 %v851
        %v860 = vunpack.c.l.b16 %v852
        %v861 = vunpack.c.l.b16 %v853
        %v862 = vunpack.c.l.b16 %v854
        %v863 = vpack.c.b16 %v860, %v859
        %v864 = vpack.c.b16 %v862, %v861
        %865 = vrot.lane.b32.xlu0 %v706, 122
        %v866 = vpop.permute.xlu0 %865
        %v868 = vsel %vm325, %v863, 0
        %v871 = vsel %vm325, %v864, 0
        %v874 = vsel %vm332, %v866, 0
        %876 = vmatprep.subr.bf16.mxu0 0
        %877 = vmatpush1.bf16.msra.mxu0 %v874
        %878 = vmatprep.subr.bf16.mxu0 0
        %879 = vmatpush1.bf16.msra.mxu0 0
        %880 = vmatprep.subr.bf16.mxu0 0
        %881 = vmatpush1.bf16.msra.mxu0 0
        %882 = vmatprep.subr.bf16.mxu0 0
        %883 = vmatpush1.bf16.msra.mxu0 0
        %884 = vmatprep.subr.bf16.mxu0 0
        %885 = vmatpush1.bf16.msra.mxu0 0
        %886 = vmatprep.subr.bf16.mxu0 0
        %887 = vmatpush1.bf16.msra.mxu0 0
        %888 = vmatprep.subr.bf16.mxu0 0
        %889 = vmatpush1.bf16.msra.mxu0 0
        %890 = vmatprep.subr.bf16.mxu0 0
        %891 = vmatpush1.bf16.msra.mxu0 0
        %892 = vmatprep.subr.bf16.mxu0 0
        %893 = vmatpush1.bf16.msra.mxu0 0
        %894 = vmatprep.subr.bf16.mxu0 0
        %895 = vmatpush1.bf16.msra.mxu0 0
        %896 = vmatprep.subr.bf16.mxu0 0
        %897 = vmatpush1.bf16.msra.mxu0 0
        %898 = vmatprep.subr.bf16.mxu0 0
        %899 = vmatpush1.bf16.msra.mxu0 0
        %900 = vmatprep.subr.bf16.mxu0 0
        %901 = vmatpush1.bf16.msra.mxu0 0
        %902 = vmatprep.subr.bf16.mxu0 0
        %903 = vmatpush1.bf16.msra.mxu0 0
        %904 = vmatprep.subr.bf16.mxu0 0
        %905 = vmatpush1.bf16.msra.mxu0 0
        %906 = vmatprep.subr.bf16.mxu0 0
        %907 = vmatpush1.bf16.msra.mxu0 0
        %908 = vmatprep.mubr.bf16.mxu0 0
        %909 = vmatmul.mubr.bf16.gmra.mrb[0].mxu0 %v868
        %v910 = vpop.f32.mrb[0].mxu0
        %v911 = vadd.f32 0.0, %v910
        %v912 = vpop.f32.mrb[0].mxu0
        %v913 = vpop.f32.mrb[0].mxu0
        %v914 = vadd.f32 0.0, %v913
        %v915 = vpop.f32.mrb[0].mxu0
        %916 = vmatprep.mubr.bf16.mxu0 0
        %917 = vmatmul.mubr.bf16.gmra.mrb[0].mxu0 %v871
        %v918 = vpop.f32.mrb[0].mxu0
        %v919 = vadd.f32 0.0, %v918
        %v920 = vpop.f32.mrb[0].mxu0
        %v921 = vpop.f32.mrb[0].mxu0
        %v922 = vadd.f32 0.0, %v921
        %v923 = vpop.f32.mrb[0].mxu0
        %924 = vdwg.mxu0
        %v925 = vadd.f32 %v846, %v911
        %v926 = vadd.f32 %v847, %v914
        %v927 = vadd.f32 %v848, %v919
        %v928 = vadd.f32 %v849, %v922
        %v929 = vld [vmem:[#allocation4] sm:$0xff]
        %v930 = vld [vmem:[#allocation4 + $0x8] sm:$0xff]
        %v931 = vld [vmem:[#allocation4 + $0x10] sm:$0xff]
        %v932 = vld [vmem:[#allocation4 + $0x18] sm:$0xff]
        %934 = vset.pattern.permute.xlu0 0
        %935 = vperm.xlu0 %934, %v929
        %v936 = vpop.permute.xlu0 %935
        %939 = vset.pattern.permute.xlu0 0
        %940 = vperm.xlu0 %939, %v930
        %v941 = vpop.permute.xlu0 %940
        %944 = vset.pattern.permute.xlu0 0
        %945 = vperm.xlu0 %944, %v931
        %v946 = vpop.permute.xlu0 %945
        %949 = vset.pattern.permute.xlu0 0
        %950 = vperm.xlu0 %949, %v932
        %v951 = vpop.permute.xlu0 %950
        %v953 = vadd.f32 %v925, %v936
        %v954 = vadd.f32 %v926, %v941
        %v955 = vadd.f32 %v927, %v946
        %v956 = vadd.f32 %v928, %v951
        %v957 = vpack.c.bf16 %v954, %v953
        %v958 = vpack.c.bf16 %v956, %v955
        %v961 = vunpack.c.l.b16 %v957
        %v962 = vunpack.c.h.b16 %v957
        %v963 = vunpack.c.l.b16 %v958
        %v964 = vunpack.c.h.b16 %v958
        %v965 = vpack.c.b16 %v961, %v961
        %v966 = vpack.c.b16 %v962, %v962
        %v967 = vpack.c.b16 %v963, %v963
        %v968 = vpack.c.b16 %v964, %v964
        %vm973 = vcmask 158720
        %974 = vst.msk [vmem:[%s298] sm:$0xf] %vm973, %v965
        %975 = vst.msk [vmem:[%s298 + $0x4] sm:$0xf] %vm973, %v966
        %976 = vst.msk [vmem:[%s298 + $0x8] sm:$0xf] %vm973, %v967
        %977 = vst.msk [vmem:[%s298 + $0xc] sm:$0xf] %vm973, %v968
        %p978 = scmp.lt.s32.totalorder %s21, 1
        %s979 = scalar_select %p978, %s21, 1
        %p980 = scmp.lt.s32.totalorder %s22, 3
        %s981 = scalar_select %p980, %s22, 3
        %s982 = smul.addr %s981, 4
        %s983 = smul.addr %s979, 16
        %s984 = sadd.s32 %s982, %s983
        %s985 = smul.addr %s984, 4
        %s986 = scalar_lea.vmem %s4, %s985
        // Predicated region
        $region45: #{a_call__.4} parent=35 // pred_check
          %p987 = pneg %p153
        $region46: #{a_call__.4} parent=35 // pred_check_branch
          %989 = sbr.rel (%p987) target = $region48
        $region47: #{a_call__.4} parent=35 // pred_region
          _
        $region48: #{a_call__.4} parent=35 // pred_fallthru
          _
      $region36: #{a_call__.4} parent=5 // pred_fallthru
        _
      %p990 = scmp.le.s32.totalorder 2, %s12
      // Predicated region
      $region49: #{a_call__.4} parent=5 // pred_check
        %p991 = pneg %p990
      $region50: #{a_call__.4} parent=5 // pred_check_branch
        %993 = sbr.rel (%p991) target = $region52
      $region51: #{a_call__.4} parent=5 // pred_region
        %s994 = ssub.s32 %s12, 2
        // Predicated region
        $region53: #{a_call__.4} parent=51 // pred_check
          %p995 = pneg %p159
        $region54: #{a_call__.4} parent=51 // pred_check_branch
          %997 = sbr.rel (%p995) target = $region56
        $region55: #{a_call__.4} parent=51 // pred_region
          %p998 = scmp.lt.s32.totalorder %s23, 1
          %s999 = scalar_select %p998, %s23, 1
          %p1000 = scmp.lt.s32.totalorder %s24, 3
          %s1001 = scalar_select %p1000, %s24, 3
          %s1002 = smul.addr %s1001, 4
          %s1003 = smul.addr %s999, 16
          %s1004 = sadd.s32 %s1002, %s1003
          %s1005 = smul.addr %s1004, 4
          %s1006 = scalar_lea.vmem %s4, %s1005
        $region56: #{a_call__.4} parent=51 // pred_fallthru
          _
      $region52: #{a_call__.4} parent=5 // pred_fallthru
        _
    $region6: #{a_call__.4} parent=1 // loop_footer
      %s16 = sadd.s32 1, %s12
    $region7: #{a_call__.4} parent=1 // loop_footer_branch
      %11 = sbr.rel target = $region3
    $region8: #{a_call__.4} parent=1 // loop_exit
      _
    %1007 = vsyncpa [#allocation3], 1
    %s1008 = scalar_lea.sflag [#allocation3], 1
    %1009 = vsyncpa %s1008, 1
    %1010 = vsyncpa [#allocation5], 1

// kernel: a_call__.5
$region0: #{a_call__.5}
  #allocation0 [shape = 'u32[]', space=smem, size = 0x4, offset = 0x4, fixed_abs, tag = 'smem constant byte address 0x4 - core index']
  #allocation1 [shape = 'u32[144,128]{1,0:T(1,128)}', space=vmem, size = 0x12000, scoped, tag = 'internal scratch']
  %s0 = inlined_call_operand.vmem [shape: bf16[2,8,4,64], index: 0, kind: input, shape index: {}]
  %s1 = inlined_call_operand.vmem [shape: bf16[2,8,4,64], index: 1, kind: output, shape index: {}]
  %s2 = sld [smem:[#allocation0]]
  $region37: #{a_call__.5} parent=0
    _
  %s4 = ssub.s32 1, %s2
  %s5 = scalar_select 0, %s4, %s2
  loop: start=0, step=1, limit=4
  $region2: #{a_call__.5} parent=0 // loop_pre_header
    _
  $region3: #{a_call__.5} parent=0 // loop_header
    %s7 = sphi 0, %s11
    %p8 = scmp.ge.s32.totalorder %s7, 4
    %s17 = sphi 0, %s19
    %s20 = sphi 0, %s17
    %s21 = sphi 0, %s20
    %s37 = sphi 0, %s21
    %s43 = sphi 0, %s45
    %s46 = sphi 0, %s43
    %s47 = sphi 0, %s46
    %s63 = sphi 0, %s47
  $region4: #{a_call__.5} parent=0 // loop_header_branch
    %10 = sbr.rel (%p8) target = $region8
  $region5: #{a_call__.5} parent=0 // loop_body
    %s12 = ssub.s32 %s7, 1
    %s13 = ssub.s32 %s7, 2
    %s14 = sadd.s32 %s7, 1
    %s15 = ssub.s32 %s7, %s14
    %p16 = scmp.eq.s32.totalorder %s15, 0
    %s18 = sadd.s32 %s17, 1
    %s19 = scalar_select %p16, %s17, %s18
    %p22 = pneg %p16
    %p23 = scmp.eq.s32.totalorder %s7, 1
    %p24 = por %p22, %p23
    %p25 = scmp.ne.s32.totalorder %s17, %s20
    %p26 = scmp.eq.s32.totalorder %s7, 0
    %p27 = por %p25, %p26
    %p28 = scmp.ne.s32.totalorder %s17, %s20
    %p29 = scmp.eq.s32.totalorder %s12, 1
    %p30 = por %p28, %p29
    %p31 = scmp.ne.s32.totalorder %s20, %s21
    %p32 = scmp.eq.s32.totalorder %s12, 0
    %p33 = por %p31, %p32
    %p34 = scmp.ne.s32.totalorder %s20, %s21
    %p35 = scmp.eq.s32.totalorder %s13, 1
    %p36 = por %p34, %p35
    %p38 = scmp.ne.s32.totalorder %s21, %s37
    %p39 = scmp.eq.s32.totalorder %s13, 0
    %p40 = por %p38, %p39
    %s41 = ssub.s32 %s7, %s14
    %p42 = scmp.eq.s32.totalorder %s41, 0
    %s44 = sadd.s32 %s43, 1
    %s45 = scalar_select %p42, %s43, %s44
    %p48 = pneg %p42
    %p49 = scmp.eq.s32.totalorder %s7, 1
    %p50 = por %p48, %p49
    %p51 = scmp.ne.s32.totalorder %s43, %s46
    %p52 = scmp.eq.s32.totalorder %s7, 0
    %p53 = por %p51, %p52
    %p54 = scmp.ne.s32.totalorder %s43, %s46
    %p55 = scmp.eq.s32.totalorder %s12, 1
    %p56 = por %p54, %p55
    %p57 = scmp.ne.s32.totalorder %s46, %s47
    %p58 = scmp.eq.s32.totalorder %s12, 0
    %p59 = por %p57, %p58
    %p60 = scmp.ne.s32.totalorder %s46, %s47
    %p61 = scmp.eq.s32.totalorder %s13, 1
    %p62 = por %p60, %p61
    %p64 = scmp.ne.s32.totalorder %s47, %s63
    %p65 = scmp.eq.s32.totalorder %s13, 0
    %p66 = por %p64, %p65
    %p67 = scmp.le.s32.totalorder 1, %s7
    %p68 = scmp.lt.s32.totalorder %s7, 3
    %p69 = pnand %p67, %p68
    %p70 = pneg %p69
    // Predicated region
    $region9: #{a_call__.5} parent=5 // pred_check
      _
    $region10: #{a_call__.5} parent=5 // pred_check_branch
      %72 = sbr.rel (%p69) target = $region12
    $region11: #{a_call__.5} parent=5 // pred_region
      %s73 = ssub.s32 %s7, 1
    $region12: #{a_call__.5} parent=5 // pred_fallthru
      _
    %p74 = scmp.lt.s32.totalorder %s7, 2
    // Predicated region
    $region13: #{a_call__.5} parent=5 // pred_check
      %p75 = pneg %p74
    $region14: #{a_call__.5} parent=5 // pred_check_branch
      %77 = sbr.rel (%p75) target = $region16
    $region15: #{a_call__.5} parent=5 // pred_region
      // Predicated region
      $region17: #{a_call__.5} parent=15 // pred_check
        %p78 = pneg %p27
      $region18: #{a_call__.5} parent=15 // pred_check_branch
        %80 = sbr.rel (%p78) target = $region20
      $region19: #{a_call__.5} parent=15 // pred_region
        %p81 = scmp.lt.s32.totalorder %s7, 1
        %s82 = scalar_select %p81, %s7, 1
        %s83 = smul.addr %s82, 8
        %s84 = smul.addr %s83, 2
        %s85 = scalar_lea.vmem %s0, %s84
      $region20: #{a_call__.5} parent=15 // pred_fallthru
        _
    $region16: #{a_call__.5} parent=5 // pred_fallthru
      _
    %p86 = scmp.le.s32.totalorder 1, %s7
    %p87 = scmp.lt.s32.totalorder %s7, 3
    %p88 = pnand %p86, %p87
    %p89 = pneg %p88
    // Predicated region
    $region21: #{a_call__.5} parent=5 // pred_check
      _
    $region22: #{a_call__.5} parent=5 // pred_check_branch
      %91 = sbr.rel (%p88) target = $region24
    $region23: #{a_call__.5} parent=5 // pred_region
      %s92 = ssub.s32 %s7, 1
      %p93 = scmp.lt.s32.totalorder %s12, 1
      %s94 = scalar_select %p93, %s12, 1
      %s95 = smul.addr %s94, 8
      %s96 = smul.addr %s95, 2
      %s97 = scalar_lea.vmem %s0, %s96
      %p98 = pneg %p33
      %p99 = pneg %p30
      %p100 = pneg %p59
      %p101 = pneg %p56
      %p102 = scmp.lt.s32.totalorder %s12, 1
      %s103 = scalar_select %p102, %s12, 1
      %s104 = smul.addr %s103, 8
      %s105 = smul.addr %s104, 2
      %s106 = scalar_lea.vmem %s1, %s105
      %p107 = scmp.lt.s32.totalorder %s12, 1
      %s108 = scalar_select %p107, %s12, 1
      %s109 = smul.addr %s108, 8
      %s110 = smul.addr %s109, 2
      %s111 = scalar_lea.vmem %s0, %s110
      %p112 = scmp.lt.s32.totalorder %s12, 1
      %s113 = scalar_select %p112, %s12, 1
      %s114 = smul.addr %s113, 8
      %s115 = smul.addr %s114, 2
      %s116 = scalar_lea.vmem %s1, %s115
      %v117 = vld [vmem:[%s111] sm:$0x3]
      %v118 = vld [vmem:[%s111 + $0x2] sm:$0x3]
      %v119 = vld [vmem:[%s111 + $0x4] sm:$0x3]
      %v120 = vld [vmem:[%s111 + $0x6] sm:$0x3]
      %v121 = vld [vmem:[%s111 + $0x8] sm:$0x3]
      %v122 = vld [vmem:[%s111 + $0xa] sm:$0x3]
      %v123 = vld [vmem:[%s111 + $0xc] sm:$0x3]
      %v124 = vld [vmem:[%s111 + $0xe] sm:$0x3]
      %v125 = vunpack.c.l.bf16 %v117
      %v126 = vunpack.c.l.bf16 %v118
      %v127 = vunpack.c.l.bf16 %v119
      %v128 = vunpack.c.l.bf16 %v120
      %v129 = vunpack.c.l.bf16 %v121
      %v130 = vunpack.c.l.bf16 %v122
      %v131 = vunpack.c.l.bf16 %v123
      %v132 = vunpack.c.l.bf16 %v124
      %vm133 = vcmask 519168
      %v134 = vsel %vm133, %v125, 0.0
      %135 = vadd.xlane.f32.xlu0 %v134
      %v136 = vpop.xlane.xlu0 %135
      %v137 = vsel %vm133, %v126, 0.0
      %138 = vadd.xlane.f32.xlu0 %v137
      %v139 = vpop.xlane.xlu0 %138
      %v140 = vsel %vm133, %v127, 0.0
      %141 = vadd.xlane.f32.xlu0 %v140
      %v142 = vpop.xlane.xlu0 %141
      %v143 = vsel %vm133, %v128, 0.0
      %144 = vadd.xlane.f32.xlu0 %v143
      %v145 = vpop.xlane.xlu0 %144
      %v146 = vsel %vm133, %v129, 0.0
      %147 = vadd.xlane.f32.xlu0 %v146
      %v148 = vpop.xlane.xlu0 %147
      %v149 = vsel %vm133, %v130, 0.0
      %150 = vadd.xlane.f32.xlu0 %v149
      %v151 = vpop.xlane.xlu0 %150
      %v152 = vsel %vm133, %v131, 0.0
      %153 = vadd.xlane.f32.xlu0 %v152
      %v154 = vpop.xlane.xlu0 %153
      %v155 = vsel %vm133, %v132, 0.0
      %156 = vadd.xlane.f32.xlu0 %v155
      %v157 = vpop.xlane.xlu0 %156
      %vm158 = vcmask 1043456
      %v159 = vsel %vm158, %v136, 0.0
      %v160 = vsel %vm158, %v139, 0.0
      %v161 = vadd.f32 %v159, %v160
      %v162 = vsel %vm158, %v142, 0.0
      %v163 = vadd.f32 %v161, %v162
      %v164 = vsel %vm158, %v145, 0.0
      %v165 = vadd.f32 %v163, %v164
      %v166 = vsel %vm158, %v148, 0.0
      %v167 = vadd.f32 %v165, %v166
      %v168 = vsel %vm158, %v151, 0.0
      %v169 = vadd.f32 %v167, %v168
      %v170 = vsel %vm158, %v154, 0.0
      %v171 = vadd.f32 %v169, %v170
      %v172 = vsel %vm158, %v157, 0.0
      %v173 = vadd.f32 %v171, %v172
      %v174 = vmul.f32 %v125, %v125
      %v175 = vmul.f32 %v126, %v126
      %v176 = vmul.f32 %v127, %v127
      %v177 = vmul.f32 %v128, %v128
      %v178 = vmul.f32 %v129, %v129
      %v179 = vmul.f32 %v130, %v130
      %v180 = vmul.f32 %v131, %v131
      %v181 = vmul.f32 %v132, %v132
      %v182 = vsel %vm133, %v174, 0.0
      %183 = vadd.xlane.f32.xlu0 %v182
      %v184 = vpop.xlane.xlu0 %183
      %v185 = vsel %vm133, %v175, 0.0
      %186 = vadd.xlane.f32.xlu0 %v185
      %v187 = vpop.xlane.xlu0 %186
      %v188 = vsel %vm133, %v176, 0.0
      %189 = vadd.xlane.f32.xlu0 %v188
      %v190 = vpop.xlane.xlu0 %189
      %v191 = vsel %vm133, %v177, 0.0
      %192 = vadd.xlane.f32.xlu0 %v191
      %v193 = vpop.xlane.xlu0 %192
      %v194 = vsel %vm133, %v178, 0.0
      %195 = vadd.xlane.f32.xlu0 %v194
      %v196 = vpop.xlane.xlu0 %195
      %v197 = vsel %vm133, %v179, 0.0
      %198 = vadd.xlane.f32.xlu0 %v197
      %v199 = vpop.xlane.xlu0 %198
      %v200 = vsel %vm133, %v180, 0.0
      %201 = vadd.xlane.f32.xlu0 %v200
      %v202 = vpop.xlane.xlu0 %201
      %v203 = vsel %vm133, %v181, 0.0
      %204 = vadd.xlane.f32.xlu0 %v203
      %v205 = vpop.xlane.xlu0 %204
      %v206 = vsel %vm158, %v184, 0.0
      %v207 = vsel %vm158, %v187, 0.0
      %v208 = vadd.f32 %v206, %v207
      %v209 = vsel %vm158, %v190, 0.0
      %v210 = vadd.f32 %v208, %v209
      %v211 = vsel %vm158, %v193, 0.0
      %v212 = vadd.f32 %v210, %v211
      %v213 = vsel %vm158, %v196, 0.0
      %v214 = vadd.f32 %v212, %v213
      %v215 = vsel %vm158, %v199, 0.0
      %v216 = vadd.f32 %v214, %v215
      %v217 = vsel %vm158, %v202, 0.0
      %v218 = vadd.f32 %v216, %v217
      %v219 = vsel %vm158, %v205, 0.0
      %v220 = vadd.f32 %v218, %v219
      %v221 = vmul.f32 %v173, 0.001953125
      %v222 = vmul.f32 %v220, 0.001953125
      %v223 = vmul.f32 %v221, %v221
      %v224 = vsub.f32 %v222, %v223
      %v225 = vsub.f32 %v125, %v221
      %v226 = vsub.f32 %v126, %v221
      %v227 = vsub.f32 %v127, %v221
      %v228 = vsub.f32 %v128, %v221
      %v229 = vsub.f32 %v129, %v221
      %v230 = vsub.f32 %v130, %v221
      %v231 = vsub.f32 %v131, %v221
      %v232 = vsub.f32 %v132, %v221
      %v233 = vadd.f32 %v224, 1e-05
      %v234 = vrsqrt.pop %v233
      %v235 = vmul.f32 %v225, %v234
      %v236 = vmul.f32 %v226, %v234
      %v237 = vmul.f32 %v227, %v234
      %v238 = vmul.f32 %v228, %v234
      %v239 = vmul.f32 %v229, %v234
      %v240 = vmul.f32 %v230, %v234
      %v241 = vmul.f32 %v231, %v234
      %v242 = vmul.f32 %v232, %v234
      %vm243 = vcmp.ge.f32.partialorder %v235, 0.0
      %vm244 = vcmp.ge.f32.partialorder %v236, 0.0
      %vm245 = vcmp.ge.f32.partialorder %v237, 0.0
      %vm246 = vcmp.ge.f32.partialorder %v238, 0.0
      %vm247 = vcmp.ge.f32.partialorder %v239, 0.0
      %vm248 = vcmp.ge.f32.partialorder %v240, 0.0
      %vm249 = vcmp.ge.f32.partialorder %v241, 0.0
      %vm250 = vcmp.ge.f32.partialorder %v242, 0.0
      %v251 = vmul.f32 %v235, 0.25
      %v252 = vmul.f32 %v236, 0.25
      %v253 = vmul.f32 %v237, 0.25
      %v254 = vmul.f32 %v238, 0.25
      %v255 = vmul.f32 %v239, 0.25
      %v256 = vmul.f32 %v240, 0.25
      %v257 = vmul.f32 %v241, 0.25
      %v258 = vmul.f32 %v242, 0.25
      %v259 = vsel %vm243, %v235, %v251
      %v260 = vsel %vm244, %v236, %v252
      %v261 = vsel %vm245, %v237, %v253
      %v262 = vsel %vm246, %v238, %v254
      %v263 = vsel %vm247, %v239, %v255
      %v264 = vsel %vm248, %v240, %v256
      %v265 = vsel %vm249, %v241, %v257
      %v266 = vsel %vm250, %v242, %v258
      %v267 = vpack.c.bf16 %v259, %v259
      %v268 = vpack.c.bf16 %v260, %v260
      %v269 = vpack.c.bf16 %v261, %v261
      %v270 = vpack.c.bf16 %v262, %v262
      %v271 = vpack.c.bf16 %v263, %v263
      %v272 = vpack.c.bf16 %v264, %v264
      %v273 = vpack.c.bf16 %v265, %v265
      %v274 = vpack.c.bf16 %v266, %v266
      %vm275 = vcmask 517120
      %276 = vst.msk [vmem:[%s116] sm:$0x3] %vm275, %v267
      %277 = vst.msk [vmem:[%s116 + $0x2] sm:$0x3] %vm275, %v268
      %278 = vst.msk [vmem:[%s116 + $0x4] sm:$0x3] %vm275, %v269
      %279 = vst.msk [vmem:[%s116 + $0x6] sm:$0x3] %vm275, %v270
      %280 = vst.msk [vmem:[%s116 + $0x8] sm:$0x3] %vm275, %v271
      %281 = vst.msk [vmem:[%s116 + $0xa] sm:$0x3] %vm275, %v272
      %282 = vst.msk [vmem:[%s116 + $0xc] sm:$0x3] %vm275, %v273
      %283 = vst.msk [vmem:[%s116 + $0xe] sm:$0x3] %vm275, %v274
      %p284 = scmp.lt.s32.totalorder %s12, 1
      %s285 = scalar_select %p284, %s12, 1
      %s286 = smul.addr %s285, 8
      %s287 = smul.addr %s286, 2
      %s288 = scalar_lea.vmem %s1, %s287
      // Predicated region
      $region25: #{a_call__.5} parent=23 // pred_check
        %p289 = pneg %p56
      $region26: #{a_call__.5} parent=23 // pred_check_branch
        %291 = sbr.rel (%p289) target = $region28
      $region27: #{a_call__.5} parent=23 // pred_region
        _
      $region28: #{a_call__.5} parent=23 // pred_fallthru
        _
    $region24: #{a_call__.5} parent=5 // pred_fallthru
      _
    %p292 = scmp.le.s32.totalorder 2, %s7
    // Predicated region
    $region29: #{a_call__.5} parent=5 // pred_check
      %p293 = pneg %p292
    $region30: #{a_call__.5} parent=5 // pred_check_branch
      %295 = sbr.rel (%p293) target = $region32
    $region31: #{a_call__.5} parent=5 // pred_region
      %s296 = ssub.s32 %s7, 2
      // Predicated region
      $region33: #{a_call__.5} parent=31 // pred_check
        %p297 = pneg %p62
      $region34: #{a_call__.5} parent=31 // pred_check_branch
        %299 = sbr.rel (%p297) target = $region36
      $region35: #{a_call__.5} parent=31 // pred_region
        %p300 = scmp.lt.s32.totalorder %s13, 1
        %s301 = scalar_select %p300, %s13, 1
        %s302 = smul.addr %s301, 8
        %s303 = smul.addr %s302, 2
        %s304 = scalar_lea.vmem %s1, %s303
      $region36: #{a_call__.5} parent=31 // pred_fallthru
        _
    $region32: #{a_call__.5} parent=5 // pred_fallthru
      _
  $region6: #{a_call__.5} parent=0 // loop_footer
    %s11 = sadd.s32 1, %s7
  $region7: #{a_call__.5} parent=0 // loop_footer_branch
    %6 = sbr.rel target = $region3
  $region8: #{a_call__.5} parent=0 // loop_exit
    _

// kernel: a_call__.6
$region0: #{a_call__.6}
  #allocation0 [shape = 'u32[]', space=smem, size = 0x4, offset = 0x4, fixed_abs, tag = 'smem constant byte address 0x4 - core index']
  #allocation1 [shape = 'u32[144,128]{1,0:T(1,128)}', space=vmem, size = 0x12000, scoped, tag = 'internal scratch']
  %s0 = inlined_call_operand.vmem [shape: bf16[8,16,4], index: 0, kind: input, shape index: {}]
  %s1 = inlined_call_operand.vmem [shape: f32[16,1], index: 1, kind: input, shape index: {}]
  %s2 = inlined_call_operand.vmem [shape: bf16[18,4,90], index: 2, kind: input, shape index: {}, may-alias: {2,3}]
  %s3 = inlined_call_operand.vmem [shape: bf16[18,4,90], index: 3, kind: input, shape index: {}, may-alias: {2,3}]
  %s4 = inlined_call_operand.vmem [shape: bf16[2,8,16,72], index: 4, kind: output, shape index: {}]
  %s5 = sld [smem:[#allocation0]]
  $region49: #{a_call__.6} parent=0
    _
  %s7 = ssub.s32 1, %s5
  %s8 = scalar_select 0, %s7, %s5
  loop: start=0, step=1, limit=18
  $region2: #{a_call__.6} parent=0 // loop_pre_header
    _
  $region3: #{a_call__.6} parent=0 // loop_header
    %s10 = sphi 0, %s14
    %p11 = scmp.ge.s32.totalorder %s10, 18
    %s17 = sphi 0, %s29
    %s18 = sphi 0, %s25
    %s19 = sphi 0, %s17
    %s20 = sphi 0, %s18
    %s21 = sphi 0, %s19
    %s22 = sphi 0, %s20
    %s30 = sphi 0, %s30
    %s32 = sphi 0, %s30
    %s33 = sphi 0, %s32
    %s47 = sphi 0, %s33
    %s51 = sphi 0, %s51
    %s53 = sphi 0, %s51
    %s54 = sphi 0, %s53
    %s68 = sphi 0, %s54
    %s78 = sphi 0, %s80
    %s81 = sphi 0, %s78
    %s82 = sphi 0, %s81
    %s98 = sphi 0, %s82
    %s110 = sphi 0, %s112
    %s113 = sphi 0, %s110
    %s114 = sphi 0, %s113
    %s130 = sphi 0, %s114
    %s138 = sphi 0, %s140
    %s141 = sphi 0, %s138
    %s142 = sphi 0, %s141
    %s158 = sphi 0, %s142
  $region4: #{a_call__.6} parent=0 // loop_header_branch
    %13 = sbr.rel (%p11) target = $region8
  $region5: #{a_call__.6} parent=0 // loop_body
    %s15 = ssub.s32 %s10, 1
    %s16 = ssub.s32 %s10, 2
    %s23 = sadd.s32 1, %s18
    %p24 = scmp.ge.s32.totalorder %s23, 8
    %s25 = scalar_select %p24, 0, %s23
    %s26 = sadd.s32 1, %s17
    %s27 = scalar_select %p24, %s26, %s17
    %p28 = scmp.ge.s32.totalorder %s27, 2
    %s29 = scalar_select %p28, 0, %s27
    %s31 = sadd.s32 %s30, 1
    %p34 = scmp.eq.s32.totalorder %s10, 15
    %p35 = scmp.ne.s32.totalorder %s30, %s32
    %p36 = scmp.eq.s32.totalorder %s10, 0
    %p37 = por %p35, %p36
    %p38 = scmp.ne.s32.totalorder %s30, %s32
    %p39 = scmp.eq.s32.totalorder %s15, 15
    %p40 = por %p38, %p39
    %p41 = scmp.ne.s32.totalorder %s32, %s33
    %p42 = scmp.eq.s32.totalorder %s15, 0
    %p43 = por %p41, %p42
    %p44 = scmp.ne.s32.totalorder %s32, %s33
    %p45 = scmp.eq.s32.totalorder %s16, 15
    %p46 = por %p44, %p45
    %p48 = scmp.ne.s32.totalorder %s33, %s47
    %p49 = scmp.eq.s32.totalorder %s16, 0
    %p50 = por %p48, %p49
    %s52 = sadd.s32 %s51, 1
    %p55 = scmp.eq.s32.totalorder %s10, 15
    %p56 = scmp.ne.s32.totalorder %s51, %s53
    %p57 = scmp.eq.s32.totalorder %s10, 0
    %p58 = por %p56, %p57
    %p59 = scmp.ne.s32.totalorder %s51, %s53
    %p60 = scmp.eq.s32.totalorder %s15, 15
    %p61 = por %p59, %p60
    %p62 = scmp.ne.s32.totalorder %s53, %s54
    %p63 = scmp.eq.s32.totalorder %s15, 0
    %p64 = por %p62, %p63
    %p65 = scmp.ne.s32.totalorder %s53, %s54
    %p66 = scmp.eq.s32.totalorder %s16, 15
    %p67 = por %p65, %p66
    %p69 = scmp.ne.s32.totalorder %s54, %s68
    %p70 = scmp.eq.s32.totalorder %s16, 0
    %p71 = por %p69, %p70
    %s72 = smul.u32 %s17, 9
    %s73 = sadd.s32 %s72, %s18
    %s74 = smul.u32 %s29, 9
    %s75 = sadd.s32 %s74, %s25
    %s76 = ssub.s32 %s73, %s75
    %p77 = scmp.eq.s32.totalorder %s76, 0
    %s79 = sadd.s32 %s78, 1
    %s80 = scalar_select %p77, %s78, %s79
    %p83 = pneg %p77
    %p84 = scmp.eq.s32.totalorder %s10, 15
    %p85 = por %p83, %p84
    %p86 = scmp.ne.s32.totalorder %s78, %s81
    %p87 = scmp.eq.s32.totalorder %s10, 0
    %p88 = por %p86, %p87
    %p89 = scmp.ne.s32.totalorder %s78, %s81
    %p90 = scmp.eq.s32.totalorder %s15, 15
    %p91 = por %p89, %p90
    %p92 = scmp.ne.s32.totalorder %s81, %s82
    %p93 = scmp.eq.s32.totalorder %s15, 0
    %p94 = por %p92, %p93
    %p95 = scmp.ne.s32.totalorder %s81, %s82
    %p96 = scmp.eq.s32.totalorder %s16, 15
    %p97 = por %p95, %p96
    %p99 = scmp.ne.s32.totalorder %s82, %s98
    %p100 = scmp.eq.s32.totalorder %s16, 0
    %p101 = por %p99, %p100
    %s102 = smul.u32 %s17, 9
    %s103 = sadd.s32 %s102, %s18
    %s104 = sadd.s32 %s103, 1
    %s105 = smul.u32 %s29, 9
    %s106 = sadd.s32 %s105, %s25
    %s107 = sadd.s32 %s106, 1
    %s108 = ssub.s32 %s104, %s107
    %p109 = scmp.eq.s32.totalorder %s108, 0
    %s111 = sadd.s32 %s110, 1
    %s112 = scalar_select %p109, %s110, %s111
    %p115 = pneg %p109
    %p116 = scmp.eq.s32.totalorder %s10, 15
    %p117 = por %p115, %p116
    %p118 = scmp.ne.s32.totalorder %s110, %s113
    %p119 = scmp.eq.s32.totalorder %s10, 0
    %p120 = por %p118, %p119
    %p121 = scmp.ne.s32.totalorder %s110, %s113
    %p122 = scmp.eq.s32.totalorder %s15, 15
    %p123 = por %p121, %p122
    %p124 = scmp.ne.s32.totalorder %s113, %s114
    %p125 = scmp.eq.s32.totalorder %s15, 0
    %p126 = por %p124, %p125
    %p127 = scmp.ne.s32.totalorder %s113, %s114
    %p128 = scmp.eq.s32.totalorder %s16, 15
    %p129 = por %p127, %p128
    %p131 = scmp.ne.s32.totalorder %s114, %s130
    %p132 = scmp.eq.s32.totalorder %s16, 0
    %p133 = por %p131, %p132
    %s134 = ssub.s32 %s17, %s29
    %s135 = ssub.s32 %s18, %s25
    %s136 = sor.u32 %s134, %s135
    %p137 = scmp.eq.s32.totalorder %s136, 0
    %s139 = sadd.s32 %s138, 1
    %s140 = scalar_select %p137, %s138, %s139
    %p143 = pneg %p137
    %p144 = scmp.eq.s32.totalorder %s10, 15
    %p145 = por %p143, %p144
    %p146 = scmp.ne.s32.totalorder %s138, %s141
    %p147 = scmp.eq.s32.totalorder %s10, 0
    %p148 = por %p146, %p147
    %p149 = scmp.ne.s32.totalorder %s138, %s141
    %p150 = scmp.eq.s32.totalorder %s15, 15
    %p151 = por %p149, %p150
    %p152 = scmp.ne.s32.totalorder %s141, %s142
    %p153 = scmp.eq.s32.totalorder %s15, 0
    %p154 = por %p152, %p153
    %p155 = scmp.ne.s32.totalorder %s141, %s142
    %p156 = scmp.eq.s32.totalorder %s16, 15
    %p157 = por %p155, %p156
    %p159 = scmp.ne.s32.totalorder %s142, %s158
    %p160 = scmp.eq.s32.totalorder %s16, 0
    %p161 = por %p159, %p160
    %p162 = scmp.le.s32.totalorder 1, %s10
    %p163 = scmp.lt.s32.totalorder %s10, 17
    %p164 = pnand %p162, %p163
    %p165 = pneg %p164
    // Predicated region
    $region9: #{a_call__.6} parent=5 // pred_check
      _
    $region10: #{a_call__.6} parent=5 // pred_check_branch
      %167 = sbr.rel (%p164) target = $region12
    $region11: #{a_call__.6} parent=5 // pred_region
      %s168 = ssub.s32 %s10, 1
      // Predicated region
      $region13: #{a_call__.6} parent=11 // pred_check
        %p169 = pneg %p43
      $region14: #{a_call__.6} parent=11 // pred_check_branch
        %171 = sbr.rel (%p169) target = $region16
      $region15: #{a_call__.6} parent=11 // pred_region
        _
      $region16: #{a_call__.6} parent=11 // pred_fallthru
        _
      // Predicated region
      $region17: #{a_call__.6} parent=11 // pred_check
        %p172 = pneg %p64
      $region18: #{a_call__.6} parent=11 // pred_check_branch
        %174 = sbr.rel (%p172) target = $region20
      $region19: #{a_call__.6} parent=11 // pred_region
        _
      $region20: #{a_call__.6} parent=11 // pred_fallthru
        _
    $region12: #{a_call__.6} parent=5 // pred_fallthru
      _
    %p175 = scmp.lt.s32.totalorder %s10, 16
    // Predicated region
    $region21: #{a_call__.6} parent=5 // pred_check
      %p176 = pneg %p175
    $region22: #{a_call__.6} parent=5 // pred_check_branch
      %178 = sbr.rel (%p176) target = $region24
    $region23: #{a_call__.6} parent=5 // pred_region
      // Predicated region
      $region25: #{a_call__.6} parent=23 // pred_check
        %p179 = pneg %p88
      $region26: #{a_call__.6} parent=23 // pred_check_branch
        %181 = sbr.rel (%p179) target = $region28
      $region27: #{a_call__.6} parent=23 // pred_region
        %s182 = smul.u32 %s17, 9
        %s183 = sadd.s32 %s182, %s18
        %p184 = scmp.lt.s32.totalorder %s183, 17
        %s185 = scalar_select %p184, %s183, 17
        %s186 = smul.addr %s185, 2
        %s187 = scalar_lea.vmem %s2, %s186
        %s188 = smul.u32 %s17, 9
        %s189 = sadd.s32 %s188, %s18
      $region28: #{a_call__.6} parent=23 // pred_fallthru
        _
      // Predicated region
      $region29: #{a_call__.6} parent=23 // pred_check
        %p190 = pneg %p120
      $region30: #{a_call__.6} parent=23 // pred_check_branch
        %192 = sbr.rel (%p190) target = $region32
      $region31: #{a_call__.6} parent=23 // pred_region
        %s193 = smul.u32 %s17, 9
        %s194 = sadd.s32 %s193, %s18
        %s195 = sadd.s32 %s194, 1
        %p196 = scmp.lt.s32.totalorder %s195, 17
        %s197 = scalar_select %p196, %s195, 17
        %s198 = smul.addr %s197, 2
        %s199 = scalar_lea.vmem %s3, %s198
        %s200 = smul.u32 %s17, 9
        %s201 = sadd.s32 %s200, %s18
        %s202 = sadd.s32 %s201, 1
      $region32: #{a_call__.6} parent=23 // pred_fallthru
        _
    $region24: #{a_call__.6} parent=5 // pred_fallthru
      _
    %p203 = scmp.le.s32.totalorder 1, %s10
    %p204 = scmp.lt.s32.totalorder %s10, 17
    %p205 = pnand %p203, %p204
    %p206 = pneg %p205
    // Predicated region
    $region33: #{a_call__.6} parent=5 // pred_check
      _
    $region34: #{a_call__.6} parent=5 // pred_check_branch
      %208 = sbr.rel (%p205) target = $region36
    $region35: #{a_call__.6} parent=5 // pred_region
      %s209 = ssub.s32 %s10, 1
      %p210 = pneg %p43
      %p211 = pneg %p40
      %p212 = pneg %p64
      %p213 = pneg %p61
      %s214 = smul.u32 %s19, 9
      %s215 = sadd.s32 %s214, %s20
      %p216 = scmp.lt.s32.totalorder %s215, 17
      %s217 = scalar_select %p216, %s215, 17
      %s218 = smul.addr %s217, 2
      %s219 = scalar_lea.vmem %s2, %s218
      %p220 = pneg %p94
      %p221 = pneg %p91
      %s222 = smul.u32 %s19, 9
      %s223 = sadd.s32 %s222, %s20
      %s224 = sadd.s32 %s223, 1
      %p225 = scmp.lt.s32.totalorder %s224, 17
      %s226 = scalar_select %p225, %s224, 17
      %s227 = smul.addr %s226, 2
      %s228 = scalar_lea.vmem %s3, %s227
      %p229 = pneg %p126
      %p230 = pneg %p123
      %p231 = pneg %p154
      %p232 = pneg %p151
      %p233 = scmp.lt.s32.totalorder %s19, 1
      %s234 = scalar_select %p233, %s19, 1
      %p235 = scmp.lt.s32.totalorder %s20, 7
      %s236 = scalar_select %p235, %s20, 7
      %s237 = smul.addr %s236, 2
      %s238 = smul.addr %s234, 16
      %s239 = sadd.s32 %s237, %s238
      %s240 = smul.addr %s239, 4
      %s241 = scalar_lea.vmem %s4, %s240
      %s242 = smul.u32 %s19, 9
      %s243 = sadd.s32 %s242, %s20
      %p244 = scmp.lt.s32.totalorder %s243, 17
      %s245 = scalar_select %p244, %s243, 17
      %s246 = smul.addr %s245, 2
      %s247 = scalar_lea.vmem %s2, %s246
      %s248 = smul.u32 %s19, 9
      %s249 = sadd.s32 %s248, %s20
      %s250 = smul.u32 %s19, 9
      %s251 = sadd.s32 %s250, %s20
      %s252 = sadd.s32 %s251, 1
      %p253 = scmp.lt.s32.totalorder %s252, 17
      %s254 = scalar_select %p253, %s252, 17
      %s255 = smul.addr %s254, 2
      %s256 = scalar_lea.vmem %s3, %s255
      %s257 = smul.u32 %s19, 9
      %s258 = sadd.s32 %s257, %s20
      %s259 = sadd.s32 %s258, 1
      %p260 = scmp.lt.s32.totalorder %s19, 1
      %s261 = scalar_select %p260, %s19, 1
      %p262 = scmp.lt.s32.totalorder %s20, 7
      %s263 = scalar_select %p262, %s20, 7
      %s264 = smul.addr %s263, 2
      %s265 = smul.addr %s261, 16
      %s266 = sadd.s32 %s264, %s265
      %s267 = smul.addr %s266, 4
      %s268 = scalar_lea.vmem %s4, %s267
      %v270 = vld [vmem:[%s247] sm:$0x3]
      %v271 = vld [vmem:[%s0] sm:$0xf]
      %v272 = vld [vmem:[%s0 + $0x4] sm:$0xf]
      %s273 = scalar_lea.vmem %s0, 8
      %v274 = vld [vmem:[%s273] sm:$0xf]
      %v275 = vld [vmem:[%s273 + $0x4] sm:$0xf]
      %v278 = vunpack.c.l.b16 %v274
      %v279 = vunpack.c.l.b16 %v275
      %v280 = vpack.c.b16 %v279, %v278
      %v283 = vunpack.c.l.s4 1983009808
      %v284 = vunpack.c.0.s8 %v283
      %v285 = vlaneseq
      %v286 = vshrl.u32 %v285, 7
      %v287 = vsub.s32 %v284, %v286
      %v288 = vrot.slane %v270, %v287
      %289 = vrot.lane.b32.xlu0 %v288, 127
      %v290 = vpop.permute.xlu0 %289
      %vm291 = vcmask 31744
      %v293 = vsel %vm291, %v280, 0
      %vm295 = vcmask 1041408
      %v297 = vsel %vm295, %v290, 0
      %299 = vmatprep.subr.bf16.mxu0 0
      %300 = vmatpush1.bf16.msra.mxu0 %v297
      %301 = vmatprep.subr.bf16.mxu0 0
      %302 = vmatpush1.bf16.msra.mxu0 0
      %303 = vmatprep.subr.bf16.mxu0 0
      %304 = vmatpush1.bf16.msra.mxu0 0
      %305 = vmatprep.subr.bf16.mxu0 0
      %306 = vmatpush1.bf16.msra.mxu0 0
      %307 = vmatprep.subr.bf16.mxu0 0
      %308 = vmatpush1.bf16.msra.mxu0 0
      %309 = vmatprep.subr.bf16.mxu0 0
      %310 = vmatpush1.bf16.msra.mxu0 0
      %311 = vmatprep.subr.bf16.mxu0 0
      %312 = vmatpush1.bf16.msra.mxu0 0
      %313 = vmatprep.subr.bf16.mxu0 0
      %314 = vmatpush1.bf16.msra.mxu0 0
      %315 = vmatprep.subr.bf16.mxu0 0
      %316 = vmatpush1.bf16.msra.mxu0 0
      %317 = vmatprep.subr.bf16.mxu0 0
      %318 = vmatpush1.bf16.msra.mxu0 0
      %319 = vmatprep.subr.bf16.mxu0 0
      %320 = vmatpush1.bf16.msra.mxu0 0
      %321 = vmatprep.subr.bf16.mxu0 0
      %322 = vmatpush1.bf16.msra.mxu0 0
      %323 = vmatprep.subr.bf16.mxu0 0
      %324 = vmatpush1.bf16.msra.mxu0 0
      %325 = vmatprep.subr.bf16.mxu0 0
      %326 = vmatpush1.bf16.msra.mxu0 0
      %327 = vmatprep.subr.bf16.mxu0 0
      %328 = vmatpush1.bf16.msra.mxu0 0
      %329 = vmatprep.subr.bf16.mxu0 0
      %330 = vmatpush1.bf16.msra.mxu0 0
      %331 = vmatprep.mubr.bf16.mxu0 0
      %332 = vmatmul.mubr.bf16.gmra.mrb[0].mxu0 %v293
      %v333 = vpop.f32.mrb[0].mxu0
      %v334 = vadd.f32 0.0, %v333
      %v335 = vpop.f32.mrb[0].mxu0
      %v336 = vpop.f32.mrb[0].mxu0
      %v337 = vadd.f32 0.0, %v336
      %v338 = vpop.f32.mrb[0].mxu0
      %339 = vdwg.mxu0
      %v342 = vunpack.c.l.b16 %v271
      %v343 = vunpack.c.l.b16 %v272
      %v344 = vpack.c.b16 %v343, %v342
      %v346 = vsel %vm291, %v344, 0
      %v349 = vsel %vm295, %v270, 0
      %351 = vmatprep.subr.bf16.mxu0 0
      %352 = vmatpush1.bf16.msra.mxu0 %v349
      %353 = vmatprep.subr.bf16.mxu0 0
      %354 = vmatpush1.bf16.msra.mxu0 0
      %355 = vmatprep.subr.bf16.mxu0 0
      %356 = vmatpush1.bf16.msra.mxu0 0
      %357 = vmatprep.subr.bf16.mxu0 0
      %358 = vmatpush1.bf16.msra.mxu0 0
      %359 = vmatprep.subr.bf16.mxu0 0
      %360 = vmatpush1.bf16.msra.mxu0 0
      %361 = vmatprep.subr.bf16.mxu0 0
      %362 = vmatpush1.bf16.msra.mxu0 0
      %363 = vmatprep.subr.bf16.mxu0 0
      %364 = vmatpush1.bf16.msra.mxu0 0
      %365 = vmatprep.subr.bf16.mxu0 0
      %366 = vmatpush1.bf16.msra.mxu0 0
      %367 = vmatprep.subr.bf16.mxu0 0
      %368 = vmatpush1.bf16.msra.mxu0 0
      %369 = vmatprep.subr.bf16.mxu0 0
      %370 = vmatpush1.bf16.msra.mxu0 0
      %371 = vmatprep.subr.bf16.mxu0 0
      %372 = vmatpush1.bf16.msra.mxu0 0
      %373 = vmatprep.subr.bf16.mxu0 0
      %374 = vmatpush1.bf16.msra.mxu0 0
      %375 = vmatprep.subr.bf16.mxu0 0
      %376 = vmatpush1.bf16.msra.mxu0 0
      %377 = vmatprep.subr.bf16.mxu0 0
      %378 = vmatpush1.bf16.msra.mxu0 0
      %379 = vmatprep.subr.bf16.mxu0 0
      %380 = vmatpush1.bf16.msra.mxu0 0
      %381 = vmatprep.subr.bf16.mxu0 0
      %382 = vmatpush1.bf16.msra.mxu0 0
      %383 = vmatprep.mubr.bf16.mxu0 0
      %384 = vmatmul.mubr.bf16.gmra.mrb[0].mxu0 %v346
      %v385 = vpop.f32.mrb[0].mxu0
      %v386 = vadd.f32 %v334, %v385
      %v387 = vpop.f32.mrb[0].mxu0
      %v388 = vpop.f32.mrb[0].mxu0
      %v389 = vadd.f32 %v337, %v388
      %v390 = vpop.f32.mrb[0].mxu0
      %391 = vdwg.mxu0
      %v392 = vld [vmem:[%s247] sm:$0x3]
      %s393 = scalar_lea.vmem %s0, 16
      %v394 = vld [vmem:[%s393] sm:$0xf]
      %v395 = vld [vmem:[%s393 + $0x4] sm:$0xf]
      %v398 = vunpack.c.l.b16 %v394
      %v399 = vunpack.c.l.b16 %v395
      %v400 = vpack.c.b16 %v399, %v398
      %v403 = vunpack.c.l.s4 1983009808
      %v404 = vunpack.c.0.s8 %v403
      %v405 = vlaneseq
      %v406 = vshrl.u32 %v405, 7
      %v407 = vsub.s32 %v404, %v406
      %v408 = vrot.slane %v392, %v407
      %409 = vrot.lane.b32.xlu0 %v408, 119
      %v410 = vpop.permute.xlu0 %409
      %v412 = vsel %vm291, %v400, 0
      %v415 = vsel %vm295, %v410, 0
      %417 = vmatprep.subr.bf16.mxu0 0
      %418 = vmatpush1.bf16.msra.mxu0 %v415
      %419 = vmatprep.subr.bf16.mxu0 0
      %420 = vmatpush1.bf16.msra.mxu0 0
      %421 = vmatprep.subr.bf16.mxu0 0
      %422 = vmatpush1.bf16.msra.mxu0 0
      %423 = vmatprep.subr.bf16.mxu0 0
      %424 = vmatpush1.bf16.msra.mxu0 0
      %425 = vmatprep.subr.bf16.mxu0 0
      %426 = vmatpush1.bf16.msra.mxu0 0
      %427 = vmatprep.subr.bf16.mxu0 0
      %428 = vmatpush1.bf16.msra.mxu0 0
      %429 = vmatprep.subr.bf16.mxu0 0
      %430 = vmatpush1.bf16.msra.mxu0 0
      %431 = vmatprep.subr.bf16.mxu0 0
      %432 = vmatpush1.bf16.msra.mxu0 0
      %433 = vmatprep.subr.bf16.mxu0 0
      %434 = vmatpush1.bf16.msra.mxu0 0
      %435 = vmatprep.subr.bf16.mxu0 0
      %436 = vmatpush1.bf16.msra.mxu0 0
      %437 = vmatprep.subr.bf16.mxu0 0
      %438 = vmatpush1.bf16.msra.mxu0 0
      %439 = vmatprep.subr.bf16.mxu0 0
      %440 = vmatpush1.bf16.msra.mxu0 0
      %441 = vmatprep.subr.bf16.mxu0 0
      %442 = vmatpush1.bf16.msra.mxu0 0
      %443 = vmatprep.subr.bf16.mxu0 0
      %444 = vmatpush1.bf16.msra.mxu0 0
      %445 = vmatprep.subr.bf16.mxu0 0
      %446 = vmatpush1.bf16.msra.mxu0 0
      %447 = vmatprep.subr.bf16.mxu0 0
      %448 = vmatpush1.bf16.msra.mxu0 0
      %449 = vmatprep.mubr.bf16.mxu0 0
      %450 = vmatmul.mubr.bf16.gmra.mrb[0].mxu0 %v412
      %v451 = vpop.f32.mrb[0].mxu0
      %v452 = vadd.f32 0.0, %v451
      %v453 = vpop.f32.mrb[0].mxu0
      %v454 = vpop.f32.mrb[0].mxu0
      %v455 = vadd.f32 0.0, %v454
      %v456 = vpop.f32.mrb[0].mxu0
      %457 = vdwg.mxu0
      %v458 = vadd.f32 %v386, %v452
      %v459 = vadd.f32 %v389, %v455
      %v460 = vld [vmem:[%s247] sm:$0x3]
      %s461 = scalar_lea.vmem %s0, 24
      %v462 = vld [vmem:[%s461] sm:$0xf]
      %v463 = vld [vmem:[%s461 + $0x4] sm:$0xf]
      %v466 = vunpack.c.l.b16 %v462
      %v467 = vunpack.c.l.b16 %v463
      %v468 = vpack.c.b16 %v467, %v466
      %v471 = vunpack.c.l.s4 1983009808
      %v472 = vunpack.c.0.s8 %v471
      %v473 = vlaneseq
      %v474 = vshrl.u32 %v473, 7
      %v475 = vsub.s32 %v472, %v474
      %v476 = vrot.slane %v460, %v475
      %477 = vrot.lane.b32.xlu0 %v476, 118
      %v478 = vpop.permute.xlu0 %477
      %v480 = vsel %vm291, %v468, 0
      %v483 = vsel %vm295, %v478, 0
      %485 = vmatprep.subr.bf16.mxu0 0
      %486 = vmatpush1.bf16.msra.mxu0 %v483
      %487 = vmatprep.subr.bf16.mxu0 0
      %488 = vmatpush1.bf16.msra.mxu0 0
      %489 = vmatprep.subr.bf16.mxu0 0
      %490 = vmatpush1.bf16.msra.mxu0 0
      %491 = vmatprep.subr.bf16.mxu0 0
      %492 = vmatpush1.bf16.msra.mxu0 0
      %493 = vmatprep.subr.bf16.mxu0 0
      %494 = vmatpush1.bf16.msra.mxu0 0
      %495 = vmatprep.subr.bf16.mxu0 0
      %496 = vmatpush1.bf16.msra.mxu0 0
      %497 = vmatprep.subr.bf16.mxu0 0
      %498 = vmatpush1.bf16.msra.mxu0 0
      %499 = vmatprep.subr.bf16.mxu0 0
      %500 = vmatpush1.bf16.msra.mxu0 0
      %501 = vmatprep.subr.bf16.mxu0 0
      %502 = vmatpush1.bf16.msra.mxu0 0
      %503 = vmatprep.subr.bf16.mxu0 0
      %504 = vmatpush1.bf16.msra.mxu0 0
      %505 = vmatprep.subr.bf16.mxu0 0
      %506 = vmatpush1.bf16.msra.mxu0 0
      %507 = vmatprep.subr.bf16.mxu0 0
      %508 = vmatpush1.bf16.msra.mxu0 0
      %509 = vmatprep.subr.bf16.mxu0 0
      %510 = vmatpush1.bf16.msra.mxu0 0
      %511 = vmatprep.subr.bf16.mxu0 0
      %512 = vmatpush1.bf16.msra.mxu0 0
      %513 = vmatprep.subr.bf16.mxu0 0
      %514 = vmatpush1.bf16.msra.mxu0 0
      %515 = vmatprep.subr.bf16.mxu0 0
      %516 = vmatpush1.bf16.msra.mxu0 0
      %517 = vmatprep.mubr.bf16.mxu0 0
      %518 = vmatmul.mubr.bf16.gmra.mrb[0].mxu0 %v480
      %v519 = vpop.f32.mrb[0].mxu0
      %v520 = vadd.f32 0.0, %v519
      %v521 = vpop.f32.mrb[0].mxu0
      %v522 = vpop.f32.mrb[0].mxu0
      %v523 = vadd.f32 0.0, %v522
      %v524 = vpop.f32.mrb[0].mxu0
      %525 = vdwg.mxu0
      %v526 = vadd.f32 %v458, %v520
      %v527 = vadd.f32 %v459, %v523
      %v528 = vld [vmem:[%s256] sm:$0x3]
      %s529 = scalar_lea.vmem %s0, 32
      %v530 = vld [vmem:[%s529] sm:$0xf]
      %v531 = vld [vmem:[%s529 + $0x4] sm:$0xf]
      %v534 = vunpack.c.l.b16 %v530
      %v535 = vunpack.c.l.b16 %v531
      %v536 = vpack.c.b16 %v535, %v534
      %v538 = vsel %vm291, %v536, 0
      %v541 = vsel %vm295, %v528, 0
      %543 = vmatprep.subr.bf16.mxu0 0
      %544 = vmatpush1.bf16.msra.mxu0 %v541
      %545 = vmatprep.subr.bf16.mxu0 0
      %546 = vmatpush1.bf16.msra.mxu0 0
      %547 = vmatprep.subr.bf16.mxu0 0
      %548 = vmatpush1.bf16.msra.mxu0 0
      %549 = vmatprep.subr.bf16.mxu0 0
      %550 = vmatpush1.bf16.msra.mxu0 0
      %551 = vmatprep.subr.bf16.mxu0 0
      %552 = vmatpush1.bf16.msra.mxu0 0
      %553 = vmatprep.subr.bf16.mxu0 0
      %554 = vmatpush1.bf16.msra.mxu0 0
      %555 = vmatprep.subr.bf16.mxu0 0
      %556 = vmatpush1.bf16.msra.mxu0 0
      %557 = vmatprep.subr.bf16.mxu0 0
      %558 = vmatpush1.bf16.msra.mxu0 0
      %559 = vmatprep.subr.bf16.mxu0 0
      %560 = vmatpush1.bf16.msra.mxu0 0
      %561 = vmatprep.subr.bf16.mxu0 0
      %562 = vmatpush1.bf16.msra.mxu0 0
      %563 = vmatprep.subr.bf16.mxu0 0
      %564 = vmatpush1.bf16.msra.mxu0 0
      %565 = vmatprep.subr.bf16.mxu0 0
      %566 = vmatpush1.bf16.msra.mxu0 0
      %567 = vmatprep.subr.bf16.mxu0 0
      %568 = vmatpush1.bf16.msra.mxu0 0
      %569 = vmatprep.subr.bf16.mxu0 0
      %570 = vmatpush1.bf16.msra.mxu0 0
      %571 = vmatprep.subr.bf16.mxu0 0
      %572 = vmatpush1.bf16.msra.mxu0 0
      %573 = vmatprep.subr.bf16.mxu0 0
      %574 = vmatpush1.bf16.msra.mxu0 0
      %575 = vmatprep.mubr.bf16.mxu0 0
      %576 = vmatmul.mubr.bf16.gmra.mrb[0].mxu0 %v538
      %v577 = vpop.f32.mrb[0].mxu0
      %v578 = vadd.f32 0.0, %v577
      %v579 = vpop.f32.mrb[0].mxu0
      %v580 = vpop.f32.mrb[0].mxu0
      %v581 = vadd.f32 0.0, %v580
      %v582 = vpop.f32.mrb[0].mxu0
      %583 = vdwg.mxu0
      %v584 = vadd.f32 %v526, %v578
      %v585 = vadd.f32 %v527, %v581
      %s586 = scalar_lea.vmem %s0, 40
      %v587 = vld [vmem:[%s586] sm:$0xf]
      %v588 = vld [vmem:[%s586 + $0x4] sm:$0xf]
      %v591 = vunpack.c.l.b16 %v587
      %v592 = vunpack.c.l.b16 %v588
      %v593 = vpack.c.b16 %v592, %v591
      %v596 = vunpack.c.l.s4 1983009808
      %v597 = vunpack.c.0.s8 %v596
      %v598 = vlaneseq
      %v599 = vshrl.u32 %v598, 7
      %v600 = vsub.s32 %v597, %v599
      %v601 = vrot.slane %v528, %v600
      %602 = vrot.lane.b32.xlu0 %v601, 127
      %v603 = vpop.permute.xlu0 %602
      %v605 = vsel %vm291, %v593, 0
      %v608 = vsel %vm295, %v603, 0
      %610 = vmatprep.subr.bf16.mxu0 0
      %611 = vmatpush1.bf16.msra.mxu0 %v608
      %612 = vmatprep.subr.bf16.mxu0 0
      %613 = vmatpush1.bf16.msra.mxu0 0
      %614 = vmatprep.subr.bf16.mxu0 0
      %615 = vmatpush1.bf16.msra.mxu0 0
      %616 = vmatprep.subr.bf16.mxu0 0
      %617 = vmatpush1.bf16.msra.mxu0 0
      %618 = vmatprep.subr.bf16.mxu0 0
      %619 = vmatpush1.bf16.msra.mxu0 0
      %620 = vmatprep.subr.bf16.mxu0 0
      %621 = vmatpush1.bf16.msra.mxu0 0
      %622 = vmatprep.subr.bf16.mxu0 0
      %623 = vmatpush1.bf16.msra.mxu0 0
      %624 = vmatprep.subr.bf16.mxu0 0
      %625 = vmatpush1.bf16.msra.mxu0 0
      %626 = vmatprep.subr.bf16.mxu0 0
      %627 = vmatpush1.bf16.msra.mxu0 0
      %628 = vmatprep.subr.bf16.mxu0 0
      %629 = vmatpush1.bf16.msra.mxu0 0
      %630 = vmatprep.subr.bf16.mxu0 0
      %631 = vmatpush1.bf16.msra.mxu0 0
      %632 = vmatprep.subr.bf16.mxu0 0
      %633 = vmatpush1.bf16.msra.mxu0 0
      %634 = vmatprep.subr.bf16.mxu0 0
      %635 = vmatpush1.bf16.msra.mxu0 0
      %636 = vmatprep.subr.bf16.mxu0 0
      %637 = vmatpush1.bf16.msra.mxu0 0
      %638 = vmatprep.subr.bf16.mxu0 0
      %639 = vmatpush1.bf16.msra.mxu0 0
      %640 = vmatprep.subr.bf16.mxu0 0
      %641 = vmatpush1.bf16.msra.mxu0 0
      %642 = vmatprep.mubr.bf16.mxu0 0
      %643 = vmatmul.mubr.bf16.gmra.mrb[0].mxu0 %v605
      %v644 = vpop.f32.mrb[0].mxu0
      %v645 = vadd.f32 0.0, %v644
      %v646 = vpop.f32.mrb[0].mxu0
      %v647 = vpop.f32.mrb[0].mxu0
      %v648 = vadd.f32 0.0, %v647
      %v649 = vpop.f32.mrb[0].mxu0
      %650 = vdwg.mxu0
      %v651 = vadd.f32 %v584, %v645
      %v652 = vadd.f32 %v585, %v648
      %v653 = vld [vmem:[%s256] sm:$0x3]
      %s654 = scalar_lea.vmem %s0, 48
      %v655 = vld [vmem:[%s654] sm:$0xf]
      %v656 = vld [vmem:[%s654 + $0x4] sm:$0xf]
      %v659 = vunpack.c.l.b16 %v655
      %v660 = vunpack.c.l.b16 %v656
      %v661 = vpack.c.b16 %v660, %v659
      %v664 = vunpack.c.l.s4 1983009808
      %v665 = vunpack.c.0.s8 %v664
      %v666 = vlaneseq
      %v667 = vshrl.u32 %v666, 7
      %v668 = vsub.s32 %v665, %v667
      %v669 = vrot.slane %v653, %v668
      %670 = vrot.lane.b32.xlu0 %v669, 119
      %v671 = vpop.permute.xlu0 %670
      %v673 = vsel %vm291, %v661, 0
      %v676 = vsel %vm295, %v671, 0
      %678 = vmatprep.subr.bf16.mxu0 0
      %679 = vmatpush1.bf16.msra.mxu0 %v676
      %680 = vmatprep.subr.bf16.mxu0 0
      %681 = vmatpush1.bf16.msra.mxu0 0
      %682 = vmatprep.subr.bf16.mxu0 0
      %683 = vmatpush1.bf16.msra.mxu0 0
      %684 = vmatprep.subr.bf16.mxu0 0
      %685 = vmatpush1.bf16.msra.mxu0 0
      %686 = vmatprep.subr.bf16.mxu0 0
      %687 = vmatpush1.bf16.msra.mxu0 0
      %688 = vmatprep.subr.bf16.mxu0 0
      %689 = vmatpush1.bf16.msra.mxu0 0
      %690 = vmatprep.subr.bf16.mxu0 0
      %691 = vmatpush1.bf16.msra.mxu0 0
      %692 = vmatprep.subr.bf16.mxu0 0
      %693 = vmatpush1.bf16.msra.mxu0 0
      %694 = vmatprep.subr.bf16.mxu0 0
      %695 = vmatpush1.bf16.msra.mxu0 0
      %696 = vmatprep.subr.bf16.mxu0 0
      %697 = vmatpush1.bf16.msra.mxu0 0
      %698 = vmatprep.subr.bf16.mxu0 0
      %699 = vmatpush1.bf16.msra.mxu0 0
      %700 = vmatprep.subr.bf16.mxu0 0
      %701 = vmatpush1.bf16.msra.mxu0 0
      %702 = vmatprep.subr.bf16.mxu0 0
      %703 = vmatpush1.bf16.msra.mxu0 0
      %704 = vmatprep.subr.bf16.mxu0 0
      %705 = vmatpush1.bf16.msra.mxu0 0
      %706 = vmatprep.subr.bf16.mxu0 0
      %707 = vmatpush1.bf16.msra.mxu0 0
      %708 = vmatprep.subr.bf16.mxu0 0
      %709 = vmatpush1.bf16.msra.mxu0 0
      %710 = vmatprep.mubr.bf16.mxu0 0
      %711 = vmatmul.mubr.bf16.gmra.mrb[0].mxu0 %v673
      %v712 = vpop.f32.mrb[0].mxu0
      %v713 = vadd.f32 0.0, %v712
      %v714 = vpop.f32.mrb[0].mxu0
      %v715 = vpop.f32.mrb[0].mxu0
      %v716 = vadd.f32 0.0, %v715
      %v717 = vpop.f32.mrb[0].mxu0
      %718 = vdwg.mxu0
      %v719 = vadd.f32 %v651, %v713
      %v720 = vadd.f32 %v652, %v716
      %v721 = vld [vmem:[%s256] sm:$0x3]
      %s722 = scalar_lea.vmem %s0, 56
      %v723 = vld [vmem:[%s722] sm:$0xf]
      %v724 = vld [vmem:[%s722 + $0x4] sm:$0xf]
      %v727 = vunpack.c.l.b16 %v723
      %v728 = vunpack.c.l.b16 %v724
      %v729 = vpack.c.b16 %v728, %v727
      %v732 = vunpack.c.l.s4 1983009808
      %v733 = vunpack.c.0.s8 %v732
      %v734 = vlaneseq
      %v735 = vshrl.u32 %v734, 7
      %v736 = vsub.s32 %v733, %v735
      %v737 = vrot.slane %v721, %v736
      %738 = vrot.lane.b32.xlu0 %v737, 118
      %v739 = vpop.permute.xlu0 %738
      %v741 = vsel %vm291, %v729, 0
      %v744 = vsel %vm295, %v739, 0
      %746 = vmatprep.subr.bf16.mxu0 0
      %747 = vmatpush1.bf16.msra.mxu0 %v744
      %748 = vmatprep.subr.bf16.mxu0 0
      %749 = vmatpush1.bf16.msra.mxu0 0
      %750 = vmatprep.subr.bf16.mxu0 0
      %751 = vmatpush1.bf16.msra.mxu0 0
      %752 = vmatprep.subr.bf16.mxu0 0
      %753 = vmatpush1.bf16.msra.mxu0 0
      %754 = vmatprep.subr.bf16.mxu0 0
      %755 = vmatpush1.bf16.msra.mxu0 0
      %756 = vmatprep.subr.bf16.mxu0 0
      %757 = vmatpush1.bf16.msra.mxu0 0
      %758 = vmatprep.subr.bf16.mxu0 0
      %759 = vmatpush1.bf16.msra.mxu0 0
      %760 = vmatprep.subr.bf16.mxu0 0
      %761 = vmatpush1.bf16.msra.mxu0 0
      %762 = vmatprep.subr.bf16.mxu0 0
      %763 = vmatpush1.bf16.msra.mxu0 0
      %764 = vmatprep.subr.bf16.mxu0 0
      %765 = vmatpush1.bf16.msra.mxu0 0
      %766 = vmatprep.subr.bf16.mxu0 0
      %767 = vmatpush1.bf16.msra.mxu0 0
      %768 = vmatprep.subr.bf16.mxu0 0
      %769 = vmatpush1.bf16.msra.mxu0 0
      %770 = vmatprep.subr.bf16.mxu0 0
      %771 = vmatpush1.bf16.msra.mxu0 0
      %772 = vmatprep.subr.bf16.mxu0 0
      %773 = vmatpush1.bf16.msra.mxu0 0
      %774 = vmatprep.subr.bf16.mxu0 0
      %775 = vmatpush1.bf16.msra.mxu0 0
      %776 = vmatprep.subr.bf16.mxu0 0
      %777 = vmatpush1.bf16.msra.mxu0 0
      %778 = vmatprep.mubr.bf16.mxu0 0
      %779 = vmatmul.mubr.bf16.gmra.mrb[0].mxu0 %v741
      %v780 = vpop.f32.mrb[0].mxu0
      %v781 = vadd.f32 0.0, %v780
      %v782 = vpop.f32.mrb[0].mxu0
      %v783 = vpop.f32.mrb[0].mxu0
      %v784 = vadd.f32 0.0, %v783
      %v785 = vpop.f32.mrb[0].mxu0
      %786 = vdwg.mxu0
      %v787 = vadd.f32 %v719, %v781
      %v788 = vadd.f32 %v720, %v784
      %v789 = vld [vmem:[%s1] sm:$0xff]
      %v790 = vld [vmem:[%s1 + $0x8] sm:$0xff]
      %792 = vset.pattern.permute.xlu0 0
      %793 = vperm.xlu0 %792, %v789
      %v794 = vpop.permute.xlu0 %793
      %797 = vset.pattern.permute.xlu0 0
      %798 = vperm.xlu0 %797, %v790
      %v799 = vpop.permute.xlu0 %798
      %v801 = vadd.f32 %v787, %v794
      %v802 = vadd.f32 %v788, %v799
      %v803 = vpack.c.bf16 %v802, %v801
      %v805 = vunpack.c.l.b16 %v803
      %v806 = vunpack.c.h.b16 %v803
      %v807 = vpack.c.b16 %v805, %v805
      %v808 = vpack.c.b16 %v806, %v806
      %vm811 = vcmask 584704
      %812 = vst.msk [vmem:[%s268] sm:$0xf] %vm811, %v807
      %813 = vst.msk [vmem:[%s268 + $0x4] sm:$0xf] %vm811, %v808
      %p814 = scmp.lt.s32.totalorder %s19, 1
      %s815 = scalar_select %p814, %s19, 1
      %p816 = scmp.lt.s32.totalorder %s20, 7
      %s817 = scalar_select %p816, %s20, 7
      %s818 = smul.addr %s817, 2
      %s819 = smul.addr %s815, 16
      %s820 = sadd.s32 %s818, %s819
      %s821 = smul.addr %s820, 4
      %s822 = scalar_lea.vmem %s4, %s821
      // Predicated region
      $region37: #{a_call__.6} parent=35 // pred_check
        %p823 = pneg %p151
      $region38: #{a_call__.6} parent=35 // pred_check_branch
        %825 = sbr.rel (%p823) target = $region40
      $region39: #{a_call__.6} parent=35 // pred_region
        _
      $region40: #{a_call__.6} parent=35 // pred_fallthru
        _
    $region36: #{a_call__.6} parent=5 // pred_fallthru
      _
    %p826 = scmp.le.s32.totalorder 2, %s10
    // Predicated region
    $region41: #{a_call__.6} parent=5 // pred_check
      %p827 = pneg %p826
    $region42: #{a_call__.6} parent=5 // pred_check_branch
      %829 = sbr.rel (%p827) target = $region44
    $region43: #{a_call__.6} parent=5 // pred_region
      %s830 = ssub.s32 %s10, 2
      // Predicated region
      $region45: #{a_call__.6} parent=43 // pred_check
        %p831 = pneg %p157
      $region46: #{a_call__.6} parent=43 // pred_check_branch
        %833 = sbr.rel (%p831) target = $region48
      $region47: #{a_call__.6} parent=43 // pred_region
        %p834 = scmp.lt.s32.totalorder %s21, 1
        %s835 = scalar_select %p834, %s21, 1
        %p836 = scmp.lt.s32.totalorder %s22, 7
        %s837 = scalar_select %p836, %s22, 7
        %s838 = smul.addr %s837, 2
        %s839 = smul.addr %s835, 16
        %s840 = sadd.s32 %s838, %s839
        %s841 = smul.addr %s840, 4
        %s842 = scalar_lea.vmem %s4, %s841
      $region48: #{a_call__.6} parent=43 // pred_fallthru
        _
    $region44: #{a_call__.6} parent=5 // pred_fallthru
      _
  $region6: #{a_call__.6} parent=0 // loop_footer
    %s14 = sadd.s32 1, %s10
  $region7: #{a_call__.6} parent=0 // loop_footer_branch
    %9 = sbr.rel target = $region3
  $region8: #{a_call__.6} parent=0 // loop_exit
    _

// kernel: a_call__.7
$region0: #{a_call__.7}
  #allocation0 [shape = 'u32[]', space=smem, size = 0x4, offset = 0x4, fixed_abs, tag = 'smem constant byte address 0x4 - core index']
  #allocation1 [shape = 'u32[144,128]{1,0:T(1,128)}', space=vmem, size = 0x12000, scoped, tag = 'internal scratch']
  #allocation2 [shape = 'f32[1,1]{1,0:T(1,128)}', space=vmem, size = 0x200, scoped, tag = 'scratch operand']
  #allocation3 [shape = 'f32[1,1]{1,0:T(1,128)}', space=vmem, size = 0x200, scoped, tag = 'scratch operand']
  %s0 = inlined_call_operand.vmem [shape: bf16[2,2,16,256], index: 0, kind: input, shape index: {}]
  %s1 = inlined_call_operand.vmem [shape: f32[2,2,16,256], index: 1, kind: input, shape index: {}]
  %s2 = inlined_call_operand.vmem [shape: f32[2,16,256], index: 2, kind: input, shape index: {}]
  %s3 = inlined_call_operand.vmem [shape: f32[2,1,1], index: 3, kind: output, shape index: {0}]
  %s4 = inlined_call_operand.vmem [shape: f32[2,1,1], index: 4, kind: output, shape index: {1}]
  %5 = xla_tuple %s3, %s4
  %s6 = sld [smem:[#allocation0]]
  $region61: #{a_call__.7} parent=0
    _
  %s8 = ssub.s32 1, %s6
  %s9 = scalar_select 0, %s8, %s6
  loop: start=0, step=1, limit=4
  $region2: #{a_call__.7} parent=0 // loop_pre_header
    _
  $region3: #{a_call__.7} parent=0 // loop_header
    %s11 = sphi 0, %s15
    %p12 = scmp.ge.s32.totalorder %s11, 4
    %s18 = sphi 0, %s30
    %s19 = sphi 0, %s26
    %s20 = sphi 0, %s18
    %s21 = sphi 0, %s19
    %s22 = sphi 0, %s20
    %s23 = sphi 0, %s21
    %s35 = sphi 0, %s37
    %s38 = sphi 0, %s35
    %s39 = sphi 0, %s38
    %s55 = sphi 0, %s39
    %s63 = sphi 0, %s65
    %s66 = sphi 0, %s63
    %s67 = sphi 0, %s66
    %s83 = sphi 0, %s67
    %s91 = sphi 0, %s93
    %s94 = sphi 0, %s91
    %s95 = sphi 0, %s94
    %s111 = sphi 0, %s95
    %s117 = sphi 0, %s119
    %s120 = sphi 0, %s117
    %s121 = sphi 0, %s120
    %s137 = sphi 0, %s121
    %s143 = sphi 0, %s145
    %s146 = sphi 0, %s143
    %s147 = sphi 0, %s146
    %s163 = sphi 0, %s147
  $region4: #{a_call__.7} parent=0 // loop_header_branch
    %14 = sbr.rel (%p12) target = $region8
  $region5: #{a_call__.7} parent=0 // loop_body
    %s16 = ssub.s32 %s11, 1
    %s17 = ssub.s32 %s11, 2
    %s24 = sadd.s32 1, %s19
    %p25 = scmp.ge.s32.totalorder %s24, 1
    %s26 = scalar_select %p25, 0, %s24
    %s27 = sadd.s32 1, %s18
    %s28 = scalar_select %p25, %s27, %s18
    %p29 = scmp.ge.s32.totalorder %s28, 2
    %s30 = scalar_select %p29, 0, %s28
    %s31 = ssub.s32 %s18, %s30
    %s32 = ssub.s32 %s19, %s26
    %s33 = sor.u32 %s31, %s32
    %p34 = scmp.eq.s32.totalorder %s33, 0
    %s36 = sadd.s32 %s35, 1
    %s37 = scalar_select %p34, %s35, %s36
    %p40 = pneg %p34
    %p41 = scmp.eq.s32.totalorder %s11, 1
    %p42 = por %p40, %p41
    %p43 = scmp.ne.s32.totalorder %s35, %s38
    %p44 = scmp.eq.s32.totalorder %s11, 0
    %p45 = por %p43, %p44
    %p46 = scmp.ne.s32.totalorder %s35, %s38
    %p47 = scmp.eq.s32.totalorder %s16, 1
    %p48 = por %p46, %p47
    %p49 = scmp.ne.s32.totalorder %s38, %s39
    %p50 = scmp.eq.s32.totalorder %s16, 0
    %p51 = por %p49, %p50
    %p52 = scmp.ne.s32.totalorder %s38, %s39
    %p53 = scmp.eq.s32.totalorder %s17, 1
    %p54 = por %p52, %p53
    %p56 = scmp.ne.s32.totalorder %s39, %s55
    %p57 = scmp.eq.s32.totalorder %s17, 0
    %p58 = por %p56, %p57
    %s59 = ssub.s32 %s18, %s30
    %s60 = ssub.s32 %s19, %s26
    %s61 = sor.u32 %s59, %s60
    %p62 = scmp.eq.s32.totalorder %s61, 0
    %s64 = sadd.s32 %s63, 1
    %s65 = scalar_select %p62, %s63, %s64
    %p68 = pneg %p62
    %p69 = scmp.eq.s32.totalorder %s11, 1
    %p70 = por %p68, %p69
    %p71 = scmp.ne.s32.totalorder %s63, %s66
    %p72 = scmp.eq.s32.totalorder %s11, 0
    %p73 = por %p71, %p72
    %p74 = scmp.ne.s32.totalorder %s63, %s66
    %p75 = scmp.eq.s32.totalorder %s16, 1
    %p76 = por %p74, %p75
    %p77 = scmp.ne.s32.totalorder %s66, %s67
    %p78 = scmp.eq.s32.totalorder %s16, 0
    %p79 = por %p77, %p78
    %p80 = scmp.ne.s32.totalorder %s66, %s67
    %p81 = scmp.eq.s32.totalorder %s17, 1
    %p82 = por %p80, %p81
    %p84 = scmp.ne.s32.totalorder %s67, %s83
    %p85 = scmp.eq.s32.totalorder %s17, 0
    %p86 = por %p84, %p85
    %s87 = ssub.s32 %s18, %s30
    %s88 = ssub.s32 %s19, %s26
    %s89 = sor.u32 %s87, %s88
    %p90 = scmp.eq.s32.totalorder %s89, 0
    %s92 = sadd.s32 %s91, 1
    %s93 = scalar_select %p90, %s91, %s92
    %p96 = pneg %p90
    %p97 = scmp.eq.s32.totalorder %s11, 1
    %p98 = por %p96, %p97
    %p99 = scmp.ne.s32.totalorder %s91, %s94
    %p100 = scmp.eq.s32.totalorder %s11, 0
    %p101 = por %p99, %p100
    %p102 = scmp.ne.s32.totalorder %s91, %s94
    %p103 = scmp.eq.s32.totalorder %s16, 1
    %p104 = por %p102, %p103
    %p105 = scmp.ne.s32.totalorder %s94, %s95
    %p106 = scmp.eq.s32.totalorder %s16, 0
    %p107 = por %p105, %p106
    %p108 = scmp.ne.s32.totalorder %s94, %s95
    %p109 = scmp.eq.s32.totalorder %s17, 1
    %p110 = por %p108, %p109
    %p112 = scmp.ne.s32.totalorder %s95, %s111
    %p113 = scmp.eq.s32.totalorder %s17, 0
    %p114 = por %p112, %p113
    %s115 = ssub.s32 %s18, %s30
    %p116 = scmp.eq.s32.totalorder %s115, 0
    %s118 = sadd.s32 %s117, 1
    %s119 = scalar_select %p116, %s117, %s118
    %p122 = pneg %p116
    %p123 = scmp.eq.s32.totalorder %s11, 1
    %p124 = por %p122, %p123
    %p125 = scmp.ne.s32.totalorder %s117, %s120
    %p126 = scmp.eq.s32.totalorder %s11, 0
    %p127 = por %p125, %p126
    %p128 = scmp.ne.s32.totalorder %s117, %s120
    %p129 = scmp.eq.s32.totalorder %s16, 1
    %p130 = por %p128, %p129
    %p131 = scmp.ne.s32.totalorder %s120, %s121
    %p132 = scmp.eq.s32.totalorder %s16, 0
    %p133 = por %p131, %p132
    %p134 = scmp.ne.s32.totalorder %s120, %s121
    %p135 = scmp.eq.s32.totalorder %s17, 1
    %p136 = por %p134, %p135
    %p138 = scmp.ne.s32.totalorder %s121, %s137
    %p139 = scmp.eq.s32.totalorder %s17, 0
    %p140 = por %p138, %p139
    %s141 = ssub.s32 %s18, %s30
    %p142 = scmp.eq.s32.totalorder %s141, 0
    %s144 = sadd.s32 %s143, 1
    %s145 = scalar_select %p142, %s143, %s144
    %p148 = pneg %p142
    %p149 = scmp.eq.s32.totalorder %s11, 1
    %p150 = por %p148, %p149
    %p151 = scmp.ne.s32.totalorder %s143, %s146
    %p152 = scmp.eq.s32.totalorder %s11, 0
    %p153 = por %p151, %p152
    %p154 = scmp.ne.s32.totalorder %s143, %s146
    %p155 = scmp.eq.s32.totalorder %s16, 1
    %p156 = por %p154, %p155
    %p157 = scmp.ne.s32.totalorder %s146, %s147
    %p158 = scmp.eq.s32.totalorder %s16, 0
    %p159 = por %p157, %p158
    %p160 = scmp.ne.s32.totalorder %s146, %s147
    %p161 = scmp.eq.s32.totalorder %s17, 1
    %p162 = por %p160, %p161
    %p164 = scmp.ne.s32.totalorder %s147, %s163
    %p165 = scmp.eq.s32.totalorder %s17, 0
    %p166 = por %p164, %p165
    %p167 = scmp.le.s32.totalorder 1, %s11
    %p168 = scmp.lt.s32.totalorder %s11, 3
    %p169 = pnand %p167, %p168
    %p170 = pneg %p169
    // Predicated region
    $region9: #{a_call__.7} parent=5 // pred_check
      _
    $region10: #{a_call__.7} parent=5 // pred_check_branch
      %172 = sbr.rel (%p169) target = $region12
    $region11: #{a_call__.7} parent=5 // pred_region
      %s173 = ssub.s32 %s11, 1
    $region12: #{a_call__.7} parent=5 // pred_fallthru
      _
    %p174 = scmp.lt.s32.totalorder %s11, 2
    // Predicated region
    $region13: #{a_call__.7} parent=5 // pred_check
      %p175 = pneg %p174
    $region14: #{a_call__.7} parent=5 // pred_check_branch
      %177 = sbr.rel (%p175) target = $region16
    $region15: #{a_call__.7} parent=5 // pred_region
      // Predicated region
      $region17: #{a_call__.7} parent=15 // pred_check
        %p178 = pneg %p45
      $region18: #{a_call__.7} parent=15 // pred_check_branch
        %180 = sbr.rel (%p178) target = $region20
      $region19: #{a_call__.7} parent=15 // pred_region
        %s181 = smul.u32 2, %s19
        %p182 = scmp.lt.s32.totalorder %s18, 1
        %s183 = scalar_select %p182, %s18, 1
        %p184 = scmp.lt.s32.totalorder %s181, 1
        %s185 = scalar_select %p184, %s181, 1
        %s186 = smul.addr %s185, 2
        %s187 = smul.addr %s183, 8
        %s188 = sadd.s32 %s186, %s187
        %s189 = smul.addr %s188, 4
        %s190 = scalar_lea.vmem %s0, %s189
        %s191 = smul.u32 2, %s19
      $region20: #{a_call__.7} parent=15 // pred_fallthru
        _
      // Predicated region
      $region21: #{a_call__.7} parent=15 // pred_check
        %p192 = pneg %p73
      $region22: #{a_call__.7} parent=15 // pred_check_branch
        %194 = sbr.rel (%p192) target = $region24
      $region23: #{a_call__.7} parent=15 // pred_region
        %s195 = smul.u32 2, %s19
        %p196 = scmp.lt.s32.totalorder %s18, 1
        %s197 = scalar_select %p196, %s18, 1
        %p198 = scmp.lt.s32.totalorder %s195, 1
        %s199 = scalar_select %p198, %s195, 1
        %s200 = smul.addr %s199, 2
        %s201 = smul.addr %s197, 8
        %s202 = sadd.s32 %s200, %s201
        %s203 = smul.addr %s202, 8
        %s204 = scalar_lea.vmem %s1, %s203
        %s205 = smul.u32 2, %s19
      $region24: #{a_call__.7} parent=15 // pred_fallthru
        _
      // Predicated region
      $region25: #{a_call__.7} parent=15 // pred_check
        %p206 = pneg %p101
      $region26: #{a_call__.7} parent=15 // pred_check_branch
        %208 = sbr.rel (%p206) target = $region28
      $region27: #{a_call__.7} parent=15 // pred_region
        %s209 = smul.u32 2, %s19
        %p210 = scmp.lt.s32.totalorder %s18, 1
        %s211 = scalar_select %p210, %s18, 1
        %p212 = scmp.lt.s32.totalorder %s209, 1
        %s213 = scalar_select %p212, %s209, 1
        %s214 = smul.addr %s213, 2
        %s215 = smul.addr %s211, 4
        %s216 = sadd.s32 %s214, %s215
        %s217 = smul.addr %s216, 8
        %s218 = scalar_lea.vmem %s2, %s217
        %s219 = smul.u32 2, %s19
      $region28: #{a_call__.7} parent=15 // pred_fallthru
        _
    $region16: #{a_call__.7} parent=5 // pred_fallthru
      _
    %p220 = scmp.le.s32.totalorder 1, %s11
    %p221 = scmp.lt.s32.totalorder %s11, 3
    %p222 = pnand %p220, %p221
    %p223 = pneg %p222
    // Predicated region
    $region29: #{a_call__.7} parent=5 // pred_check
      _
    $region30: #{a_call__.7} parent=5 // pred_check_branch
      %225 = sbr.rel (%p222) target = $region32
    $region31: #{a_call__.7} parent=5 // pred_region
      %s226 = ssub.s32 %s11, 1
      %s227 = smul.u32 2, %s21
      %p228 = scmp.lt.s32.totalorder %s20, 1
      %s229 = scalar_select %p228, %s20, 1
      %p230 = scmp.lt.s32.totalorder %s227, 1
      %s231 = scalar_select %p230, %s227, 1
      %s232 = smul.addr %s231, 2
      %s233 = smul.addr %s229, 8
      %s234 = sadd.s32 %s232, %s233
      %s235 = smul.addr %s234, 4
      %s236 = scalar_lea.vmem %s0, %s235
      %p237 = pneg %p51
      %p238 = pneg %p48
      %s239 = smul.u32 2, %s21
      %p240 = scmp.lt.s32.totalorder %s20, 1
      %s241 = scalar_select %p240, %s20, 1
      %p242 = scmp.lt.s32.totalorder %s239, 1
      %s243 = scalar_select %p242, %s239, 1
      %s244 = smul.addr %s243, 2
      %s245 = smul.addr %s241, 8
      %s246 = sadd.s32 %s244, %s245
      %s247 = smul.addr %s246, 8
      %s248 = scalar_lea.vmem %s1, %s247
      %p249 = pneg %p79
      %p250 = pneg %p76
      %s251 = smul.u32 2, %s21
      %p252 = scmp.lt.s32.totalorder %s20, 1
      %s253 = scalar_select %p252, %s20, 1
      %p254 = scmp.lt.s32.totalorder %s251, 1
      %s255 = scalar_select %p254, %s251, 1
      %s256 = smul.addr %s255, 2
      %s257 = smul.addr %s253, 4
      %s258 = sadd.s32 %s256, %s257
      %s259 = smul.addr %s258, 8
      %s260 = scalar_lea.vmem %s2, %s259
      %p261 = pneg %p107
      %p262 = pneg %p104
      %p263 = pneg %p133
      %p264 = pneg %p130
      %p265 = scmp.lt.s32.totalorder %s20, 1
      %s266 = scalar_select %p265, %s20, 1
      %s267 = scalar_lea.vmem %s3, %s266
      %p268 = pneg %p159
      %p269 = pneg %p156
      %p270 = scmp.lt.s32.totalorder %s20, 1
      %s271 = scalar_select %p270, %s20, 1
      %s272 = scalar_lea.vmem %s4, %s271
      %s273 = smul.u32 2, %s21
      %p274 = scmp.lt.s32.totalorder %s20, 1
      %s275 = scalar_select %p274, %s20, 1
      %p276 = scmp.lt.s32.totalorder %s273, 1
      %s277 = scalar_select %p276, %s273, 1
      %s278 = smul.addr %s277, 2
      %s279 = smul.addr %s275, 8
      %s280 = sadd.s32 %s278, %s279
      %s281 = smul.addr %s280, 4
      %s282 = scalar_lea.vmem %s0, %s281
      %s283 = smul.u32 2, %s21
      %s284 = smul.u32 2, %s21
      %p285 = scmp.lt.s32.totalorder %s20, 1
      %s286 = scalar_select %p285, %s20, 1
      %p287 = scmp.lt.s32.totalorder %s284, 1
      %s288 = scalar_select %p287, %s284, 1
      %s289 = smul.addr %s288, 2
      %s290 = smul.addr %s286, 8
      %s291 = sadd.s32 %s289, %s290
      %s292 = smul.addr %s291, 8
      %s293 = scalar_lea.vmem %s1, %s292
      %s294 = smul.u32 2, %s21
      %s295 = smul.u32 2, %s21
      %p296 = scmp.lt.s32.totalorder %s20, 1
      %s297 = scalar_select %p296, %s20, 1
      %p298 = scmp.lt.s32.totalorder %s295, 1
      %s299 = scalar_select %p298, %s295, 1
      %s300 = smul.addr %s299, 2
      %s301 = smul.addr %s297, 4
      %s302 = sadd.s32 %s300, %s301
      %s303 = smul.addr %s302, 8
      %s304 = scalar_lea.vmem %s2, %s303
      %s305 = smul.u32 2, %s21
      %p306 = scmp.lt.s32.totalorder %s20, 1
      %s307 = scalar_select %p306, %s20, 1
      %s308 = scalar_lea.vmem %s3, %s307
      %p309 = scmp.lt.s32.totalorder %s20, 1
      %s310 = scalar_select %p309, %s20, 1
      %s311 = scalar_lea.vmem %s4, %s310
      %p312 = scmp.eq.s32.totalorder %s21, 0
      // Predicated region
      $region33: #{a_call__.7} parent=31 // pred_check
        %p313 = pneg %p312
      $region34: #{a_call__.7} parent=31 // pred_check_branch
        %315 = sbr.rel (%p313) target = $region36
      $region35: #{a_call__.7} parent=31 // pred_region
        %vm316 = vcmask 0
        %317 = vst.msk [vmem:[#allocation2] sm:$0x1] %vm316, 0.0
        %318 = vst.msk [vmem:[#allocation3] sm:$0x1] %vm316, 0.0
      $region36: #{a_call__.7} parent=31 // pred_fallthru
        _
      %v319 = vld [vmem:[%s282] sm:$0xff]
      %v320 = vld [vmem:[%s282 + $0x8] sm:$0xff]
      %v321 = vld [vmem:[%s282 + $0x10] sm:$0xff]
      %v322 = vld [vmem:[%s282 + $0x18] sm:$0xff]
      %v323 = vunpack.c.l.bf16 %v319
      %v324 = vunpack.c.h.bf16 %v319
      %v325 = vunpack.c.l.bf16 %v320
      %v326 = vunpack.c.h.bf16 %v320
      %v327 = vunpack.c.l.bf16 %v321
      %v328 = vunpack.c.h.bf16 %v321
      %v329 = vunpack.c.l.bf16 %v322
      %v330 = vunpack.c.h.bf16 %v322
      %v331 = vld [vmem:[%s293] sm:$0xff]
      %v332 = vld [vmem:[%s293 + $0x8] sm:$0xff]
      %v333 = vld [vmem:[%s293 + $0x10] sm:$0xff]
      %v334 = vld [vmem:[%s293 + $0x18] sm:$0xff]
      %v335 = vld [vmem:[%s293 + $0x20] sm:$0xff]
      %v336 = vld [vmem:[%s293 + $0x28] sm:$0xff]
      %v337 = vld [vmem:[%s293 + $0x30] sm:$0xff]
      %v338 = vld [vmem:[%s293 + $0x38] sm:$0xff]
      %v339 = vld [vmem:[%s304] sm:$0xff]
      %v340 = vld [vmem:[%s304 + $0x8] sm:$0xff]
      %v341 = vld [vmem:[%s304 + $0x10] sm:$0xff]
      %v342 = vld [vmem:[%s304 + $0x18] sm:$0xff]
      %v343 = vmax.f32 %v323, %v327
      %v344 = vmax.f32 %v324, %v328
      %v345 = vmax.f32 %v325, %v329
      %v346 = vmax.f32 %v326, %v330
      %v347 = vsub.f32 %v323, %v343
      %v348 = vsub.f32 %v324, %v344
      %v349 = vsub.f32 %v325, %v345
      %v350 = vsub.f32 %v326, %v346
      %v351 = vsub.f32 %v327, %v343
      %v352 = vsub.f32 %v328, %v344
      %v353 = vsub.f32 %v329, %v345
      %v354 = vsub.f32 %v330, %v346
      %v355 = vmul.f32 %v347, 1.442695
      %v356 = vpow.pop %v355
      %v357 = vmul.f32 %v348, 1.442695
      %v358 = vpow.pop %v357
      %v359 = vmul.f32 %v349, 1.442695
      %v360 = vpow.pop %v359
      %v361 = vmul.f32 %v350, 1.442695
      %v362 = vpow.pop %v361
      %v363 = vmul.f32 %v351, 1.442695
      %v364 = vpow.pop %v363
      %v365 = vmul.f32 %v352, 1.442695
      %v366 = vpow.pop %v365
      %v367 = vmul.f32 %v353, 1.442695
      %v368 = vpow.pop %v367
      %v369 = vmul.f32 %v354, 1.442695
      %v370 = vpow.pop %v369
      %v371 = vadd.f32 %v356, %v364
      %v372 = vadd.f32 %v358, %v366
      %v373 = vadd.f32 %v360, %v368
      %v374 = vadd.f32 %v362, %v370
      %v375 = vlog2.pop %v371
      %v376 = vmul.f32 %v375, 0.6931472
      %v377 = vlog2.pop %v372
      %v378 = vmul.f32 %v377, 0.6931472
      %v379 = vlog2.pop %v373
      %v380 = vmul.f32 %v379, 0.6931472
      %v381 = vlog2.pop %v374
      %v382 = vmul.f32 %v381, 0.6931472
      %v383 = vsub.f32 %v347, %v376
      %v384 = vsub.f32 %v348, %v378
      %v385 = vsub.f32 %v349, %v380
      %v386 = vsub.f32 %v350, %v382
      %v387 = vsub.f32 %v351, %v376
      %v388 = vsub.f32 %v352, %v378
      %v389 = vsub.f32 %v353, %v380
      %v390 = vsub.f32 %v354, %v382
      %v391 = vmax.f32 %v331, %v335
      %v392 = vmax.f32 %v332, %v336
      %v393 = vmax.f32 %v333, %v337
      %v394 = vmax.f32 %v334, %v338
      %v395 = vsub.f32 %v331, %v391
      %v396 = vsub.f32 %v332, %v392
      %v397 = vsub.f32 %v333, %v393
      %v398 = vsub.f32 %v334, %v394
      %v399 = vsub.f32 %v335, %v391
      %v400 = vsub.f32 %v336, %v392
      %v401 = vsub.f32 %v337, %v393
      %v402 = vsub.f32 %v338, %v394
      %v403 = vmul.f32 %v395, 1.442695
      %v404 = vpow.pop %v403
      %v405 = vmul.f32 %v396, 1.442695
      %v406 = vpow.pop %v405
      %v407 = vmul.f32 %v397, 1.442695
      %v408 = vpow.pop %v407
      %v409 = vmul.f32 %v398, 1.442695
      %v410 = vpow.pop %v409
      %v411 = vmul.f32 %v399, 1.442695
      %v412 = vpow.pop %v411
      %v413 = vmul.f32 %v400, 1.442695
      %v414 = vpow.pop %v413
      %v415 = vmul.f32 %v401, 1.442695
      %v416 = vpow.pop %v415
      %v417 = vmul.f32 %v402, 1.442695
      %v418 = vpow.pop %v417
      %v419 = vadd.f32 %v404, %v412
      %v420 = vadd.f32 %v406, %v414
      %v421 = vadd.f32 %v408, %v416
      %v422 = vadd.f32 %v410, %v418
      %v423 = vlog2.pop %v419
      %v424 = vmul.f32 %v423, 0.6931472
      %v425 = vlog2.pop %v420
      %v426 = vmul.f32 %v425, 0.6931472
      %v427 = vlog2.pop %v421
      %v428 = vmul.f32 %v427, 0.6931472
      %v429 = vlog2.pop %v422
      %v430 = vmul.f32 %v429, 0.6931472
      %v431 = vsub.f32 %v395, %v424
      %v432 = vsub.f32 %v396, %v426
      %v433 = vsub.f32 %v397, %v428
      %v434 = vsub.f32 %v398, %v430
      %v435 = vsub.f32 %v399, %v424
      %v436 = vsub.f32 %v400, %v426
      %v437 = vsub.f32 %v401, %v428
      %v438 = vsub.f32 %v402, %v430
      %v439 = vrcp.pop %v419
      %v440 = vrcp.pop %v420
      %v441 = vrcp.pop %v421
      %v442 = vrcp.pop %v422
      %v443 = vmul.f32 %v404, %v439
      %v444 = vmul.f32 %v406, %v440
      %v445 = vmul.f32 %v408, %v441
      %v446 = vmul.f32 %v410, %v442
      %v447 = vmul.f32 %v412, %v439
      %v448 = vmul.f32 %v414, %v440
      %v449 = vmul.f32 %v416, %v441
      %v450 = vmul.f32 %v418, %v442
      %v451 = vsub.f32 %v431, %v383
      %v452 = vsub.f32 %v432, %v384
      %v453 = vsub.f32 %v433, %v385
      %v454 = vsub.f32 %v434, %v386
      %v455 = vsub.f32 %v435, %v387
      %v456 = vsub.f32 %v436, %v388
      %v457 = vsub.f32 %v437, %v389
      %v458 = vsub.f32 %v438, %v390
      %v459 = vmul.f32 %v443, %v451
      %v460 = vmul.f32 %v444, %v452
      %v461 = vmul.f32 %v445, %v453
      %v462 = vmul.f32 %v446, %v454
      %v463 = vmul.f32 %v447, %v455
      %v464 = vmul.f32 %v448, %v456
      %v465 = vmul.f32 %v449, %v457
      %v466 = vmul.f32 %v450, %v458
      %v467 = vadd.f32 %v459, %v463
      %v468 = vadd.f32 %v460, %v464
      %v469 = vadd.f32 %v461, %v465
      %v470 = vadd.f32 %v462, %v466
      %v471 = vld [vmem:[#allocation2] sm:$0x1]
      %v472 = vmul.f32 %v467, %v339
      %v473 = vmul.f32 %v468, %v340
      %v474 = vmul.f32 %v469, %v341
      %v475 = vmul.f32 %v470, %v342
      %v476 = vadd.f32 %v472, %v473
      %v477 = vadd.f32 %v476, %v474
      %v478 = vadd.f32 %v477, %v475
      %479 = vadd.xlane.f32.xlu0 %v478
      %v480 = vpop.xlane.xlu0 %479
      %v481 = vrot.slane %v480, 4
      %v482 = vadd.f32 %v480, %v481
      %v483 = vrot.slane %v482, 2
      %v484 = vadd.f32 %v482, %v483
      %v485 = vrot.slane %v484, 1
      %v486 = vadd.f32 %v484, %v485
      %s487 = vtos %v486
      %v488 = vstv %s487
      %v489 = vadd.f32 %v471, %v488
      %vm490 = vcmask 0
      %491 = vst.msk [vmem:[#allocation2] sm:$0x1] %vm490, %v489
      %v492 = vld [vmem:[#allocation3] sm:$0x1]
      %v493 = vadd.f32 %v339, %v340
      %v494 = vadd.f32 %v493, %v341
      %v495 = vadd.f32 %v494, %v342
      %496 = vadd.xlane.f32.xlu0 %v495
      %v497 = vpop.xlane.xlu0 %496
      %v498 = vrot.slane %v497, 4
      %v499 = vadd.f32 %v497, %v498
      %v500 = vrot.slane %v499, 2
      %v501 = vadd.f32 %v499, %v500
      %v502 = vrot.slane %v501, 1
      %v503 = vadd.f32 %v501, %v502
      %s504 = vtos %v503
      %v505 = vstv %s504
      %v506 = vadd.f32 %v492, %v505
      %507 = vst.msk [vmem:[#allocation3] sm:$0x1] %vm490, %v506
      // Predicated region
      $region37: #{a_call__.7} parent=31 // pred_check
        %p508 = pneg %p312
      $region38: #{a_call__.7} parent=31 // pred_check_branch
        %510 = sbr.rel (%p508) target = $region40
      $region39: #{a_call__.7} parent=31 // pred_region
        %v511 = vld [vmem:[#allocation2] sm:$0x1]
        %512 = vst.msk [vmem:[%s308] sm:$0x1] %vm490, %v511
        %v513 = vld [vmem:[#allocation3] sm:$0x1]
        %514 = vst.msk [vmem:[%s311] sm:$0x1] %vm490, %v513
      $region40: #{a_call__.7} parent=31 // pred_fallthru
        _
      %p515 = scmp.lt.s32.totalorder %s20, 1
      %s516 = scalar_select %p515, %s20, 1
      %s517 = scalar_lea.vmem %s3, %s516
      %p518 = scmp.lt.s32.totalorder %s20, 1
      %s519 = scalar_select %p518, %s20, 1
      %s520 = scalar_lea.vmem %s4, %s519
      // Predicated region
      $region41: #{a_call__.7} parent=31 // pred_check
        %p521 = pneg %p130
      $region42: #{a_call__.7} parent=31 // pred_check_branch
        %523 = sbr.rel (%p521) target = $region44
      $region43: #{a_call__.7} parent=31 // pred_region
        _
      $region44: #{a_call__.7} parent=31 // pred_fallthru
        _
      // Predicated region
      $region45: #{a_call__.7} parent=31 // pred_check
        %p524 = pneg %p156
      $region46: #{a_call__.7} parent=31 // pred_check_branch
        %526 = sbr.rel (%p524) target = $region48
      $region47: #{a_call__.7} parent=31 // pred_region
        _
      $region48: #{a_call__.7} parent=31 // pred_fallthru
        _
    $region32: #{a_call__.7} parent=5 // pred_fallthru
      _
    %p527 = scmp.le.s32.totalorder 2, %s11
    // Predicated region
    $region49: #{a_call__.7} parent=5 // pred_check
      %p528 = pneg %p527
    $region50: #{a_call__.7} parent=5 // pred_check_branch
      %530 = sbr.rel (%p528) target = $region52
    $region51: #{a_call__.7} parent=5 // pred_region
      %s531 = ssub.s32 %s11, 2
      // Predicated region
      $region53: #{a_call__.7} parent=51 // pred_check
        %p532 = pneg %p136
      $region54: #{a_call__.7} parent=51 // pred_check_branch
        %534 = sbr.rel (%p532) target = $region56
      $region55: #{a_call__.7} parent=51 // pred_region
        %p535 = scmp.lt.s32.totalorder %s22, 1
        %s536 = scalar_select %p535, %s22, 1
        %s537 = scalar_lea.vmem %s3, %s536
      $region56: #{a_call__.7} parent=51 // pred_fallthru
        _
      // Predicated region
      $region57: #{a_call__.7} parent=51 // pred_check
        %p538 = pneg %p162
      $region58: #{a_call__.7} parent=51 // pred_check_branch
        %540 = sbr.rel (%p538) target = $region60
      $region59: #{a_call__.7} parent=51 // pred_region
        %p541 = scmp.lt.s32.totalorder %s22, 1
        %s542 = scalar_select %p541, %s22, 1
        %s543 = scalar_lea.vmem %s4, %s542
      $region60: #{a_call__.7} parent=51 // pred_fallthru
        _
    $region52: #{a_call__.7} parent=5 // pred_fallthru
      _
  $region6: #{a_call__.7} parent=0 // loop_footer
    %s15 = sadd.s32 1, %s11
  $region7: #{a_call__.7} parent=0 // loop_footer_branch
    %10 = sbr.rel target = $region3
  $region8: #{a_call__.7} parent=0 // loop_exit
    _

</llo_original>
